<compile_context>
chip_gen: v7x
topology: tpu7x:2x2x1
jax: 0.10.0
libtpu: 0.0.40
codegen_flags: <defaults>
</compile_context>

<pallas_src>
import functools
import math

import numpy as np
import jax
import jax.numpy as jnp
from jax import lax
from jax.experimental import pallas as pl
from jax.experimental.pallas import tpu as pltpu


BIN_SIZES = (1, 2, 3, 6)
BN_EPS = 1e-5

_VMEM = pl.BlockSpec(memory_space=pltpu.MemorySpace.VMEM)


# ----------------------------------------------------------------------------
# Host-side constant builders (numpy, trace-time only)
# ----------------------------------------------------------------------------
def _bilinear_matrix_np(in_size, out_size, align_corners):
    """(out_size, in_size) weights matching F.interpolate(mode='bilinear')."""
    W = np.zeros((out_size, in_size), np.float32)
    for d in range(out_size):
        if align_corners:
            src = 0.0 if out_size == 1 else d * (in_size - 1) / (out_size - 1)
        else:
            src = (d + 0.5) * in_size / out_size - 0.5
            src = max(src, 0.0)
        x0 = min(int(np.floor(src)), in_size - 1)
        x1 = min(x0 + 1, in_size - 1)
        l1 = src - x0
        W[d, x0] += 1.0 - l1
        W[d, x1] += l1
    return W


def _pool_and_upsample_mats(n, fh, fw, bins):
    """Per-stage row-space operators, padded to M = n*fh*fw rows/cols.
       P[i]: adaptive avg-pool (valid output rows 0..n*b*b, rest all-zero)
       U[i]: bilinear upsample (zero cols past n*b*b)
    """
    M = n * fh * fw
    Ps, Us = [], []
    for b in bins:
        sh, sw = fh // b, fw // b
        P = np.zeros((M, M), np.float32)
        for ni in range(n):
            for by in range(b):
                for bx in range(b):
                    r = ni * b * b + by * b + bx
                    for dy in range(sh):
                        for dx in range(sw):
                            c = ni * fh * fw + (by * sh + dy) * fw + (bx * sw + dx)
                            P[r, c] = 1.0 / (sh * sw)
        Wy = _bilinear_matrix_np(b, fh, align_corners=False)
        Wx = _bilinear_matrix_np(b, fw, align_corners=False)
        U = np.zeros((M, M), np.float32)
        for ni in range(n):
            for y in range(fh):
                for x in range(fw):
                    r = ni * fh * fw + y * fw + x
                    for by in range(b):
                        for bx in range(b):
                            U[r, ni * b * b + by * b + bx] = Wy[y, by] * Wx[x, bx]
        Ps.append(P)
        Us.append(U)
    return np.stack(Ps), np.stack(Us)


def _shift_matrices_np(n, fh, fw):
    """(9, M, M) boundary-zeroing row-shift operators for a 3x3 conv (pad=1).
       Tap t = ky*3 + kx corresponds to offset (dy, dx) = (ky-1, kx-1):
       (S_t @ x)[row(n,y,x)] = x[row(n, y+dy, x+dx)] if in-bounds else 0.
    """
    M = n * fh * fw
    mats = []
    for dy in (-1, 0, 1):
        for dx in (-1, 0, 1):
            S = np.zeros((M, M), np.float32)
            for ni in range(n):
                for y in range(fh):
                    for x in range(fw):
                        yy, xx = y + dy, x + dx
                        if 0 <= yy < fh and 0 <= xx < fw:
                            S[ni * fh * fw + y * fw + x,
                              ni * fh * fw + yy * fw + xx] = 1.0
            mats.append(S)
    return np.stack(mats)


def _ps_output_permutation_np(nc):
    """Column permutation so the final decoder lanes are ordered
       lane = (dy*8 + dx)*nc + class  with dy = 4*i0+2*i1+i2, dx = 4*j0+2*j1+j2,
       i.e. already in depth-to-space order."""
    perm = np.zeros(64 * nc, np.int32)
    for i0 in range(2):
        for j0 in range(2):
            for i1 in range(2):
                for j1 in range(2):
                    for i2 in range(2):
                        for j2 in range(2):
                            for c in range(nc):
                                s0 = i0 * 2 + j0
                                s1 = i1 * 2 + j1
                                s2 = i2 * 2 + j2
                                old = s0 * 16 * nc + s1 * 4 * nc + c * 4 + s2
                                dy = i0 * 4 + i1 * 2 + i2
                                dx = j0 * 4 + j1 * 2 + j2
                                perm[(dy * 8 + dx) * nc + c] = old
    return perm


def _bilinear_resize(x_nhwc, out_h, out_w, align_corners):
    n, h, w, c = x_nhwc.shape
    Wy = jnp.asarray(_bilinear_matrix_np(h, out_h, align_corners))
    Wx = jnp.asarray(_bilinear_matrix_np(w, out_w, align_corners))
    return jnp.einsum('hk,nklc,wl->nhwc', Wy, x_nhwc, Wx)


# ----------------------------------------------------------------------------
# The single fused kernel: backbone 1x1 conv -> PSP module -> decoder
# ----------------------------------------------------------------------------
def _pspnet_fused_kernel(xs_ref, wbb_ref, wstg_ref, p_ref, u_ref, s_ref,
                         wtap_ref, wd0_ref, bd0_ref, wd1_ref, bd1_ref,
                         wd2_ref, bd2_ref, dec_ref, px_ref,
                         *, n_img, bins, eps):
    M = xs_ref.shape[0]

    # ---- backbone stub: 1x1 conv + ReLU (bf16 operands, f32 accumulate) ----
    feat = jnp.maximum(
        jnp.dot(xs_ref[...], wbb_ref[...], preferred_element_type=jnp.float32),
        0.0)                                                     # (M, Cf) f32
    feat16 = feat.astype(jnp.bfloat16)

    # ---- PSP stages --------------------------------------------------------
    # All four 1x1 stage convs batched into a single matmul; lanes = (stage, oc).
    # (conv commutes with average pooling, so the conv runs before the pool.)
    spre = jnp.dot(feat16, wstg_ref[...], preferred_element_type=jnp.float32)
    spre16 = spre.astype(jnp.bfloat16)
    st_w = spre.shape[1] // len(bins)
    lane = lax.broadcasted_iota(jnp.int32, spre.shape, 1)

    psp = jnp.zeros_like(spre)
    for i, b in enumerate(bins):
        cnt = float(n_img * b * b)
        # adaptive avg-pool as a row-space matmul; rows >= cnt are exactly zero
        pooled = jnp.dot(p_ref[i], spre16, preferred_element_type=jnp.float32)
        # train-mode BatchNorm on the pooled values (gamma=1, beta=0); the
        # all-zero padding rows do not perturb the sums, so no mask is needed.
        mean = jnp.sum(pooled, axis=0, keepdims=True) / cnt
        var = jnp.sum(pooled * pooled, axis=0, keepdims=True) / cnt - mean * mean
        y = jnp.maximum(
            (pooled - mean) * lax.rsqrt(jnp.maximum(var, 0.0) + eps), 0.0)
        # bilinear upsample back to (fh, fw) as a row-space matmul; U's columns
        # past cnt are zero, so garbage rows of y never contribute.
        up = jnp.dot(u_ref[i], y.astype(jnp.bfloat16),
                     preferred_element_type=jnp.float32)
        sel = (lane >= i * st_w) & (lane < (i + 1) * st_w)
        psp = psp + jnp.where(sel, up, 0.0)

    cat16 = jnp.concatenate([feat16, psp.astype(jnp.bfloat16)], axis=-1)  # (M, cc)

    # ---- bottleneck 3x3 conv (pad=1, no bias) + BN + ReLU ------------------
    # Each tap: channel-mixing matmul then a boundary-zeroing row-shift matmul.
    out_c = wtap_ref.shape[2]
    acc = jnp.zeros((M, out_c), jnp.float32)
    for t in range(wtap_ref.shape[0]):
        tap = jnp.dot(cat16, wtap_ref[t], preferred_element_type=jnp.float32)
        acc = acc + jnp.dot(s_ref[t], tap.astype(jnp.bfloat16),
                            preferred_element_type=jnp.float32)
    # Every row is a valid output pixel (padding handled by the shift
    # matrices), so train-mode BN runs over all M rows with no mask.
    mean = jnp.sum(acc, axis=0, keepdims=True) / float(M)
    var = jnp.sum(acc * acc, axis=0, keepdims=True) / float(M) - mean * mean
    px = jnp.maximum((acc - mean) * lax.rsqrt(jnp.maximum(var, 0.0) + eps), 0.0)
    px_ref[...] = px.astype(px_ref.dtype)

    # ---- decoder: dec 1x1 conv folded into PixelShuffle-0 conv (no
    # nonlinearity between them in the module); shuffle stages lane-expanded;
    # final weight columns pre-permuted into (dy, dx, class) order so the
    # 64*nc output is lane-dense and already depth-to-space ordered.
    a = jnp.dot(px.astype(jnp.bfloat16), wd0_ref[...],
                preferred_element_type=jnp.float32) + bd0_ref[...]
    a = jnp.maximum(a, 0.0)
    a = jnp.dot(a.astype(jnp.bfloat16), wd1_ref[...],
                preferred_element_type=jnp.float32) + bd1_ref[...]
    a = jnp.maximum(a, 0.0)
    a = jnp.dot(a.astype(jnp.bfloat16), wd2_ref[...],
                preferred_element_type=jnp.float32) + bd2_ref[...]
    a = jnp.maximum(a, 0.0)
    dec_ref[...] = a.astype(dec_ref.dtype)


# ----------------------------------------------------------------------------
# Deterministic parameter init (synthetic; matches module shapes / init rules)
# ----------------------------------------------------------------------------
def _kaiming_uniform(key, shape, fan_in):
    bound = math.sqrt(6.0 / fan_in)
    return jax.random.uniform(key, shape, jnp.float32, -bound, bound)


def _kaiming_normal(key, shape, fan_in):
    std = math.sqrt(2.0 / fan_in)
    return jax.random.normal(key, shape, jnp.float32) * std


def init_params(key, c_in=3, c_feat=32, bin_sizes=BIN_SIZES, num_classes=4):
    keys = jax.random.split(key, 16)
    out_c = c_feat // len(bin_sizes)
    p = {}
    # backbone stub (TODO(synk): real resnet50 backbone not available)
    p['backbone_w'] = _kaiming_normal(keys[0], (c_in, c_feat), c_in)
    # PSP stage 1x1 convs (kaiming_uniform, fan_in, no bias)
    for i, b in enumerate(bin_sizes):
        p[f'stage{b}_w'] = _kaiming_uniform(keys[1 + i], (c_feat, out_c), c_feat)
    # bottleneck 3x3 conv (kaiming_uniform, fan_in = Cin*3*3, no bias)
    cc = c_feat + out_c * len(bin_sizes)
    p['bottleneck_w'] = _kaiming_uniform(keys[5], (3, 3, cc, out_c), cc * 9)
    # decoder: 1x1 conv out_c -> num_classes (kaiming_normal, no bias)
    p['dec_conv_w'] = _kaiming_normal(keys[6], (out_c, num_classes), out_c)
    # 3 PixelShuffle stages: conv num_classes -> num_classes*4 (ICNR) + bias
    for i in range(3):
        kb = _kaiming_normal(keys[7 + 2 * i], (num_classes, num_classes),
                             num_classes)
        # ICNR: out channel o = c*4 + s reuses base row c  -> W[a, o] = kb[o//4, a]
        p[f'ps{i}_w'] = jnp.repeat(kb, 4, axis=0).T        # (C_in, C_in*4)
        bound = 1.0 / math.sqrt(num_classes)
        p[f'ps{i}_b'] = jax.random.uniform(
            keys[8 + 2 * i], (1, num_classes * 4), jnp.float32, -bound, bound)
    return p


def prepare_params(params, bin_sizes=BIN_SIZES):
    """Pack / fuse / pre-expand / pre-permute weights once (outside the forward)."""
    nc = params['dec_conv_w'].shape[1]                     # num_classes
    w33 = params['bottleneck_w']                           # (3, 3, cc, out_c)
    _, _, cc, out_c = w33.shape
    eye4 = jnp.eye(4, dtype=jnp.float32)
    # lane-expanded PixelShuffle-1 weight: rows (c, s0), cols (s0, m1)
    w1e = jnp.einsum('cm,st->cstm', params['ps1_w'], eye4).reshape(4 * nc, 16 * nc)
    # lane-expanded PixelShuffle-2 weight: rows (s0, c, s1), cols (s0, s1, m2)
    w2e = jnp.einsum('cm,gh,st->gcshtm', params['ps2_w'], eye4, eye4
                     ).reshape(16 * nc, 64 * nc)
    b1e = jnp.tile(params['ps1_b'], (1, 4))
    b2e = jnp.tile(params['ps2_b'], (1, 16))
    # permute the final stage's columns into (dy, dx, class) depth-to-space order
    perm = _ps_output_permutation_np(nc)
    w2e = w2e[:, perm]
    b2e = b2e[:, perm]
    return {
        'w_bb': params['backbone_w'].astype(jnp.bfloat16),
        # four stage 1x1 convs packed into one (Cf, 4*out_c) weight
        'w_stg': jnp.concatenate([params[f'stage{b}_w'] for b in bin_sizes],
                                 axis=1).astype(jnp.bfloat16),
        # bottleneck taps ordered (ky, kx) row-major to match the shift matrices
        'w_bneck_taps': w33.reshape(9, cc, out_c).astype(jnp.bfloat16),
        # decoder 1x1 conv folded into PixelShuffle-0 conv (no nonlinearity in
        # between); ps0 bias stays applied after the fused matmul.
        'w_dec0': (params['dec_conv_w'] @ params['ps0_w']).astype(jnp.bfloat16),
        'b_dec0': params['ps0_b'],
        'w_dec1': w1e.astype(jnp.bfloat16),
        'b_dec1': b1e,
        'w_dec2': w2e.astype(jnp.bfloat16),
        'b_dec2': b2e,
    }


# ----------------------------------------------------------------------------
# Forward pass (mirrors _PSPNet.forward -> (x, px))
# ----------------------------------------------------------------------------
def pspnet_forward(x_nchw, packed, bin_sizes=BIN_SIZES):
    x = jnp.transpose(x_nchw, (0, 2, 3, 1)).astype(jnp.float32)   # -> NHWC
    n, H, W, c_in = x.shape

    # backbone stub: stride-8 subsample; its 1x1 conv + ReLU runs in the kernel
    xs = x[:, ::8, ::8, :]
    fh, fw = xs.shape[1], xs.shape[2]
    M = n * fh * fw
    bneck_oc = packed['w_bneck_taps'].shape[2]
    nc = packed['b_dec0'].shape[1] // 4

    # trace-time row-space constants (pool / upsample / conv-tap shifts)
    P_np, U_np = _pool_and_upsample_mats(n, fh, fw, bin_sizes)
    S_np = _shift_matrices_np(n, fh, fw)

    kern = functools.partial(_pspnet_fused_kernel, n_img=n,
                             bins=tuple(bin_sizes), eps=BN_EPS)
    dec, px2d = pl.pallas_call(
        kern,
        out_shape=(jax.ShapeDtypeStruct((M, nc * 64), jnp.float32),
                   jax.ShapeDtypeStruct((M, bneck_oc), jnp.float32)),
        in_specs=[_VMEM] * 13,
        out_specs=(_VMEM, _VMEM),
    )(xs.reshape(M, c_in).astype(jnp.bfloat16),
      packed['w_bb'], packed['w_stg'],
      jnp.asarray(P_np, dtype=jnp.bfloat16),
      jnp.asarray(U_np, dtype=jnp.bfloat16),
      jnp.asarray(S_np, dtype=jnp.bfloat16),
      packed['w_bneck_taps'],
      packed['w_dec0'], packed['b_dec0'],
      packed['w_dec1'], packed['b_dec1'],
      packed['w_dec2'], packed['b_dec2'])

    px = px2d.reshape(n, fh, fw, bneck_oc)

    # depth-to-space: lanes are already (dy, dx, class), so a single reshape +
    # one small transpose (no 10-D permutation) produces the full-res map.
    d = dec.reshape(n, fh, fw, 8, 8, nc)
    d = jnp.transpose(d, (0, 1, 3, 2, 4, 5)).reshape(n, fh * 8, fw * 8, nc)

    # final bilinear resize to the input resolution (align_corners=True);
    # identity when the decoder already lands on (H, W), which it does here.
    if (fh * 8, fw * 8) != (H, W):
        d = _bilinear_resize(d, H, W, align_corners=True)

    # back to NCHW to match the PyTorch return convention
    return (jnp.transpose(d, (0, 3, 1, 2)), jnp.transpose(px, (0, 3, 1, 2)))


if __name__ == "__main__":
    key = jax.random.PRNGKey(0)
    kx, kp = jax.random.split(key)
    x = jax.random.normal(kx, (2, 3, 48, 48), jnp.float32)        # NCHW input
    params = init_params(kp, c_in=3, c_feat=32, num_classes=4)
    packed = prepare_params(params)

    fwd = jax.jit(pspnet_forward)
    out, px = fwd(x, packed)
    out, px = jax.block_until_ready((out, px))

    assert out.shape == (2, 4, 48, 48), out.shape
    assert px.shape == (2, 8, 6, 6), px.shape
    assert jnp.all(jnp.isfinite(out)) and jnp.all(jnp.isfinite(px))
    print("KERNEL_OK")
</pallas_src>

<mosaic_0001>
module attributes {stable_mosaic.version = 11 : i64} {
  func.func @_pspnet_fused_kernel(%arg0: memref<72x3xbf16, #tpu.memory_space<vmem>>, %arg1: memref<3x32xbf16, #tpu.memory_space<vmem>>, %arg2: memref<32x32xbf16, #tpu.memory_space<vmem>>, %arg3: memref<4x72x72xbf16, #tpu.memory_space<vmem>>, %arg4: memref<4x72x72xbf16, #tpu.memory_space<vmem>>, %arg5: memref<9x72x72xbf16, #tpu.memory_space<vmem>>, %arg6: memref<9x64x8xbf16, #tpu.memory_space<vmem>>, %arg7: memref<8x16xbf16, #tpu.memory_space<vmem>>, %arg8: memref<1x16xf32, #tpu.memory_space<vmem>>, %arg9: memref<16x64xbf16, #tpu.memory_space<vmem>>, %arg10: memref<1x64xf32, #tpu.memory_space<vmem>>, %arg11: memref<64x256xbf16, #tpu.memory_space<vmem>>, %arg12: memref<1x256xf32, #tpu.memory_space<vmem>>, %arg13: memref<72x256xf32, #tpu.memory_space<vmem>>, %arg14: memref<72x8xf32, #tpu.memory_space<vmem>>) attributes {dimension_semantics = [], scalar_prefetch = 0 : i64, scratch_operands = 0 : i64, tpu.core_type = #tpu.core_type<tc>} {
    %c0 = arith.constant 0 : index
    %c0_0 = arith.constant 0 : index
    %0 = vector.load %arg0[%c0, %c0_0] : memref<72x3xbf16, #tpu.memory_space<vmem>>, vector<72x3xbf16>
    %c0_1 = arith.constant 0 : index
    %c0_2 = arith.constant 0 : index
    %1 = vector.load %arg1[%c0_1, %c0_2] : memref<3x32xbf16, #tpu.memory_space<vmem>>, vector<3x32xbf16>
    %cst = arith.constant dense<0.000000e+00> : vector<72x32xf32>
    %2 = tpu.matmul %0, %1, %cst {dimension_numbers = #tpu.dot_dimension_numbers<[1], [0], [0], [1], [0, 0, 1, 1], [], []>} : vector<72x3xbf16>, vector<3x32xbf16>, vector<72x32xf32> -> vector<72x32xf32>
    %cst_3 = arith.constant 0.000000e+00 : f32
    %3 = vector.broadcast %cst_3 : f32 to vector<72x32xf32>
    %4 = arith.maximumf %2, %3 : vector<72x32xf32>
    %5 = arith.truncf %4 : vector<72x32xf32> to vector<72x32xbf16>
    %c0_4 = arith.constant 0 : index
    %c0_5 = arith.constant 0 : index
    %6 = vector.load %arg2[%c0_4, %c0_5] : memref<32x32xbf16, #tpu.memory_space<vmem>>, vector<32x32xbf16>
    %cst_6 = arith.constant dense<0.000000e+00> : vector<72x32xf32>
    %7 = tpu.matmul %5, %6, %cst_6 {dimension_numbers = #tpu.dot_dimension_numbers<[1], [0], [0], [1], [0, 0, 1, 1], [], []>} : vector<72x32xbf16>, vector<32x32xbf16>, vector<72x32xf32> -> vector<72x32xf32>
    %8 = arith.truncf %7 : vector<72x32xf32> to vector<72x32xbf16>
    %9 = tpu.iota {dimensions = array<i32: 1>} : vector<72x32xi32>
    %cst_7 = arith.constant 0.000000e+00 : f32
    %10 = vector.broadcast %cst_7 : f32 to vector<72x32xf32>
    %c0_8 = arith.constant 0 : index
    %c0_9 = arith.constant 0 : index
    %c0_10 = arith.constant 0 : index
    %11 = vector.load %arg3[%c0_8, %c0_9, %c0_10] : memref<4x72x72xbf16, #tpu.memory_space<vmem>>, vector<1x72x72xbf16>
    %12 = vector.shape_cast %11 : vector<1x72x72xbf16> to vector<72x72xbf16>
    %cst_11 = arith.constant dense<0.000000e+00> : vector<72x32xf32>
    %13 = tpu.matmul %12, %8, %cst_11 {dimension_numbers = #tpu.dot_dimension_numbers<[1], [0], [0], [1], [0, 0, 1, 1], [], []>} : vector<72x72xbf16>, vector<72x32xbf16>, vector<72x32xf32> -> vector<72x32xf32>
    %cst_12 = arith.constant dense<0.000000e+00> : vector<32xf32>
    %14 = vector.multi_reduction <add>, %13, %cst_12 [0] : vector<72x32xf32> to vector<32xf32>
    %15 = vector.shape_cast %14 : vector<32xf32> to vector<1x32xf32>
    %cst_13 = arith.constant 2.000000e+00 : f32
    %16 = vector.broadcast %cst_13 : f32 to vector<1x32xf32>
    %17 = arith.divf %15, %16 : vector<1x32xf32>
    %18 = arith.mulf %13, %13 : vector<72x32xf32>
    %cst_14 = arith.constant dense<0.000000e+00> : vector<32xf32>
    %19 = vector.multi_reduction <add>, %18, %cst_14 [0] : vector<72x32xf32> to vector<32xf32>
    %20 = vector.shape_cast %19 : vector<32xf32> to vector<1x32xf32>
    %cst_15 = arith.constant 2.000000e+00 : f32
    %21 = vector.broadcast %cst_15 : f32 to vector<1x32xf32>
    %22 = arith.divf %20, %21 : vector<1x32xf32>
    %23 = arith.mulf %17, %17 : vector<1x32xf32>
    %24 = arith.subf %22, %23 : vector<1x32xf32>
    %25 = vector.broadcast %17 : vector<1x32xf32> to vector<72x32xf32>
    %26 = arith.subf %13, %25 : vector<72x32xf32>
    %cst_16 = arith.constant 0.000000e+00 : f32
    %27 = vector.broadcast %cst_16 : f32 to vector<1x32xf32>
    %28 = arith.maximumf %24, %27 : vector<1x32xf32>
    %cst_17 = arith.constant 9.99999974E-6 : f32
    %29 = vector.broadcast %cst_17 : f32 to vector<1x32xf32>
    %30 = arith.addf %28, %29 : vector<1x32xf32>
    %31 = math.rsqrt %30 : vector<1x32xf32>
    %32 = vector.broadcast %31 : vector<1x32xf32> to vector<72x32xf32>
    %33 = arith.mulf %26, %32 : vector<72x32xf32>
    %cst_18 = arith.constant 0.000000e+00 : f32
    %34 = vector.broadcast %cst_18 : f32 to vector<72x32xf32>
    %35 = arith.maximumf %33, %34 : vector<72x32xf32>
    %c0_19 = arith.constant 0 : index
    %c0_20 = arith.constant 0 : index
    %c0_21 = arith.constant 0 : index
    %36 = vector.load %arg4[%c0_19, %c0_20, %c0_21] : memref<4x72x72xbf16, #tpu.memory_space<vmem>>, vector<1x72x72xbf16>
    %37 = vector.shape_cast %36 : vector<1x72x72xbf16> to vector<72x72xbf16>
    %38 = arith.truncf %35 : vector<72x32xf32> to vector<72x32xbf16>
    %cst_22 = arith.constant dense<0.000000e+00> : vector<72x32xf32>
    %39 = tpu.matmul %37, %38, %cst_22 {dimension_numbers = #tpu.dot_dimension_numbers<[1], [0], [0], [1], [0, 0, 1, 1], [], []>} : vector<72x72xbf16>, vector<72x32xbf16>, vector<72x32xf32> -> vector<72x32xf32>
    %c0_i32 = arith.constant 0 : i32
    %40 = vector.broadcast %c0_i32 : i32 to vector<72x32xi32>
    %41 = arith.cmpi sge, %9, %40 : vector<72x32xi32>
    %c8_i32 = arith.constant 8 : i32
    %42 = vector.broadcast %c8_i32 : i32 to vector<72x32xi32>
    %43 = arith.cmpi slt, %9, %42 : vector<72x32xi32>
    %44 = arith.andi %41, %43 : vector<72x32xi1>
    %cst_23 = arith.constant 0.000000e+00 : f32
    %45 = vector.broadcast %cst_23 : f32 to vector<72x32xf32>
    %46 = arith.select %44, %39, %45 : vector<72x32xi1>, vector<72x32xf32>
    %47 = arith.addf %10, %46 : vector<72x32xf32>
    %c1 = arith.constant 1 : index
    %c0_24 = arith.constant 0 : index
    %c0_25 = arith.constant 0 : index
    %48 = vector.load %arg3[%c1, %c0_24, %c0_25] : memref<4x72x72xbf16, #tpu.memory_space<vmem>>, vector<1x72x72xbf16>
    %49 = vector.shape_cast %48 : vector<1x72x72xbf16> to vector<72x72xbf16>
    %cst_26 = arith.constant dense<0.000000e+00> : vector<72x32xf32>
    %50 = tpu.matmul %49, %8, %cst_26 {dimension_numbers = #tpu.dot_dimension_numbers<[1], [0], [0], [1], [0, 0, 1, 1], [], []>} : vector<72x72xbf16>, vector<72x32xbf16>, vector<72x32xf32> -> vector<72x32xf32>
    %cst_27 = arith.constant dense<0.000000e+00> : vector<32xf32>
    %51 = vector.multi_reduction <add>, %50, %cst_27 [0] : vector<72x32xf32> to vector<32xf32>
    %52 = vector.shape_cast %51 : vector<32xf32> to vector<1x32xf32>
    %cst_28 = arith.constant 8.000000e+00 : f32
    %53 = vector.broadcast %cst_28 : f32 to vector<1x32xf32>
    %54 = arith.divf %52, %53 : vector<1x32xf32>
    %55 = arith.mulf %50, %50 : vector<72x32xf32>
    %cst_29 = arith.constant dense<0.000000e+00> : vector<32xf32>
    %56 = vector.multi_reduction <add>, %55, %cst_29 [0] : vector<72x32xf32> to vector<32xf32>
    %57 = vector.shape_cast %56 : vector<32xf32> to vector<1x32xf32>
    %cst_30 = arith.constant 8.000000e+00 : f32
    %58 = vector.broadcast %cst_30 : f32 to vector<1x32xf32>
    %59 = arith.divf %57, %58 : vector<1x32xf32>
    %60 = arith.mulf %54, %54 : vector<1x32xf32>
    %61 = arith.subf %59, %60 : vector<1x32xf32>
    %62 = vector.broadcast %54 : vector<1x32xf32> to vector<72x32xf32>
    %63 = arith.subf %50, %62 : vector<72x32xf32>
    %cst_31 = arith.constant 0.000000e+00 : f32
    %64 = vector.broadcast %cst_31 : f32 to vector<1x32xf32>
    %65 = arith.maximumf %61, %64 : vector<1x32xf32>
    %cst_32 = arith.constant 9.99999974E-6 : f32
    %66 = vector.broadcast %cst_32 : f32 to vector<1x32xf32>
    %67 = arith.addf %65, %66 : vector<1x32xf32>
    %68 = math.rsqrt %67 : vector<1x32xf32>
    %69 = vector.broadcast %68 : vector<1x32xf32> to vector<72x32xf32>
    %70 = arith.mulf %63, %69 : vector<72x32xf32>
    %cst_33 = arith.constant 0.000000e+00 : f32
    %71 = vector.broadcast %cst_33 : f32 to vector<72x32xf32>
    %72 = arith.maximumf %70, %71 : vector<72x32xf32>
    %c1_34 = arith.constant 1 : index
    %c0_35 = arith.constant 0 : index
    %c0_36 = arith.constant 0 : index
    %73 = vector.load %arg4[%c1_34, %c0_35, %c0_36] : memref<4x72x72xbf16, #tpu.memory_space<vmem>>, vector<1x72x72xbf16>
    %74 = vector.shape_cast %73 : vector<1x72x72xbf16> to vector<72x72xbf16>
    %75 = arith.truncf %72 : vector<72x32xf32> to vector<72x32xbf16>
    %cst_37 = arith.constant dense<0.000000e+00> : vector<72x32xf32>
    %76 = tpu.matmul %74, %75, %cst_37 {dimension_numbers = #tpu.dot_dimension_numbers<[1], [0], [0], [1], [0, 0, 1, 1], [], []>} : vector<72x72xbf16>, vector<72x32xbf16>, vector<72x32xf32> -> vector<72x32xf32>
    %c8_i32_38 = arith.constant 8 : i32
    %77 = vector.broadcast %c8_i32_38 : i32 to vector<72x32xi32>
    %78 = arith.cmpi sge, %9, %77 : vector<72x32xi32>
    %c16_i32 = arith.constant 16 : i32
    %79 = vector.broadcast %c16_i32 : i32 to vector<72x32xi32>
    %80 = arith.cmpi slt, %9, %79 : vector<72x32xi32>
    %81 = arith.andi %78, %80 : vector<72x32xi1>
    %cst_39 = arith.constant 0.000000e+00 : f32
    %82 = vector.broadcast %cst_39 : f32 to vector<72x32xf32>
    %83 = arith.select %81, %76, %82 : vector<72x32xi1>, vector<72x32xf32>
    %84 = arith.addf %47, %83 : vector<72x32xf32>
    %c2 = arith.constant 2 : index
    %c0_40 = arith.constant 0 : index
    %c0_41 = arith.constant 0 : index
    %85 = vector.load %arg3[%c2, %c0_40, %c0_41] : memref<4x72x72xbf16, #tpu.memory_space<vmem>>, vector<1x72x72xbf16>
    %86 = vector.shape_cast %85 : vector<1x72x72xbf16> to vector<72x72xbf16>
    %cst_42 = arith.constant dense<0.000000e+00> : vector<72x32xf32>
    %87 = tpu.matmul %86, %8, %cst_42 {dimension_numbers = #tpu.dot_dimension_numbers<[1], [0], [0], [1], [0, 0, 1, 1], [], []>} : vector<72x72xbf16>, vector<72x32xbf16>, vector<72x32xf32> -> vector<72x32xf32>
    %cst_43 = arith.constant dense<0.000000e+00> : vector<32xf32>
    %88 = vector.multi_reduction <add>, %87, %cst_43 [0] : vector<72x32xf32> to vector<32xf32>
    %89 = vector.shape_cast %88 : vector<32xf32> to vector<1x32xf32>
    %cst_44 = arith.constant 1.800000e+01 : f32
    %90 = vector.broadcast %cst_44 : f32 to vector<1x32xf32>
    %91 = arith.divf %89, %90 : vector<1x32xf32>
    %92 = arith.mulf %87, %87 : vector<72x32xf32>
    %cst_45 = arith.constant dense<0.000000e+00> : vector<32xf32>
    %93 = vector.multi_reduction <add>, %92, %cst_45 [0] : vector<72x32xf32> to vector<32xf32>
    %94 = vector.shape_cast %93 : vector<32xf32> to vector<1x32xf32>
    %cst_46 = arith.constant 1.800000e+01 : f32
    %95 = vector.broadcast %cst_46 : f32 to vector<1x32xf32>
    %96 = arith.divf %94, %95 : vector<1x32xf32>
    %97 = arith.mulf %91, %91 : vector<1x32xf32>
    %98 = arith.subf %96, %97 : vector<1x32xf32>
    %99 = vector.broadcast %91 : vector<1x32xf32> to vector<72x32xf32>
    %100 = arith.subf %87, %99 : vector<72x32xf32>
    %cst_47 = arith.constant 0.000000e+00 : f32
    %101 = vector.broadcast %cst_47 : f32 to vector<1x32xf32>
    %102 = arith.maximumf %98, %101 : vector<1x32xf32>
    %cst_48 = arith.constant 9.99999974E-6 : f32
    %103 = vector.broadcast %cst_48 : f32 to vector<1x32xf32>
    %104 = arith.addf %102, %103 : vector<1x32xf32>
    %105 = math.rsqrt %104 : vector<1x32xf32>
    %106 = vector.broadcast %105 : vector<1x32xf32> to vector<72x32xf32>
    %107 = arith.mulf %100, %106 : vector<72x32xf32>
    %cst_49 = arith.constant 0.000000e+00 : f32
    %108 = vector.broadcast %cst_49 : f32 to vector<72x32xf32>
    %109 = arith.maximumf %107, %108 : vector<72x32xf32>
    %c2_50 = arith.constant 2 : index
    %c0_51 = arith.constant 0 : index
    %c0_52 = arith.constant 0 : index
    %110 = vector.load %arg4[%c2_50, %c0_51, %c0_52] : memref<4x72x72xbf16, #tpu.memory_space<vmem>>, vector<1x72x72xbf16>
    %111 = vector.shape_cast %110 : vector<1x72x72xbf16> to vector<72x72xbf16>
    %112 = arith.truncf %109 : vector<72x32xf32> to vector<72x32xbf16>
    %cst_53 = arith.constant dense<0.000000e+00> : vector<72x32xf32>
    %113 = tpu.matmul %111, %112, %cst_53 {dimension_numbers = #tpu.dot_dimension_numbers<[1], [0], [0], [1], [0, 0, 1, 1], [], []>} : vector<72x72xbf16>, vector<72x32xbf16>, vector<72x32xf32> -> vector<72x32xf32>
    %c16_i32_54 = arith.constant 16 : i32
    %114 = vector.broadcast %c16_i32_54 : i32 to vector<72x32xi32>
    %115 = arith.cmpi sge, %9, %114 : vector<72x32xi32>
    %c24_i32 = arith.constant 24 : i32
    %116 = vector.broadcast %c24_i32 : i32 to vector<72x32xi32>
    %117 = arith.cmpi slt, %9, %116 : vector<72x32xi32>
    %118 = arith.andi %115, %117 : vector<72x32xi1>
    %cst_55 = arith.constant 0.000000e+00 : f32
    %119 = vector.broadcast %cst_55 : f32 to vector<72x32xf32>
    %120 = arith.select %118, %113, %119 : vector<72x32xi1>, vector<72x32xf32>
    %121 = arith.addf %84, %120 : vector<72x32xf32>
    %c3 = arith.constant 3 : index
    %c0_56 = arith.constant 0 : index
    %c0_57 = arith.constant 0 : index
    %122 = vector.load %arg3[%c3, %c0_56, %c0_57] : memref<4x72x72xbf16, #tpu.memory_space<vmem>>, vector<1x72x72xbf16>
    %123 = vector.shape_cast %122 : vector<1x72x72xbf16> to vector<72x72xbf16>
    %cst_58 = arith.constant dense<0.000000e+00> : vector<72x32xf32>
    %124 = tpu.matmul %123, %8, %cst_58 {dimension_numbers = #tpu.dot_dimension_numbers<[1], [0], [0], [1], [0, 0, 1, 1], [], []>} : vector<72x72xbf16>, vector<72x32xbf16>, vector<72x32xf32> -> vector<72x32xf32>
    %cst_59 = arith.constant dense<0.000000e+00> : vector<32xf32>
    %125 = vector.multi_reduction <add>, %124, %cst_59 [0] : vector<72x32xf32> to vector<32xf32>
    %126 = vector.shape_cast %125 : vector<32xf32> to vector<1x32xf32>
    %cst_60 = arith.constant 7.200000e+01 : f32
    %127 = vector.broadcast %cst_60 : f32 to vector<1x32xf32>
    %128 = arith.divf %126, %127 : vector<1x32xf32>
    %129 = arith.mulf %124, %124 : vector<72x32xf32>
    %cst_61 = arith.constant dense<0.000000e+00> : vector<32xf32>
    %130 = vector.multi_reduction <add>, %129, %cst_61 [0] : vector<72x32xf32> to vector<32xf32>
    %131 = vector.shape_cast %130 : vector<32xf32> to vector<1x32xf32>
    %cst_62 = arith.constant 7.200000e+01 : f32
    %132 = vector.broadcast %cst_62 : f32 to vector<1x32xf32>
    %133 = arith.divf %131, %132 : vector<1x32xf32>
    %134 = arith.mulf %128, %128 : vector<1x32xf32>
    %135 = arith.subf %133, %134 : vector<1x32xf32>
    %136 = vector.broadcast %128 : vector<1x32xf32> to vector<72x32xf32>
    %137 = arith.subf %124, %136 : vector<72x32xf32>
    %cst_63 = arith.constant 0.000000e+00 : f32
    %138 = vector.broadcast %cst_63 : f32 to vector<1x32xf32>
    %139 = arith.maximumf %135, %138 : vector<1x32xf32>
    %cst_64 = arith.constant 9.99999974E-6 : f32
    %140 = vector.broadcast %cst_64 : f32 to vector<1x32xf32>
    %141 = arith.addf %139, %140 : vector<1x32xf32>
    %142 = math.rsqrt %141 : vector<1x32xf32>
    %143 = vector.broadcast %142 : vector<1x32xf32> to vector<72x32xf32>
    %144 = arith.mulf %137, %143 : vector<72x32xf32>
    %cst_65 = arith.constant 0.000000e+00 : f32
    %145 = vector.broadcast %cst_65 : f32 to vector<72x32xf32>
    %146 = arith.maximumf %144, %145 : vector<72x32xf32>
    %c3_66 = arith.constant 3 : index
    %c0_67 = arith.constant 0 : index
    %c0_68 = arith.constant 0 : index
    %147 = vector.load %arg4[%c3_66, %c0_67, %c0_68] : memref<4x72x72xbf16, #tpu.memory_space<vmem>>, vector<1x72x72xbf16>
    %148 = vector.shape_cast %147 : vector<1x72x72xbf16> to vector<72x72xbf16>
    %149 = arith.truncf %146 : vector<72x32xf32> to vector<72x32xbf16>
    %cst_69 = arith.constant dense<0.000000e+00> : vector<72x32xf32>
    %150 = tpu.matmul %148, %149, %cst_69 {dimension_numbers = #tpu.dot_dimension_numbers<[1], [0], [0], [1], [0, 0, 1, 1], [], []>} : vector<72x72xbf16>, vector<72x32xbf16>, vector<72x32xf32> -> vector<72x32xf32>
    %c24_i32_70 = arith.constant 24 : i32
    %151 = vector.broadcast %c24_i32_70 : i32 to vector<72x32xi32>
    %152 = arith.cmpi sge, %9, %151 : vector<72x32xi32>
    %c32_i32 = arith.constant 32 : i32
    %153 = vector.broadcast %c32_i32 : i32 to vector<72x32xi32>
    %154 = arith.cmpi slt, %9, %153 : vector<72x32xi32>
    %155 = arith.andi %152, %154 : vector<72x32xi1>
    %cst_71 = arith.constant 0.000000e+00 : f32
    %156 = vector.broadcast %cst_71 : f32 to vector<72x32xf32>
    %157 = arith.select %155, %150, %156 : vector<72x32xi1>, vector<72x32xf32>
    %158 = arith.addf %121, %157 : vector<72x32xf32>
    %159 = arith.truncf %158 : vector<72x32xf32> to vector<72x32xbf16>
    %160 = tpu.concatenate %5, %159 in 1 : vector<72x32xbf16>, vector<72x32xbf16> -> vector<72x64xbf16>
    %cst_72 = arith.constant 0.000000e+00 : f32
    %161 = vector.broadcast %cst_72 : f32 to vector<72x8xf32>
    %c0_73 = arith.constant 0 : index
    %c0_74 = arith.constant 0 : index
    %c0_75 = arith.constant 0 : index
    %162 = vector.load %arg6[%c0_73, %c0_74, %c0_75] : memref<9x64x8xbf16, #tpu.memory_space<vmem>>, vector<1x64x8xbf16>
    %163 = vector.shape_cast %162 : vector<1x64x8xbf16> to vector<64x8xbf16>
    %cst_76 = arith.constant dense<0.000000e+00> : vector<72x8xf32>
    %164 = tpu.matmul %160, %163, %cst_76 {dimension_numbers = #tpu.dot_dimension_numbers<[1], [0], [0], [1], [0, 0, 1, 1], [], []>} : vector<72x64xbf16>, vector<64x8xbf16>, vector<72x8xf32> -> vector<72x8xf32>
    %c0_77 = arith.constant 0 : index
    %c0_78 = arith.constant 0 : index
    %c0_79 = arith.constant 0 : index
    %165 = vector.load %arg5[%c0_77, %c0_78, %c0_79] : memref<9x72x72xbf16, #tpu.memory_space<vmem>>, vector<1x72x72xbf16>
    %166 = vector.shape_cast %165 : vector<1x72x72xbf16> to vector<72x72xbf16>
    %167 = arith.truncf %164 : vector<72x8xf32> to vector<72x8xbf16>
    %cst_80 = arith.constant dense<0.000000e+00> : vector<72x8xf32>
    %168 = tpu.matmul %166, %167, %cst_80 {dimension_numbers = #tpu.dot_dimension_numbers<[1], [0], [0], [1], [0, 0, 1, 1], [], []>} : vector<72x72xbf16>, vector<72x8xbf16>, vector<72x8xf32> -> vector<72x8xf32>
    %169 = arith.addf %161, %168 : vector<72x8xf32>
    %c1_81 = arith.constant 1 : index
    %c0_82 = arith.constant 0 : index
    %c0_83 = arith.constant 0 : index
    %170 = vector.load %arg6[%c1_81, %c0_82, %c0_83] : memref<9x64x8xbf16, #tpu.memory_space<vmem>>, vector<1x64x8xbf16>
    %171 = vector.shape_cast %170 : vector<1x64x8xbf16> to vector<64x8xbf16>
    %cst_84 = arith.constant dense<0.000000e+00> : vector<72x8xf32>
    %172 = tpu.matmul %160, %171, %cst_84 {dimension_numbers = #tpu.dot_dimension_numbers<[1], [0], [0], [1], [0, 0, 1, 1], [], []>} : vector<72x64xbf16>, vector<64x8xbf16>, vector<72x8xf32> -> vector<72x8xf32>
    %c1_85 = arith.constant 1 : index
    %c0_86 = arith.constant 0 : index
    %c0_87 = arith.constant 0 : index
    %173 = vector.load %arg5[%c1_85, %c0_86, %c0_87] : memref<9x72x72xbf16, #tpu.memory_space<vmem>>, vector<1x72x72xbf16>
    %174 = vector.shape_cast %173 : vector<1x72x72xbf16> to vector<72x72xbf16>
    %175 = arith.truncf %172 : vector<72x8xf32> to vector<72x8xbf16>
    %cst_88 = arith.constant dense<0.000000e+00> : vector<72x8xf32>
    %176 = tpu.matmul %174, %175, %cst_88 {dimension_numbers = #tpu.dot_dimension_numbers<[1], [0], [0], [1], [0, 0, 1, 1], [], []>} : vector<72x72xbf16>, vector<72x8xbf16>, vector<72x8xf32> -> vector<72x8xf32>
    %177 = arith.addf %169, %176 : vector<72x8xf32>
    %c2_89 = arith.constant 2 : index
    %c0_90 = arith.constant 0 : index
    %c0_91 = arith.constant 0 : index
    %178 = vector.load %arg6[%c2_89, %c0_90, %c0_91] : memref<9x64x8xbf16, #tpu.memory_space<vmem>>, vector<1x64x8xbf16>
    %179 = vector.shape_cast %178 : vector<1x64x8xbf16> to vector<64x8xbf16>
    %cst_92 = arith.constant dense<0.000000e+00> : vector<72x8xf32>
    %180 = tpu.matmul %160, %179, %cst_92 {dimension_numbers = #tpu.dot_dimension_numbers<[1], [0], [0], [1], [0, 0, 1, 1], [], []>} : vector<72x64xbf16>, vector<64x8xbf16>, vector<72x8xf32> -> vector<72x8xf32>
    %c2_93 = arith.constant 2 : index
    %c0_94 = arith.constant 0 : index
    %c0_95 = arith.constant 0 : index
    %181 = vector.load %arg5[%c2_93, %c0_94, %c0_95] : memref<9x72x72xbf16, #tpu.memory_space<vmem>>, vector<1x72x72xbf16>
    %182 = vector.shape_cast %181 : vector<1x72x72xbf16> to vector<72x72xbf16>
    %183 = arith.truncf %180 : vector<72x8xf32> to vector<72x8xbf16>
    %cst_96 = arith.constant dense<0.000000e+00> : vector<72x8xf32>
    %184 = tpu.matmul %182, %183, %cst_96 {dimension_numbers = #tpu.dot_dimension_numbers<[1], [0], [0], [1], [0, 0, 1, 1], [], []>} : vector<72x72xbf16>, vector<72x8xbf16>, vector<72x8xf32> -> vector<72x8xf32>
    %185 = arith.addf %177, %184 : vector<72x8xf32>
    %c3_97 = arith.constant 3 : index
    %c0_98 = arith.constant 0 : index
    %c0_99 = arith.constant 0 : index
    %186 = vector.load %arg6[%c3_97, %c0_98, %c0_99] : memref<9x64x8xbf16, #tpu.memory_space<vmem>>, vector<1x64x8xbf16>
    %187 = vector.shape_cast %186 : vector<1x64x8xbf16> to vector<64x8xbf16>
    %cst_100 = arith.constant dense<0.000000e+00> : vector<72x8xf32>
    %188 = tpu.matmul %160, %187, %cst_100 {dimension_numbers = #tpu.dot_dimension_numbers<[1], [0], [0], [1], [0, 0, 1, 1], [], []>} : vector<72x64xbf16>, vector<64x8xbf16>, vector<72x8xf32> -> vector<72x8xf32>
    %c3_101 = arith.constant 3 : index
    %c0_102 = arith.constant 0 : index
    %c0_103 = arith.constant 0 : index
    %189 = vector.load %arg5[%c3_101, %c0_102, %c0_103] : memref<9x72x72xbf16, #tpu.memory_space<vmem>>, vector<1x72x72xbf16>
    %190 = vector.shape_cast %189 : vector<1x72x72xbf16> to vector<72x72xbf16>
    %191 = arith.truncf %188 : vector<72x8xf32> to vector<72x8xbf16>
    %cst_104 = arith.constant dense<0.000000e+00> : vector<72x8xf32>
    %192 = tpu.matmul %190, %191, %cst_104 {dimension_numbers = #tpu.dot_dimension_numbers<[1], [0], [0], [1], [0, 0, 1, 1], [], []>} : vector<72x72xbf16>, vector<72x8xbf16>, vector<72x8xf32> -> vector<72x8xf32>
    %193 = arith.addf %185, %192 : vector<72x8xf32>
    %c4 = arith.constant 4 : index
    %c0_105 = arith.constant 0 : index
    %c0_106 = arith.constant 0 : index
    %194 = vector.load %arg6[%c4, %c0_105, %c0_106] : memref<9x64x8xbf16, #tpu.memory_space<vmem>>, vector<1x64x8xbf16>
    %195 = vector.shape_cast %194 : vector<1x64x8xbf16> to vector<64x8xbf16>
    %cst_107 = arith.constant dense<0.000000e+00> : vector<72x8xf32>
    %196 = tpu.matmul %160, %195, %cst_107 {dimension_numbers = #tpu.dot_dimension_numbers<[1], [0], [0], [1], [0, 0, 1, 1], [], []>} : vector<72x64xbf16>, vector<64x8xbf16>, vector<72x8xf32> -> vector<72x8xf32>
    %c4_108 = arith.constant 4 : index
    %c0_109 = arith.constant 0 : index
    %c0_110 = arith.constant 0 : index
    %197 = vector.load %arg5[%c4_108, %c0_109, %c0_110] : memref<9x72x72xbf16, #tpu.memory_space<vmem>>, vector<1x72x72xbf16>
    %198 = vector.shape_cast %197 : vector<1x72x72xbf16> to vector<72x72xbf16>
    %199 = arith.truncf %196 : vector<72x8xf32> to vector<72x8xbf16>
    %cst_111 = arith.constant dense<0.000000e+00> : vector<72x8xf32>
    %200 = tpu.matmul %198, %199, %cst_111 {dimension_numbers = #tpu.dot_dimension_numbers<[1], [0], [0], [1], [0, 0, 1, 1], [], []>} : vector<72x72xbf16>, vector<72x8xbf16>, vector<72x8xf32> -> vector<72x8xf32>
    %201 = arith.addf %193, %200 : vector<72x8xf32>
    %c5 = arith.constant 5 : index
    %c0_112 = arith.constant 0 : index
    %c0_113 = arith.constant 0 : index
    %202 = vector.load %arg6[%c5, %c0_112, %c0_113] : memref<9x64x8xbf16, #tpu.memory_space<vmem>>, vector<1x64x8xbf16>
    %203 = vector.shape_cast %202 : vector<1x64x8xbf16> to vector<64x8xbf16>
    %cst_114 = arith.constant dense<0.000000e+00> : vector<72x8xf32>
    %204 = tpu.matmul %160, %203, %cst_114 {dimension_numbers = #tpu.dot_dimension_numbers<[1], [0], [0], [1], [0, 0, 1, 1], [], []>} : vector<72x64xbf16>, vector<64x8xbf16>, vector<72x8xf32> -> vector<72x8xf32>
    %c5_115 = arith.constant 5 : index
    %c0_116 = arith.constant 0 : index
    %c0_117 = arith.constant 0 : index
    %205 = vector.load %arg5[%c5_115, %c0_116, %c0_117] : memref<9x72x72xbf16, #tpu.memory_space<vmem>>, vector<1x72x72xbf16>
    %206 = vector.shape_cast %205 : vector<1x72x72xbf16> to vector<72x72xbf16>
    %207 = arith.truncf %204 : vector<72x8xf32> to vector<72x8xbf16>
    %cst_118 = arith.constant dense<0.000000e+00> : vector<72x8xf32>
    %208 = tpu.matmul %206, %207, %cst_118 {dimension_numbers = #tpu.dot_dimension_numbers<[1], [0], [0], [1], [0, 0, 1, 1], [], []>} : vector<72x72xbf16>, vector<72x8xbf16>, vector<72x8xf32> -> vector<72x8xf32>
    %209 = arith.addf %201, %208 : vector<72x8xf32>
    %c6 = arith.constant 6 : index
    %c0_119 = arith.constant 0 : index
    %c0_120 = arith.constant 0 : index
    %210 = vector.load %arg6[%c6, %c0_119, %c0_120] : memref<9x64x8xbf16, #tpu.memory_space<vmem>>, vector<1x64x8xbf16>
    %211 = vector.shape_cast %210 : vector<1x64x8xbf16> to vector<64x8xbf16>
    %cst_121 = arith.constant dense<0.000000e+00> : vector<72x8xf32>
    %212 = tpu.matmul %160, %211, %cst_121 {dimension_numbers = #tpu.dot_dimension_numbers<[1], [0], [0], [1], [0, 0, 1, 1], [], []>} : vector<72x64xbf16>, vector<64x8xbf16>, vector<72x8xf32> -> vector<72x8xf32>
    %c6_122 = arith.constant 6 : index
    %c0_123 = arith.constant 0 : index
    %c0_124 = arith.constant 0 : index
    %213 = vector.load %arg5[%c6_122, %c0_123, %c0_124] : memref<9x72x72xbf16, #tpu.memory_space<vmem>>, vector<1x72x72xbf16>
    %214 = vector.shape_cast %213 : vector<1x72x72xbf16> to vector<72x72xbf16>
    %215 = arith.truncf %212 : vector<72x8xf32> to vector<72x8xbf16>
    %cst_125 = arith.constant dense<0.000000e+00> : vector<72x8xf32>
    %216 = tpu.matmul %214, %215, %cst_125 {dimension_numbers = #tpu.dot_dimension_numbers<[1], [0], [0], [1], [0, 0, 1, 1], [], []>} : vector<72x72xbf16>, vector<72x8xbf16>, vector<72x8xf32> -> vector<72x8xf32>
    %217 = arith.addf %209, %216 : vector<72x8xf32>
    %c7 = arith.constant 7 : index
    %c0_126 = arith.constant 0 : index
    %c0_127 = arith.constant 0 : index
    %218 = vector.load %arg6[%c7, %c0_126, %c0_127] : memref<9x64x8xbf16, #tpu.memory_space<vmem>>, vector<1x64x8xbf16>
    %219 = vector.shape_cast %218 : vector<1x64x8xbf16> to vector<64x8xbf16>
    %cst_128 = arith.constant dense<0.000000e+00> : vector<72x8xf32>
    %220 = tpu.matmul %160, %219, %cst_128 {dimension_numbers = #tpu.dot_dimension_numbers<[1], [0], [0], [1], [0, 0, 1, 1], [], []>} : vector<72x64xbf16>, vector<64x8xbf16>, vector<72x8xf32> -> vector<72x8xf32>
    %c7_129 = arith.constant 7 : index
    %c0_130 = arith.constant 0 : index
    %c0_131 = arith.constant 0 : index
    %221 = vector.load %arg5[%c7_129, %c0_130, %c0_131] : memref<9x72x72xbf16, #tpu.memory_space<vmem>>, vector<1x72x72xbf16>
    %222 = vector.shape_cast %221 : vector<1x72x72xbf16> to vector<72x72xbf16>
    %223 = arith.truncf %220 : vector<72x8xf32> to vector<72x8xbf16>
    %cst_132 = arith.constant dense<0.000000e+00> : vector<72x8xf32>
    %224 = tpu.matmul %222, %223, %cst_132 {dimension_numbers = #tpu.dot_dimension_numbers<[1], [0], [0], [1], [0, 0, 1, 1], [], []>} : vector<72x72xbf16>, vector<72x8xbf16>, vector<72x8xf32> -> vector<72x8xf32>
    %225 = arith.addf %217, %224 : vector<72x8xf32>
    %c8 = arith.constant 8 : index
    %c0_133 = arith.constant 0 : index
    %c0_134 = arith.constant 0 : index
    %226 = vector.load %arg6[%c8, %c0_133, %c0_134] : memref<9x64x8xbf16, #tpu.memory_space<vmem>>, vector<1x64x8xbf16>
    %227 = vector.shape_cast %226 : vector<1x64x8xbf16> to vector<64x8xbf16>
    %cst_135 = arith.constant dense<0.000000e+00> : vector<72x8xf32>
    %228 = tpu.matmul %160, %227, %cst_135 {dimension_numbers = #tpu.dot_dimension_numbers<[1], [0], [0], [1], [0, 0, 1, 1], [], []>} : vector<72x64xbf16>, vector<64x8xbf16>, vector<72x8xf32> -> vector<72x8xf32>
    %c8_136 = arith.constant 8 : index
    %c0_137 = arith.constant 0 : index
    %c0_138 = arith.constant 0 : index
    %229 = vector.load %arg5[%c8_136, %c0_137, %c0_138] : memref<9x72x72xbf16, #tpu.memory_space<vmem>>, vector<1x72x72xbf16>
    %230 = vector.shape_cast %229 : vector<1x72x72xbf16> to vector<72x72xbf16>
    %231 = arith.truncf %228 : vector<72x8xf32> to vector<72x8xbf16>
    %cst_139 = arith.constant dense<0.000000e+00> : vector<72x8xf32>
    %232 = tpu.matmul %230, %231, %cst_139 {dimension_numbers = #tpu.dot_dimension_numbers<[1], [0], [0], [1], [0, 0, 1, 1], [], []>} : vector<72x72xbf16>, vector<72x8xbf16>, vector<72x8xf32> -> vector<72x8xf32>
    %233 = arith.addf %225, %232 : vector<72x8xf32>
    %cst_140 = arith.constant dense<0.000000e+00> : vector<8xf32>
    %234 = vector.multi_reduction <add>, %233, %cst_140 [0] : vector<72x8xf32> to vector<8xf32>
    %235 = vector.shape_cast %234 : vector<8xf32> to vector<1x8xf32>
    %cst_141 = arith.constant 7.200000e+01 : f32
    %236 = vector.broadcast %cst_141 : f32 to vector<1x8xf32>
    %237 = arith.divf %235, %236 : vector<1x8xf32>
    %238 = arith.mulf %233, %233 : vector<72x8xf32>
    %cst_142 = arith.constant dense<0.000000e+00> : vector<8xf32>
    %239 = vector.multi_reduction <add>, %238, %cst_142 [0] : vector<72x8xf32> to vector<8xf32>
    %240 = vector.shape_cast %239 : vector<8xf32> to vector<1x8xf32>
    %cst_143 = arith.constant 7.200000e+01 : f32
    %241 = vector.broadcast %cst_143 : f32 to vector<1x8xf32>
    %242 = arith.divf %240, %241 : vector<1x8xf32>
    %243 = arith.mulf %237, %237 : vector<1x8xf32>
    %244 = arith.subf %242, %243 : vector<1x8xf32>
    %245 = vector.broadcast %237 : vector<1x8xf32> to vector<72x8xf32>
    %246 = arith.subf %233, %245 : vector<72x8xf32>
    %cst_144 = arith.constant 0.000000e+00 : f32
    %247 = vector.broadcast %cst_144 : f32 to vector<1x8xf32>
    %248 = arith.maximumf %244, %247 : vector<1x8xf32>
    %cst_145 = arith.constant 9.99999974E-6 : f32
    %249 = vector.broadcast %cst_145 : f32 to vector<1x8xf32>
    %250 = arith.addf %248, %249 : vector<1x8xf32>
    %251 = math.rsqrt %250 : vector<1x8xf32>
    %252 = vector.broadcast %251 : vector<1x8xf32> to vector<72x8xf32>
    %253 = arith.mulf %246, %252 : vector<72x8xf32>
    %cst_146 = arith.constant 0.000000e+00 : f32
    %254 = vector.broadcast %cst_146 : f32 to vector<72x8xf32>
    %255 = arith.maximumf %253, %254 : vector<72x8xf32>
    %c0_147 = arith.constant 0 : index
    %c0_148 = arith.constant 0 : index
    %256 = vector.load %arg14[%c0_147, %c0_148] : memref<72x8xf32, #tpu.memory_space<vmem>>, vector<72x8xf32>
    tpu.vector_store %arg14[%c0_147, %c0_148], %255 {strides = array<i32>} : memref<72x8xf32, #tpu.memory_space<vmem>>, vector<72x8xf32>,
    %257 = arith.truncf %255 : vector<72x8xf32> to vector<72x8xbf16>
    %c0_149 = arith.constant 0 : index
    %c0_150 = arith.constant 0 : index
    %258 = vector.load %arg7[%c0_149, %c0_150] : memref<8x16xbf16, #tpu.memory_space<vmem>>, vector<8x16xbf16>
    %cst_151 = arith.constant dense<0.000000e+00> : vector<72x16xf32>
    %259 = tpu.matmul %257, %258, %cst_151 {dimension_numbers = #tpu.dot_dimension_numbers<[1], [0], [0], [1], [0, 0, 1, 1], [], []>} : vector<72x8xbf16>, vector<8x16xbf16>, vector<72x16xf32> -> vector<72x16xf32>
    %c0_152 = arith.constant 0 : index
    %c0_153 = arith.constant 0 : index
    %260 = vector.load %arg8[%c0_152, %c0_153] : memref<1x16xf32, #tpu.memory_space<vmem>>, vector<1x16xf32>
    %261 = vector.broadcast %260 : vector<1x16xf32> to vector<72x16xf32>
    %262 = arith.addf %259, %261 : vector<72x16xf32>
    %cst_154 = arith.constant 0.000000e+00 : f32
    %263 = vector.broadcast %cst_154 : f32 to vector<72x16xf32>
    %264 = arith.maximumf %262, %263 : vector<72x16xf32>
    %265 = arith.truncf %264 : vector<72x16xf32> to vector<72x16xbf16>
    %c0_155 = arith.constant 0 : index
    %c0_156 = arith.constant 0 : index
    %266 = vector.load %arg9[%c0_155, %c0_156] : memref<16x64xbf16, #tpu.memory_space<vmem>>, vector<16x64xbf16>
    %cst_157 = arith.constant dense<0.000000e+00> : vector<72x64xf32>
    %267 = tpu.matmul %265, %266, %cst_157 {dimension_numbers = #tpu.dot_dimension_numbers<[1], [0], [0], [1], [0, 0, 1, 1], [], []>} : vector<72x16xbf16>, vector<16x64xbf16>, vector<72x64xf32> -> vector<72x64xf32>
    %c0_158 = arith.constant 0 : index
    %c0_159 = arith.constant 0 : index
    %268 = vector.load %arg10[%c0_158, %c0_159] : memref<1x64xf32, #tpu.memory_space<vmem>>, vector<1x64xf32>
    %269 = vector.broadcast %268 : vector<1x64xf32> to vector<72x64xf32>
    %270 = arith.addf %267, %269 : vector<72x64xf32>
    %cst_160 = arith.constant 0.000000e+00 : f32
    %271 = vector.broadcast %cst_160 : f32 to vector<72x64xf32>
    %272 = arith.maximumf %270, %271 : vector<72x64xf32>
    %273 = arith.truncf %272 : vector<72x64xf32> to vector<72x64xbf16>
    %c0_161 = arith.constant 0 : index
    %c0_162 = arith.constant 0 : index
    %274 = vector.load %arg11[%c0_161, %c0_162] : memref<64x256xbf16, #tpu.memory_space<vmem>>, vector<64x256xbf16>
    %cst_163 = arith.constant dense<0.000000e+00> : vector<72x256xf32>
    %275 = tpu.matmul %273, %274, %cst_163 {dimension_numbers = #tpu.dot_dimension_numbers<[1], [0], [0], [1], [0, 0, 1, 1], [], []>} : vector<72x64xbf16>, vector<64x256xbf16>, vector<72x256xf32> -> vector<72x256xf32>
    %c0_164 = arith.constant 0 : index
    %c0_165 = arith.constant 0 : index
    %276 = vector.load %arg12[%c0_164, %c0_165] : memref<1x256xf32, #tpu.memory_space<vmem>>, vector<1x256xf32>
    %277 = vector.broadcast %276 : vector<1x256xf32> to vector<72x256xf32>
    %278 = arith.addf %275, %277 : vector<72x256xf32>
    %cst_166 = arith.constant 0.000000e+00 : f32
    %279 = vector.broadcast %cst_166 : f32 to vector<72x256xf32>
    %280 = arith.maximumf %278, %279 : vector<72x256xf32>
    %c0_167 = arith.constant 0 : index
    %c0_168 = arith.constant 0 : index
    %281 = vector.load %arg13[%c0_167, %c0_168] : memref<72x256xf32, #tpu.memory_space<vmem>>, vector<72x256xf32>
    tpu.vector_store %arg13[%c0_167, %c0_168], %280 {strides = array<i32>} : memref<72x256xf32, #tpu.memory_space<vmem>>, vector<72x256xf32>,
    return
  }
}

</mosaic_0001>

<llo_original>
// kernel: pspnet_forward.1
$region0: #{pspnet_forward.1}
  #allocation0 [shape = 'u32[]', space=smem, size = 0x4, offset = 0x4, fixed_abs, tag = 'smem constant byte address 0x4 - core index']
  #allocation1 [shape = 'u32[144,128]{1,0:T(1,128)}', space=vmem, size = 0x12000, scoped, tag = 'internal scratch']
  %s0 = inlined_call_operand.vmem [shape: bf16[72,3], index: 0, kind: input, shape index: {}]
  %s1 = inlined_call_operand.hbm [shape: bf16[3,32], index: 1, kind: input, shape index: {}]
  %s2 = inlined_call_operand.hbm [shape: bf16[32,32], index: 2, kind: input, shape index: {}]
  %s3 = inlined_call_operand.hbm [shape: bf16[4,72,72], index: 3, kind: input, shape index: {}]
  %s4 = inlined_call_operand.hbm [shape: bf16[4,72,72], index: 4, kind: input, shape index: {}]
  %s5 = inlined_call_operand.hbm [shape: bf16[9,72,72], index: 5, kind: input, shape index: {}]
  %s6 = inlined_call_operand.vmem [shape: bf16[9,64,8], index: 6, kind: input, shape index: {}]
  %s7 = inlined_call_operand.hbm [shape: bf16[8,16], index: 7, kind: input, shape index: {}]
  %s8 = inlined_call_operand.hbm [shape: f32[1,16], index: 8, kind: input, shape index: {}]
  %s9 = inlined_call_operand.hbm [shape: bf16[16,64], index: 9, kind: input, shape index: {}]
  %s10 = inlined_call_operand.hbm [shape: f32[1,64], index: 10, kind: input, shape index: {}]
  %s11 = inlined_call_operand.hbm [shape: bf16[64,256], index: 11, kind: input, shape index: {}]
  %s12 = inlined_call_operand.hbm [shape: f32[1,256], index: 12, kind: input, shape index: {}]
  %s13 = inlined_call_operand.vmem [shape: f32[72,256], index: 13, kind: output, shape index: {0}]
  %s14 = inlined_call_operand.vmem [shape: f32[72,8], index: 14, kind: output, shape index: {1}]
  %15 = xla_tuple %s13, %s14
  %s16 = sld [smem:[#allocation0]]
  $region114: #{pspnet_forward.1} parent=0
    _
  %s18 = ssub.s32 1, %s16
  %s19 = scalar_select 0, %s18, %s16
  $region1: #{pspnet_forward.1} parent=0
    #allocation2 [shape = 'u8[1024]{0}', space=vmem, size = 0x400, scoped, tag = 'input window, operand 1, single buffered']
    #allocation3 [shape = 's32[1]{0}', space=sflag, size = 0x4, scoped, tag = 'scoped memory for pspnet_forward.1']
    #allocation4 [shape = 'u8[8192]{0}', space=vmem, size = 0x2000, scoped, tag = 'input window, operand 2, single buffered']
    #allocation5 [shape = 's32[1]{0}', space=sflag, size = 0x4, scoped, tag = 'scoped memory for pspnet_forward.1']
    #allocation6 [shape = 'u8[73728]{0}', space=vmem, size = 0x12000, scoped, tag = 'input window, operand 3, single buffered']
    #allocation7 [shape = 'u8[73728]{0}', space=vmem, size = 0x12000, scoped, tag = 'input window, operand 4, single buffered']
    #allocation8 [shape = 's32[1]{0}', space=sflag, size = 0x4, scoped, tag = 'scoped memory for pspnet_forward.1']
    #allocation9 [shape = 'u8[165888]{0}', space=vmem, size = 0x28800, scoped, tag = 'input window, operand 5, single buffered']
    #allocation10 [shape = 'u8[2048]{0}', space=vmem, size = 0x800, scoped, tag = 'input window, operand 7, single buffered']
    #allocation11 [shape = 's32[1]{0}', space=sflag, size = 0x4, scoped, tag = 'scoped memory for pspnet_forward.1']
    #allocation12 [shape = 'u8[512]{0}', space=vmem, size = 0x400, scoped, tag = 'input window, operand 8, single buffered']
    #allocation13 [shape = 'u8[4096]{0}', space=vmem, size = 0x1000, scoped, tag = 'input window, operand 9, single buffered']
    #allocation14 [shape = 's32[1]{0}', space=sflag, size = 0x4, scoped, tag = 'scoped memory for pspnet_forward.1']
    #allocation15 [shape = 'u8[512]{0}', space=vmem, size = 0x400, scoped, tag = 'input window, operand 10, single buffered']
    #allocation16 [shape = 'u8[32768]{0}', space=vmem, size = 0x8000, scoped, tag = 'input window, operand 11, single buffered']
    #allocation17 [shape = 's32[1]{0}', space=sflag, size = 0x4, scoped, tag = 'scoped memory for pspnet_forward.1']
    #allocation18 [shape = 'u8[1024]{0}', space=vmem, size = 0x400, scoped, tag = 'input window, operand 12, single buffered']
    %20 = vsyncpa [#allocation3], 0
    %21 = vsyncpa [#allocation5], 0
    %22 = vsyncpa [#allocation8], 0
    %23 = vsyncpa [#allocation11], 0
    %24 = vsyncpa [#allocation14], 0
    %25 = vsyncpa [#allocation17], 0
    // Predicated region
    $region2: #{pspnet_forward.1} parent=1 // pred_check
      _
    $region3: #{pspnet_forward.1} parent=1 // pred_check_branch
      %27 = sbr.rel (0) target = $region5
    $region4: #{pspnet_forward.1} parent=1 // pred_region
      _
    $region5: #{pspnet_forward.1} parent=1 // pred_fallthru
      _
    // Predicated region
    $region6: #{pspnet_forward.1} parent=1 // pred_check
      _
    $region7: #{pspnet_forward.1} parent=1 // pred_check_branch
      %29 = sbr.rel (0) target = $region9
    $region8: #{pspnet_forward.1} parent=1 // pred_region
      %s31 = ssub.s32 32, 32
      %32 = vsyncadd [#allocation3], %s31
      %s34 = sshll.u32 [#allocation2], 4
      %s35 = int_to_ptr.vmem [resolvable:$true] %s34
      %37 = dma.hbm_to_vmem [thread:$0]  %s1, 32, %s35, [#allocation3]
    $region9: #{pspnet_forward.1} parent=1 // pred_fallthru
      _
    // Predicated region
    $region10: #{pspnet_forward.1} parent=1 // pred_check
      _
    $region11: #{pspnet_forward.1} parent=1 // pred_check_branch
      %39 = sbr.rel (0) target = $region13
    $region12: #{pspnet_forward.1} parent=1 // pred_region
      %s41 = ssub.s32 256, 256
      %42 = vsyncadd [#allocation5], %s41
      %s43 = sshll.u32 [#allocation4], 4
      %s44 = int_to_ptr.vmem [resolvable:$true] %s43
      %49 = dma.hbm_to_vmem [thread:$0]  %s2, 256, %s44, [#allocation5], 64, 64, 4
    $region13: #{pspnet_forward.1} parent=1 // pred_fallthru
      _
    // Predicated region
    $region14: #{pspnet_forward.1} parent=1 // pred_check
      _
    $region15: #{pspnet_forward.1} parent=1 // pred_check_branch
      %51 = sbr.rel (0) target = $region17
    $region16: #{pspnet_forward.1} parent=1 // pred_region
      %s53 = ssub.s32 2304, 2304
      %54 = vsyncadd [#allocation5], %s53
      %s55 = sshll.u32 [#allocation6], 4
      %s56 = int_to_ptr.vmem [resolvable:$true] %s55
      %61 = dma.hbm_to_vmem [thread:$0]  %s3, 2304, %s56, [#allocation5], 64, 64, 4
    $region17: #{pspnet_forward.1} parent=1 // pred_fallthru
      _
    // Predicated region
    $region18: #{pspnet_forward.1} parent=1 // pred_check
      _
    $region19: #{pspnet_forward.1} parent=1 // pred_check_branch
      %63 = sbr.rel (0) target = $region21
    $region20: #{pspnet_forward.1} parent=1 // pred_region
      %s65 = ssub.s32 2304, 2304
      %66 = vsyncadd [#allocation8], %s65
      %s67 = sshll.u32 [#allocation7], 4
      %s68 = int_to_ptr.vmem [resolvable:$true] %s67
      %73 = dma.hbm_to_vmem [thread:$0]  %s4, 2304, %s68, [#allocation8], 64, 64, 4
    $region21: #{pspnet_forward.1} parent=1 // pred_fallthru
      _
    // Predicated region
    $region22: #{pspnet_forward.1} parent=1 // pred_check
      _
    $region23: #{pspnet_forward.1} parent=1 // pred_check_branch
      %75 = sbr.rel (0) target = $region25
    $region24: #{pspnet_forward.1} parent=1 // pred_region
      %s77 = ssub.s32 5184, 5184
      %78 = vsyncadd [#allocation8], %s77
      %s79 = sshll.u32 [#allocation9], 4
      %s80 = int_to_ptr.vmem [resolvable:$true] %s79
      %85 = dma.hbm_to_vmem [thread:$0]  %s5, 5184, %s80, [#allocation8], 64, 64, 4
    $region25: #{pspnet_forward.1} parent=1 // pred_fallthru
      _
    // Predicated region
    $region26: #{pspnet_forward.1} parent=1 // pred_check
      _
    $region27: #{pspnet_forward.1} parent=1 // pred_check_branch
      %87 = sbr.rel (0) target = $region29
    $region28: #{pspnet_forward.1} parent=1 // pred_region
      _
    $region29: #{pspnet_forward.1} parent=1 // pred_fallthru
      _
    // Predicated region
    $region30: #{pspnet_forward.1} parent=1 // pred_check
      _
    $region31: #{pspnet_forward.1} parent=1 // pred_check_branch
      %89 = sbr.rel (0) target = $region33
    $region32: #{pspnet_forward.1} parent=1 // pred_region
      %s91 = ssub.s32 64, 64
      %92 = vsyncadd [#allocation11], %s91
      %s94 = sshll.u32 [#allocation10], 4
      %s95 = int_to_ptr.vmem [resolvable:$true] %s94
      %97 = dma.hbm_to_vmem [thread:$0]  %s7, 64, %s95, [#allocation11]
    $region33: #{pspnet_forward.1} parent=1 // pred_fallthru
      _
    // Predicated region
    $region34: #{pspnet_forward.1} parent=1 // pred_check
      _
    $region35: #{pspnet_forward.1} parent=1 // pred_check_branch
      %99 = sbr.rel (0) target = $region37
    $region36: #{pspnet_forward.1} parent=1 // pred_region
      %s101 = ssub.s32 16, 16
      %102 = vsyncadd [#allocation11], %s101
      %s104 = sshll.u32 [#allocation12], 4
      %s105 = int_to_ptr.vmem [resolvable:$true] %s104
      %107 = dma.hbm_to_vmem [thread:$0]  %s8, 16, %s105, [#allocation11]
    $region37: #{pspnet_forward.1} parent=1 // pred_fallthru
      _
    // Predicated region
    $region38: #{pspnet_forward.1} parent=1 // pred_check
      _
    $region39: #{pspnet_forward.1} parent=1 // pred_check_branch
      %109 = sbr.rel (0) target = $region41
    $region40: #{pspnet_forward.1} parent=1 // pred_region
      %s111 = ssub.s32 128, 128
      %112 = vsyncadd [#allocation14], %s111
      %s113 = sshll.u32 [#allocation13], 4
      %s114 = int_to_ptr.vmem [resolvable:$true] %s113
      %119 = dma.hbm_to_vmem [thread:$0]  %s9, 128, %s114, [#allocation14], 64, 64, 4
    $region41: #{pspnet_forward.1} parent=1 // pred_fallthru
      _
    // Predicated region
    $region42: #{pspnet_forward.1} parent=1 // pred_check
      _
    $region43: #{pspnet_forward.1} parent=1 // pred_check_branch
      %121 = sbr.rel (0) target = $region45
    $region44: #{pspnet_forward.1} parent=1 // pred_region
      %s123 = ssub.s32 16, 16
      %124 = vsyncadd [#allocation14], %s123
      %s126 = sshll.u32 [#allocation15], 4
      %s127 = int_to_ptr.vmem [resolvable:$true] %s126
      %129 = dma.hbm_to_vmem [thread:$0]  %s10, 16, %s127, [#allocation14]
    $region45: #{pspnet_forward.1} parent=1 // pred_fallthru
      _
    // Predicated region
    $region46: #{pspnet_forward.1} parent=1 // pred_check
      _
    $region47: #{pspnet_forward.1} parent=1 // pred_check_branch
      %131 = sbr.rel (0) target = $region49
    $region48: #{pspnet_forward.1} parent=1 // pred_region
      %s133 = ssub.s32 1024, 1024
      %134 = vsyncadd [#allocation17], %s133
      %s135 = sshll.u32 [#allocation16], 4
      %s136 = int_to_ptr.vmem [resolvable:$true] %s135
      %141 = dma.hbm_to_vmem [thread:$0]  %s11, 1024, %s136, [#allocation17], 128, 128, 8
    $region49: #{pspnet_forward.1} parent=1 // pred_fallthru
      _
    // Predicated region
    $region50: #{pspnet_forward.1} parent=1 // pred_check
      _
    $region51: #{pspnet_forward.1} parent=1 // pred_check_branch
      %143 = sbr.rel (0) target = $region53
    $region52: #{pspnet_forward.1} parent=1 // pred_region
      %s145 = ssub.s32 32, 32
      %146 = vsyncadd [#allocation17], %s145
      %s148 = sshll.u32 [#allocation18], 4
      %s149 = int_to_ptr.vmem [resolvable:$true] %s148
      %151 = dma.hbm_to_vmem [thread:$0]  %s12, 32, %s149, [#allocation17]
    $region53: #{pspnet_forward.1} parent=1 // pred_fallthru
      _
    // Predicated region
    $region54: #{pspnet_forward.1} parent=1 // pred_check
      _
    $region55: #{pspnet_forward.1} parent=1 // pred_check_branch
      %153 = sbr.rel (0) target = $region57
    $region56: #{pspnet_forward.1} parent=1 // pred_region
      %154 = dma.done [#allocation3], 32
    $region57: #{pspnet_forward.1} parent=1 // pred_fallthru
      _
    // Predicated region
    $region58: #{pspnet_forward.1} parent=1 // pred_check
      _
    $region59: #{pspnet_forward.1} parent=1 // pred_check_branch
      %156 = sbr.rel (0) target = $region61
    $region60: #{pspnet_forward.1} parent=1 // pred_region
      %157 = dma.done [#allocation5], 256
    $region61: #{pspnet_forward.1} parent=1 // pred_fallthru
      _
    // Predicated region
    $region62: #{pspnet_forward.1} parent=1 // pred_check
      _
    $region63: #{pspnet_forward.1} parent=1 // pred_check_branch
      %159 = sbr.rel (0) target = $region65
    $region64: #{pspnet_forward.1} parent=1 // pred_region
      %160 = dma.done [#allocation5], 2304
    $region65: #{pspnet_forward.1} parent=1 // pred_fallthru
      _
    // Predicated region
    $region66: #{pspnet_forward.1} parent=1 // pred_check
      _
    $region67: #{pspnet_forward.1} parent=1 // pred_check_branch
      %162 = sbr.rel (0) target = $region69
    $region68: #{pspnet_forward.1} parent=1 // pred_region
      %163 = dma.done [#allocation8], 2304
    $region69: #{pspnet_forward.1} parent=1 // pred_fallthru
      _
    // Predicated region
    $region70: #{pspnet_forward.1} parent=1 // pred_check
      _
    $region71: #{pspnet_forward.1} parent=1 // pred_check_branch
      %165 = sbr.rel (0) target = $region73
    $region72: #{pspnet_forward.1} parent=1 // pred_region
      %166 = dma.done [#allocation8], 5184
    $region73: #{pspnet_forward.1} parent=1 // pred_fallthru
      _
    // Predicated region
    $region74: #{pspnet_forward.1} parent=1 // pred_check
      _
    $region75: #{pspnet_forward.1} parent=1 // pred_check_branch
      %168 = sbr.rel (0) target = $region77
    $region76: #{pspnet_forward.1} parent=1 // pred_region
      %169 = dma.done [#allocation11], 64
    $region77: #{pspnet_forward.1} parent=1 // pred_fallthru
      _
    // Predicated region
    $region78: #{pspnet_forward.1} parent=1 // pred_check
      _
    $region79: #{pspnet_forward.1} parent=1 // pred_check_branch
      %171 = sbr.rel (0) target = $region81
    $region80: #{pspnet_forward.1} parent=1 // pred_region
      %172 = dma.done [#allocation11], 16
    $region81: #{pspnet_forward.1} parent=1 // pred_fallthru
      _
    // Predicated region
    $region82: #{pspnet_forward.1} parent=1 // pred_check
      _
    $region83: #{pspnet_forward.1} parent=1 // pred_check_branch
      %174 = sbr.rel (0) target = $region85
    $region84: #{pspnet_forward.1} parent=1 // pred_region
      %175 = dma.done [#allocation14], 128
    $region85: #{pspnet_forward.1} parent=1 // pred_fallthru
      _
    // Predicated region
    $region86: #{pspnet_forward.1} parent=1 // pred_check
      _
    $region87: #{pspnet_forward.1} parent=1 // pred_check_branch
      %177 = sbr.rel (0) target = $region89
    $region88: #{pspnet_forward.1} parent=1 // pred_region
      %178 = dma.done [#allocation14], 16
    $region89: #{pspnet_forward.1} parent=1 // pred_fallthru
      _
    // Predicated region
    $region90: #{pspnet_forward.1} parent=1 // pred_check
      _
    $region91: #{pspnet_forward.1} parent=1 // pred_check_branch
      %180 = sbr.rel (0) target = $region93
    $region92: #{pspnet_forward.1} parent=1 // pred_region
      %181 = dma.done [#allocation17], 1024
    $region93: #{pspnet_forward.1} parent=1 // pred_fallthru
      _
    // Predicated region
    $region94: #{pspnet_forward.1} parent=1 // pred_check
      _
    $region95: #{pspnet_forward.1} parent=1 // pred_check_branch
      %183 = sbr.rel (0) target = $region97
    $region96: #{pspnet_forward.1} parent=1 // pred_region
      %184 = dma.done [#allocation17], 32
    $region97: #{pspnet_forward.1} parent=1 // pred_fallthru
      _
    %v186 = vld [vmem:[%s0] sm:$0xf]
    %v187 = vld [vmem:[%s0 + $0x4] sm:$0xf]
    %v188 = vld [vmem:[%s0 + $0x8] sm:$0xf]
    %v189 = vld [vmem:[%s0 + $0xc] sm:$0xf]
    %v190 = vld [vmem:[%s0 + $0x10] sm:$0xf]
    %v191 = vld [vmem:[%s0 + $0x14] sm:$0xf]
    %v192 = vld [vmem:[%s0 + $0x18] sm:$0xf]
    %v193 = vld [vmem:[%s0 + $0x1c] sm:$0xf]
    %v194 = vld [vmem:[%s0 + $0x20] sm:$0xf]
    %v195 = vld [vmem:[#allocation2] sm:$0x3]
    %v205 = vunpack.c.l.b16 %v186
    %v206 = vunpack.c.l.b16 %v187
    %v207 = vunpack.c.l.b16 %v188
    %v208 = vunpack.c.l.b16 %v189
    %v209 = vunpack.c.l.b16 %v190
    %v210 = vunpack.c.l.b16 %v191
    %v211 = vunpack.c.l.b16 %v192
    %v212 = vunpack.c.l.b16 %v193
    %v213 = vunpack.c.l.b16 %v194
    %v214 = vpack.c.b16 %v206, %v205
    %v215 = vpack.c.b16 %v208, %v207
    %v216 = vpack.c.b16 %v210, %v209
    %v217 = vpack.c.b16 %v212, %v211
    %v218 = vpack.c.b16 %v213, %v213
    %vm219 = vcmask 23552
    %v221 = vsel %vm219, %v214, 0
    %v224 = vsel %vm219, %v215, 0
    %v227 = vsel %vm219, %v216, 0
    %v230 = vsel %vm219, %v217, 0
    %v233 = vsel %vm219, %v218, 0
    %vm235 = vcmask 1040384
    %vm236 = vcmask 1041408
    %v237 = vsel %vm235, 4294967295, 65535
    %v238 = vsel %vm236, %v237, 0
    %v240 = vand.u32 %v195, %v238
    %242 = vmatprep.subr.bf16.mxu0 0
    %243 = vmatpush1.bf16.msra.mxu0 %v240
    %244 = vmatprep.subr.bf16.mxu0 0
    %245 = vmatpush1.bf16.msra.mxu0 0
    %246 = vmatprep.subr.bf16.mxu0 0
    %247 = vmatpush1.bf16.msra.mxu0 0
    %248 = vmatprep.subr.bf16.mxu0 0
    %249 = vmatpush1.bf16.msra.mxu0 0
    %250 = vmatprep.subr.bf16.mxu0 0
    %251 = vmatpush1.bf16.msra.mxu0 0
    %252 = vmatprep.subr.bf16.mxu0 0
    %253 = vmatpush1.bf16.msra.mxu0 0
    %254 = vmatprep.subr.bf16.mxu0 0
    %255 = vmatpush1.bf16.msra.mxu0 0
    %256 = vmatprep.subr.bf16.mxu0 0
    %257 = vmatpush1.bf16.msra.mxu0 0
    %258 = vmatprep.subr.bf16.mxu0 0
    %259 = vmatpush1.bf16.msra.mxu0 0
    %260 = vmatprep.subr.bf16.mxu0 0
    %261 = vmatpush1.bf16.msra.mxu0 0
    %262 = vmatprep.subr.bf16.mxu0 0
    %263 = vmatpush1.bf16.msra.mxu0 0
    %264 = vmatprep.subr.bf16.mxu0 0
    %265 = vmatpush1.bf16.msra.mxu0 0
    %266 = vmatprep.subr.bf16.mxu0 0
    %267 = vmatpush1.bf16.msra.mxu0 0
    %268 = vmatprep.subr.bf16.mxu0 0
    %269 = vmatpush1.bf16.msra.mxu0 0
    %270 = vmatprep.subr.bf16.mxu0 0
    %271 = vmatpush1.bf16.msra.mxu0 0
    %272 = vmatprep.subr.bf16.mxu0 0
    %273 = vmatpush1.bf16.msra.mxu0 0
    %274 = vmatprep.mubr.bf16.mxu0 0
    %275 = vmatmul.mubr.bf16.gmra.mrb[0].mxu0 %v221
    %v276 = vpop.f32.mrb[0].mxu0
    %v277 = vadd.f32 0.0, %v276
    %v278 = vpop.f32.mrb[0].mxu0
    %v279 = vpop.f32.mrb[0].mxu0
    %v280 = vadd.f32 0.0, %v279
    %v281 = vpop.f32.mrb[0].mxu0
    %282 = vmatprep.mubr.bf16.mxu0 0
    %283 = vmatmul.mubr.bf16.gmra.mrb[0].mxu0 %v224
    %v284 = vpop.f32.mrb[0].mxu0
    %v285 = vadd.f32 0.0, %v284
    %v286 = vpop.f32.mrb[0].mxu0
    %v287 = vpop.f32.mrb[0].mxu0
    %v288 = vadd.f32 0.0, %v287
    %v289 = vpop.f32.mrb[0].mxu0
    %290 = vmatprep.mubr.bf16.mxu0 0
    %291 = vmatmul.mubr.bf16.gmra.mrb[0].mxu0 %v227
    %v292 = vpop.f32.mrb[0].mxu0
    %v293 = vadd.f32 0.0, %v292
    %v294 = vpop.f32.mrb[0].mxu0
    %v295 = vpop.f32.mrb[0].mxu0
    %v296 = vadd.f32 0.0, %v295
    %v297 = vpop.f32.mrb[0].mxu0
    %298 = vmatprep.mubr.bf16.mxu0 0
    %299 = vmatmul.mubr.bf16.gmra.mrb[0].mxu0 %v230
    %v300 = vpop.f32.mrb[0].mxu0
    %v301 = vadd.f32 0.0, %v300
    %v302 = vpop.f32.mrb[0].mxu0
    %v303 = vpop.f32.mrb[0].mxu0
    %v304 = vadd.f32 0.0, %v303
    %v305 = vpop.f32.mrb[0].mxu0
    %306 = vmatprep.mubr.bf16.mxu0 0
    %307 = vmatmul.mubr.bf16.gmra.mrb[0].mxu0 %v233
    %v308 = vpop.f32.mrb[0].mxu0
    %v309 = vadd.f32 0.0, %v308
    %v310 = vpop.f32.mrb[0].mxu0
    %v311 = vpop.f32.mrb[0].mxu0
    %v312 = vpop.f32.mrb[0].mxu0
    %313 = vdwg.mxu0
    %v314 = vmax.f32 %v277, 0.0
    %v315 = vmax.f32 %v280, 0.0
    %v316 = vmax.f32 %v285, 0.0
    %v317 = vmax.f32 %v288, 0.0
    %v318 = vmax.f32 %v293, 0.0
    %v319 = vmax.f32 %v296, 0.0
    %v320 = vmax.f32 %v301, 0.0
    %v321 = vmax.f32 %v304, 0.0
    %v322 = vmax.f32 %v309, 0.0
    %v323 = vpack.c.bf16 %v315, %v314
    %v324 = vpack.c.bf16 %v317, %v316
    %v325 = vpack.c.bf16 %v319, %v318
    %v326 = vpack.c.bf16 %v321, %v320
    %v327 = vpack.c.bf16 %v322, %v322
    %v328 = vld [vmem:[#allocation4] sm:$0xf]
    %v329 = vld [vmem:[#allocation4 + $0x4] sm:$0xf]
    %v330 = vld [vmem:[#allocation4 + $0x8] sm:$0xf]
    %v331 = vld [vmem:[#allocation4 + $0xc] sm:$0xf]
    %v336 = vunpack.c.l.b16 %v328
    %v337 = vunpack.c.l.b16 %v329
    %v338 = vunpack.c.l.b16 %v330
    %v339 = vunpack.c.l.b16 %v331
    %v340 = vpack.c.b16 %v337, %v336
    %v341 = vpack.c.b16 %v339, %v338
    %vm344 = vcmask 261120
    %v346 = vsel %vm344, %v323, 0
    %v349 = vsel %vm344, %v324, 0
    %v352 = vsel %vm344, %v325, 0
    %v355 = vsel %vm344, %v326, 0
    %v358 = vsel %vm344, %v327, 0
    %360 = vmatprep.subr.bf16.mxu0 0
    %361 = vmatpush1.bf16.msra.mxu0 %v340
    %362 = vmatprep.subr.bf16.mxu0 0
    %363 = vmatpush1.bf16.msra.mxu0 %v341
    %364 = vmatprep.subr.bf16.mxu0 0
    %365 = vmatpush1.bf16.msra.mxu0 0
    %366 = vmatprep.subr.bf16.mxu0 0
    %367 = vmatpush1.bf16.msra.mxu0 0
    %368 = vmatprep.subr.bf16.mxu0 0
    %369 = vmatpush1.bf16.msra.mxu0 0
    %370 = vmatprep.subr.bf16.mxu0 0
    %371 = vmatpush1.bf16.msra.mxu0 0
    %372 = vmatprep.subr.bf16.mxu0 0
    %373 = vmatpush1.bf16.msra.mxu0 0
    %374 = vmatprep.subr.bf16.mxu0 0
    %375 = vmatpush1.bf16.msra.mxu0 0
    %376 = vmatprep.subr.bf16.mxu0 0
    %377 = vmatpush1.bf16.msra.mxu0 0
    %378 = vmatprep.subr.bf16.mxu0 0
    %379 = vmatpush1.bf16.msra.mxu0 0
    %380 = vmatprep.subr.bf16.mxu0 0
    %381 = vmatpush1.bf16.msra.mxu0 0
    %382 = vmatprep.subr.bf16.mxu0 0
    %383 = vmatpush1.bf16.msra.mxu0 0
    %384 = vmatprep.subr.bf16.mxu0 0
    %385 = vmatpush1.bf16.msra.mxu0 0
    %386 = vmatprep.subr.bf16.mxu0 0
    %387 = vmatpush1.bf16.msra.mxu0 0
    %388 = vmatprep.subr.bf16.mxu0 0
    %389 = vmatpush1.bf16.msra.mxu0 0
    %390 = vmatprep.subr.bf16.mxu0 0
    %391 = vmatpush1.bf16.msra.mxu0 0
    %392 = vmatprep.mubr.bf16.mxu0 0
    %393 = vmatmul.mubr.bf16.gmra.mrb[0].mxu0 %v346
    %v394 = vpop.f32.mrb[0].mxu0
    %v395 = vadd.f32 0.0, %v394
    %v396 = vpop.f32.mrb[0].mxu0
    %v397 = vpop.f32.mrb[0].mxu0
    %v398 = vadd.f32 0.0, %v397
    %v399 = vpop.f32.mrb[0].mxu0
    %400 = vmatprep.mubr.bf16.mxu0 0
    %401 = vmatmul.mubr.bf16.gmra.mrb[0].mxu0 %v349
    %v402 = vpop.f32.mrb[0].mxu0
    %v403 = vadd.f32 0.0, %v402
    %v404 = vpop.f32.mrb[0].mxu0
    %v405 = vpop.f32.mrb[0].mxu0
    %v406 = vadd.f32 0.0, %v405
    %v407 = vpop.f32.mrb[0].mxu0
    %408 = vmatprep.mubr.bf16.mxu0 0
    %409 = vmatmul.mubr.bf16.gmra.mrb[0].mxu0 %v352
    %v410 = vpop.f32.mrb[0].mxu0
    %v411 = vadd.f32 0.0, %v410
    %v412 = vpop.f32.mrb[0].mxu0
    %v413 = vpop.f32.mrb[0].mxu0
    %v414 = vadd.f32 0.0, %v413
    %v415 = vpop.f32.mrb[0].mxu0
    %416 = vmatprep.mubr.bf16.mxu0 0
    %417 = vmatmul.mubr.bf16.gmra.mrb[0].mxu0 %v355
    %v418 = vpop.f32.mrb[0].mxu0
    %v419 = vadd.f32 0.0, %v418
    %v420 = vpop.f32.mrb[0].mxu0
    %v421 = vpop.f32.mrb[0].mxu0
    %v422 = vadd.f32 0.0, %v421
    %v423 = vpop.f32.mrb[0].mxu0
    %424 = vmatprep.mubr.bf16.mxu0 0
    %425 = vmatmul.mubr.bf16.gmra.mrb[0].mxu0 %v358
    %v426 = vpop.f32.mrb[0].mxu0
    %v427 = vadd.f32 0.0, %v426
    %v428 = vpop.f32.mrb[0].mxu0
    %v429 = vpop.f32.mrb[0].mxu0
    %v430 = vpop.f32.mrb[0].mxu0
    %431 = vdwg.mxu0
    %v432 = vpack.c.bf16 %v398, %v395
    %v433 = vpack.c.bf16 %v406, %v403
    %v434 = vpack.c.bf16 %v414, %v411
    %v435 = vpack.c.bf16 %v422, %v419
    %v436 = vpack.c.bf16 %v427, %v427
    %v437 = vlaneseq
    %v438 = vand.u32 %v437, 127
    %v439 = vld [vmem:[#allocation6] sm:$0xf]
    %v440 = vld [vmem:[#allocation6 + $0x4] sm:$0xf]
    %v441 = vld [vmem:[#allocation6 + $0x8] sm:$0xf]
    %v442 = vld [vmem:[#allocation6 + $0xc] sm:$0xf]
    %v443 = vld [vmem:[#allocation6 + $0x10] sm:$0xf]
    %v444 = vld [vmem:[#allocation6 + $0x14] sm:$0xf]
    %v445 = vld [vmem:[#allocation6 + $0x18] sm:$0xf]
    %v446 = vld [vmem:[#allocation6 + $0x1c] sm:$0xf]
    %v447 = vld [vmem:[#allocation6 + $0x20] sm:$0xf]
    %v457 = vunpack.c.l.b16 %v439
    %v458 = vunpack.c.l.b16 %v440
    %v459 = vunpack.c.l.b16 %v441
    %v460 = vunpack.c.l.b16 %v442
    %v461 = vunpack.c.l.b16 %v443
    %v462 = vunpack.c.l.b16 %v444
    %v463 = vunpack.c.l.b16 %v445
    %v464 = vunpack.c.l.b16 %v446
    %v465 = vunpack.c.l.b16 %v447
    %v466 = vpack.c.b16 %v458, %v457
    %v467 = vpack.c.b16 %v460, %v459
    %v468 = vpack.c.b16 %v462, %v461
    %v469 = vpack.c.b16 %v464, %v463
    %v470 = vpack.c.b16 %v465, %v465
    %vm471 = vcmask 588800
    %v473 = vsel %vm471, %v466, 0
    %v476 = vsel %vm471, %v467, 0
    %v479 = vsel %vm471, %v468, 0
    %v482 = vsel %vm471, %v469, 0
    %v485 = vsel %vm471, %v470, 0
    %vm487 = vcmask 1043456
    %v489 = vsel %vm487, %v436, 0
    %491 = vmatprep.subr.bf16.mxu0 0
    %492 = vmatpush1.bf16.msra.mxu0 %v432
    %493 = vmatprep.subr.bf16.mxu0 0
    %494 = vmatpush1.bf16.msra.mxu0 %v433
    %495 = vmatprep.subr.bf16.mxu0 0
    %496 = vmatpush1.bf16.msra.mxu0 %v434
    %497 = vmatprep.subr.bf16.mxu0 0
    %498 = vmatpush1.bf16.msra.mxu0 %v435
    %499 = vmatprep.subr.bf16.mxu0 0
    %500 = vmatpush1.bf16.msra.mxu0 %v489
    %501 = vmatprep.subr.bf16.mxu0 0
    %502 = vmatpush1.bf16.msra.mxu0 0
    %503 = vmatprep.subr.bf16.mxu0 0
    %504 = vmatpush1.bf16.msra.mxu0 0
    %505 = vmatprep.subr.bf16.mxu0 0
    %506 = vmatpush1.bf16.msra.mxu0 0
    %507 = vmatprep.subr.bf16.mxu0 0
    %508 = vmatpush1.bf16.msra.mxu0 0
    %509 = vmatprep.subr.bf16.mxu0 0
    %510 = vmatpush1.bf16.msra.mxu0 0
    %511 = vmatprep.subr.bf16.mxu0 0
    %512 = vmatpush1.bf16.msra.mxu0 0
    %513 = vmatprep.subr.bf16.mxu0 0
    %514 = vmatpush1.bf16.msra.mxu0 0
    %515 = vmatprep.subr.bf16.mxu0 0
    %516 = vmatpush1.bf16.msra.mxu0 0
    %517 = vmatprep.subr.bf16.mxu0 0
    %518 = vmatpush1.bf16.msra.mxu0 0
    %519 = vmatprep.subr.bf16.mxu0 0
    %520 = vmatpush1.bf16.msra.mxu0 0
    %521 = vmatprep.subr.bf16.mxu0 0
    %522 = vmatpush1.bf16.msra.mxu0 0
    %523 = vmatprep.mubr.bf16.mxu0 0
    %524 = vmatmul.mubr.bf16.gmra.mrb[0].mxu0 %v473
    %v525 = vpop.f32.mrb[0].mxu0
    %v526 = vadd.f32 0.0, %v525
    %v527 = vpop.f32.mrb[0].mxu0
    %v528 = vpop.f32.mrb[0].mxu0
    %v529 = vadd.f32 0.0, %v528
    %v530 = vpop.f32.mrb[0].mxu0
    %531 = vmatprep.mubr.bf16.mxu0 0
    %532 = vmatmul.mubr.bf16.gmra.mrb[0].mxu0 %v476
    %v533 = vpop.f32.mrb[0].mxu0
    %v534 = vadd.f32 0.0, %v533
    %v535 = vpop.f32.mrb[0].mxu0
    %v536 = vpop.f32.mrb[0].mxu0
    %v537 = vadd.f32 0.0, %v536
    %v538 = vpop.f32.mrb[0].mxu0
    %539 = vmatprep.mubr.bf16.mxu0 0
    %540 = vmatmul.mubr.bf16.gmra.mrb[0].mxu0 %v479
    %v541 = vpop.f32.mrb[0].mxu0
    %v542 = vadd.f32 0.0, %v541
    %v543 = vpop.f32.mrb[0].mxu0
    %v544 = vpop.f32.mrb[0].mxu0
    %v545 = vadd.f32 0.0, %v544
    %v546 = vpop.f32.mrb[0].mxu0
    %547 = vmatprep.mubr.bf16.mxu0 0
    %548 = vmatmul.mubr.bf16.gmra.mrb[0].mxu0 %v482
    %v549 = vpop.f32.mrb[0].mxu0
    %v550 = vadd.f32 0.0, %v549
    %v551 = vpop.f32.mrb[0].mxu0
    %v552 = vpop.f32.mrb[0].mxu0
    %v553 = vadd.f32 0.0, %v552
    %v554 = vpop.f32.mrb[0].mxu0
    %555 = vmatprep.mubr.bf16.mxu0 0
    %556 = vmatmul.mubr.bf16.gmra.mrb[0].mxu0 %v485
    %v557 = vpop.f32.mrb[0].mxu0
    %v558 = vadd.f32 0.0, %v557
    %v559 = vpop.f32.mrb[0].mxu0
    %v560 = vpop.f32.mrb[0].mxu0
    %v561 = vpop.f32.mrb[0].mxu0
    %562 = vdwg.mxu0
    %v563 = vsel %vm344, %v526, 0.0
    %v564 = vsel %vm344, %v529, 0.0
    %v565 = vadd.f32 %v563, %v564
    %v566 = vsel %vm344, %v534, 0.0
    %v567 = vadd.f32 %v565, %v566
    %v568 = vsel %vm344, %v537, 0.0
    %v569 = vadd.f32 %v567, %v568
    %v570 = vsel %vm344, %v542, 0.0
    %v571 = vadd.f32 %v569, %v570
    %v572 = vsel %vm344, %v545, 0.0
    %v573 = vadd.f32 %v571, %v572
    %v574 = vsel %vm344, %v550, 0.0
    %v575 = vadd.f32 %v573, %v574
    %v576 = vsel %vm344, %v553, 0.0
    %v577 = vadd.f32 %v575, %v576
    %v578 = vsel %vm344, %v558, 0.0
    %v579 = vadd.f32 %v577, %v578
    %v580 = vrot.slane %v579, 4
    %v581 = vadd.f32 %v579, %v580
    %v582 = vrot.slane %v581, 2
    %v583 = vadd.f32 %v581, %v582
    %v584 = vrot.slane %v583, 1
    %v585 = vadd.f32 %v583, %v584
    %v586 = vrcp.pop 2.0
    %v587 = vmul.f32 %v585, %v586
    %v588 = vmul.f32 %v526, %v526
    %v589 = vmul.f32 %v529, %v529
    %v590 = vmul.f32 %v534, %v534
    %v591 = vmul.f32 %v537, %v537
    %v592 = vmul.f32 %v542, %v542
    %v593 = vmul.f32 %v545, %v545
    %v594 = vmul.f32 %v550, %v550
    %v595 = vmul.f32 %v553, %v553
    %v596 = vmul.f32 %v558, %v558
    %v597 = vsel %vm344, %v588, 0.0
    %v598 = vsel %vm344, %v589, 0.0
    %v599 = vadd.f32 %v597, %v598
    %v600 = vsel %vm344, %v590, 0.0
    %v601 = vadd.f32 %v599, %v600
    %v602 = vsel %vm344, %v591, 0.0
    %v603 = vadd.f32 %v601, %v602
    %v604 = vsel %vm344, %v592, 0.0
    %v605 = vadd.f32 %v603, %v604
    %v606 = vsel %vm344, %v593, 0.0
    %v607 = vadd.f32 %v605, %v606
    %v608 = vsel %vm344, %v594, 0.0
    %v609 = vadd.f32 %v607, %v608
    %v610 = vsel %vm344, %v595, 0.0
    %v611 = vadd.f32 %v609, %v610
    %v612 = vsel %vm344, %v596, 0.0
    %v613 = vadd.f32 %v611, %v612
    %v614 = vrot.slane %v613, 4
    %v615 = vadd.f32 %v613, %v614
    %v616 = vrot.slane %v615, 2
    %v617 = vadd.f32 %v615, %v616
    %v618 = vrot.slane %v617, 1
    %v619 = vadd.f32 %v617, %v618
    %v620 = vmul.f32 %v619, %v586
    %v621 = vmul.f32 %v587, %v587
    %v622 = vsub.f32 %v620, %v621
    %v623 = vsub.f32 %v526, %v587
    %v624 = vsub.f32 %v529, %v587
    %v625 = vsub.f32 %v534, %v587
    %v626 = vsub.f32 %v537, %v587
    %v627 = vsub.f32 %v542, %v587
    %v628 = vsub.f32 %v545, %v587
    %v629 = vsub.f32 %v550, %v587
    %v630 = vsub.f32 %v553, %v587
    %v631 = vsub.f32 %v558, %v587
    %v632 = vmax.f32 %v622, 0.0
    %v633 = vadd.f32 %v632, 1e-05
    %v634 = vrsqrt.pop %v633
    %v635 = vmul.f32 %v623, %v634
    %v636 = vmul.f32 %v624, %v634
    %v637 = vmul.f32 %v625, %v634
    %v638 = vmul.f32 %v626, %v634
    %v639 = vmul.f32 %v627, %v634
    %v640 = vmul.f32 %v628, %v634
    %v641 = vmul.f32 %v629, %v634
    %v642 = vmul.f32 %v630, %v634
    %v643 = vmul.f32 %v631, %v634
    %v644 = vmax.f32 %v635, 0.0
    %v645 = vmax.f32 %v636, 0.0
    %v646 = vmax.f32 %v637, 0.0
    %v647 = vmax.f32 %v638, 0.0
    %v648 = vmax.f32 %v639, 0.0
    %v649 = vmax.f32 %v640, 0.0
    %v650 = vmax.f32 %v641, 0.0
    %v651 = vmax.f32 %v642, 0.0
    %v652 = vmax.f32 %v643, 0.0
    %v653 = vld [vmem:[#allocation7] sm:$0xf]
    %v654 = vld [vmem:[#allocation7 + $0x4] sm:$0xf]
    %v655 = vld [vmem:[#allocation7 + $0x8] sm:$0xf]
    %v656 = vld [vmem:[#allocation7 + $0xc] sm:$0xf]
    %v657 = vld [vmem:[#allocation7 + $0x10] sm:$0xf]
    %v658 = vld [vmem:[#allocation7 + $0x14] sm:$0xf]
    %v659 = vld [vmem:[#allocation7 + $0x18] sm:$0xf]
    %v660 = vld [vmem:[#allocation7 + $0x1c] sm:$0xf]
    %v661 = vld [vmem:[#allocation7 + $0x20] sm:$0xf]
    %v662 = vpack.c.bf16 %v645, %v644
    %v663 = vpack.c.bf16 %v647, %v646
    %v664 = vpack.c.bf16 %v649, %v648
    %v665 = vpack.c.bf16 %v651, %v650
    %v666 = vpack.c.bf16 %v652, %v652
    %v676 = vunpack.c.l.b16 %v653
    %v677 = vunpack.c.l.b16 %v654
    %v678 = vunpack.c.l.b16 %v655
    %v679 = vunpack.c.l.b16 %v656
    %v680 = vunpack.c.l.b16 %v657
    %v681 = vunpack.c.l.b16 %v658
    %v682 = vunpack.c.l.b16 %v659
    %v683 = vunpack.c.l.b16 %v660
    %v684 = vunpack.c.l.b16 %v661
    %v685 = vpack.c.b16 %v677, %v676
    %v686 = vpack.c.b16 %v679, %v678
    %v687 = vpack.c.b16 %v681, %v680
    %v688 = vpack.c.b16 %v683, %v682
    %v689 = vpack.c.b16 %v684, %v684
    %v691 = vsel %vm471, %v685, 0
    %v694 = vsel %vm471, %v686, 0
    %v697 = vsel %vm471, %v687, 0
    %v700 = vsel %vm471, %v688, 0
    %v703 = vsel %vm471, %v689, 0
    %v706 = vsel %vm487, %v666, 0
    %708 = vmatprep.subr.bf16.mxu0 0
    %709 = vmatpush1.bf16.msra.mxu0 %v662
    %710 = vmatprep.subr.bf16.mxu0 0
    %711 = vmatpush1.bf16.msra.mxu0 %v663
    %712 = vmatprep.subr.bf16.mxu0 0
    %713 = vmatpush1.bf16.msra.mxu0 %v664
    %714 = vmatprep.subr.bf16.mxu0 0
    %715 = vmatpush1.bf16.msra.mxu0 %v665
    %716 = vmatprep.subr.bf16.mxu0 0
    %717 = vmatpush1.bf16.msra.mxu0 %v706
    %718 = vmatprep.subr.bf16.mxu0 0
    %719 = vmatpush1.bf16.msra.mxu0 0
    %720 = vmatprep.subr.bf16.mxu0 0
    %721 = vmatpush1.bf16.msra.mxu0 0
    %722 = vmatprep.subr.bf16.mxu0 0
    %723 = vmatpush1.bf16.msra.mxu0 0
    %724 = vmatprep.subr.bf16.mxu0 0
    %725 = vmatpush1.bf16.msra.mxu0 0
    %726 = vmatprep.subr.bf16.mxu0 0
    %727 = vmatpush1.bf16.msra.mxu0 0
    %728 = vmatprep.subr.bf16.mxu0 0
    %729 = vmatpush1.bf16.msra.mxu0 0
    %730 = vmatprep.subr.bf16.mxu0 0
    %731 = vmatpush1.bf16.msra.mxu0 0
    %732 = vmatprep.subr.bf16.mxu0 0
    %733 = vmatpush1.bf16.msra.mxu0 0
    %734 = vmatprep.subr.bf16.mxu0 0
    %735 = vmatpush1.bf16.msra.mxu0 0
    %736 = vmatprep.subr.bf16.mxu0 0
    %737 = vmatpush1.bf16.msra.mxu0 0
    %738 = vmatprep.subr.bf16.mxu0 0
    %739 = vmatpush1.bf16.msra.mxu0 0
    %740 = vmatprep.mubr.bf16.mxu0 0
    %741 = vmatmul.mubr.bf16.gmra.mrb[0].mxu0 %v691
    %v742 = vpop.f32.mrb[0].mxu0
    %v743 = vadd.f32 0.0, %v742
    %v744 = vpop.f32.mrb[0].mxu0
    %v745 = vpop.f32.mrb[0].mxu0
    %v746 = vadd.f32 0.0, %v745
    %v747 = vpop.f32.mrb[0].mxu0
    %748 = vmatprep.mubr.bf16.mxu0 0
    %749 = vmatmul.mubr.bf16.gmra.mrb[0].mxu0 %v694
    %v750 = vpop.f32.mrb[0].mxu0
    %v751 = vadd.f32 0.0, %v750
    %v752 = vpop.f32.mrb[0].mxu0
    %v753 = vpop.f32.mrb[0].mxu0
    %v754 = vadd.f32 0.0, %v753
    %v755 = vpop.f32.mrb[0].mxu0
    %756 = vmatprep.mubr.bf16.mxu0 0
    %757 = vmatmul.mubr.bf16.gmra.mrb[0].mxu0 %v697
    %v758 = vpop.f32.mrb[0].mxu0
    %v759 = vadd.f32 0.0, %v758
    %v760 = vpop.f32.mrb[0].mxu0
    %v761 = vpop.f32.mrb[0].mxu0
    %v762 = vadd.f32 0.0, %v761
    %v763 = vpop.f32.mrb[0].mxu0
    %764 = vmatprep.mubr.bf16.mxu0 0
    %765 = vmatmul.mubr.bf16.gmra.mrb[0].mxu0 %v700
    %v766 = vpop.f32.mrb[0].mxu0
    %v767 = vadd.f32 0.0, %v766
    %v768 = vpop.f32.mrb[0].mxu0
    %v769 = vpop.f32.mrb[0].mxu0
    %v770 = vadd.f32 0.0, %v769
    %v771 = vpop.f32.mrb[0].mxu0
    %772 = vmatprep.mubr.bf16.mxu0 0
    %773 = vmatmul.mubr.bf16.gmra.mrb[0].mxu0 %v703
    %v774 = vpop.f32.mrb[0].mxu0
    %v775 = vadd.f32 0.0, %v774
    %v776 = vpop.f32.mrb[0].mxu0
    %v777 = vpop.f32.mrb[0].mxu0
    %v778 = vpop.f32.mrb[0].mxu0
    %779 = vdwg.mxu0
    %vm780 = vcmp.ge.s32.totalorder %v438, 0
    %vm781 = vcmp.lt.s32.totalorder %v438, 8
    %vm782 = vmand %vm780, %vm781
    %v783 = vsel %vm782, %v743, 0.0
    %v784 = vsel %vm782, %v746, 0.0
    %v785 = vsel %vm782, %v751, 0.0
    %v786 = vsel %vm782, %v754, 0.0
    %v787 = vsel %vm782, %v759, 0.0
    %v788 = vsel %vm782, %v762, 0.0
    %v789 = vsel %vm782, %v767, 0.0
    %v790 = vsel %vm782, %v770, 0.0
    %v791 = vsel %vm782, %v775, 0.0
    %v792 = vadd.f32 %v783, 0.0
    %v793 = vadd.f32 %v784, 0.0
    %v794 = vadd.f32 %v785, 0.0
    %v795 = vadd.f32 %v786, 0.0
    %v796 = vadd.f32 %v787, 0.0
    %v797 = vadd.f32 %v788, 0.0
    %v798 = vadd.f32 %v789, 0.0
    %v799 = vadd.f32 %v790, 0.0
    %v800 = vadd.f32 %v791, 0.0
    %s801 = scalar_lea.vmem [#allocation6], 36
    %v802 = vld [vmem:[%s801] sm:$0xf]
    %v803 = vld [vmem:[%s801 + $0x4] sm:$0xf]
    %v804 = vld [vmem:[%s801 + $0x8] sm:$0xf]
    %v805 = vld [vmem:[%s801 + $0xc] sm:$0xf]
    %v806 = vld [vmem:[%s801 + $0x10] sm:$0xf]
    %v807 = vld [vmem:[%s801 + $0x14] sm:$0xf]
    %v808 = vld [vmem:[%s801 + $0x18] sm:$0xf]
    %v809 = vld [vmem:[%s801 + $0x1c] sm:$0xf]
    %v810 = vld [vmem:[%s801 + $0x20] sm:$0xf]
    %v820 = vunpack.c.l.b16 %v802
    %v821 = vunpack.c.l.b16 %v803
    %v822 = vunpack.c.l.b16 %v804
    %v823 = vunpack.c.l.b16 %v805
    %v824 = vunpack.c.l.b16 %v806
    %v825 = vunpack.c.l.b16 %v807
    %v826 = vunpack.c.l.b16 %v808
    %v827 = vunpack.c.l.b16 %v809
    %v828 = vunpack.c.l.b16 %v810
    %v829 = vpack.c.b16 %v821, %v820
    %v830 = vpack.c.b16 %v823, %v822
    %v831 = vpack.c.b16 %v825, %v824
    %v832 = vpack.c.b16 %v827, %v826
    %v833 = vpack.c.b16 %v828, %v828
    %v835 = vsel %vm471, %v829, 0
    %v838 = vsel %vm471, %v830, 0
    %v841 = vsel %vm471, %v831, 0
    %v844 = vsel %vm471, %v832, 0
    %v847 = vsel %vm471, %v833, 0
    %849 = vmatprep.subr.bf16.mxu0 0
    %850 = vmatpush1.bf16.msra.mxu0 %v432
    %851 = vmatprep.subr.bf16.mxu0 0
    %852 = vmatpush1.bf16.msra.mxu0 %v433
    %853 = vmatprep.subr.bf16.mxu0 0
    %854 = vmatpush1.bf16.msra.mxu0 %v434
    %855 = vmatprep.subr.bf16.mxu0 0
    %856 = vmatpush1.bf16.msra.mxu0 %v435
    %857 = vmatprep.subr.bf16.mxu0 0
    %858 = vmatpush1.bf16.msra.mxu0 %v489
    %859 = vmatprep.subr.bf16.mxu0 0
    %860 = vmatpush1.bf16.msra.mxu0 0
    %861 = vmatprep.subr.bf16.mxu0 0
    %862 = vmatpush1.bf16.msra.mxu0 0
    %863 = vmatprep.subr.bf16.mxu0 0
    %864 = vmatpush1.bf16.msra.mxu0 0
    %865 = vmatprep.subr.bf16.mxu0 0
    %866 = vmatpush1.bf16.msra.mxu0 0
    %867 = vmatprep.subr.bf16.mxu0 0
    %868 = vmatpush1.bf16.msra.mxu0 0
    %869 = vmatprep.subr.bf16.mxu0 0
    %870 = vmatpush1.bf16.msra.mxu0 0
    %871 = vmatprep.subr.bf16.mxu0 0
    %872 = vmatpush1.bf16.msra.mxu0 0
    %873 = vmatprep.subr.bf16.mxu0 0
    %874 = vmatpush1.bf16.msra.mxu0 0
    %875 = vmatprep.subr.bf16.mxu0 0
    %876 = vmatpush1.bf16.msra.mxu0 0
    %877 = vmatprep.subr.bf16.mxu0 0
    %878 = vmatpush1.bf16.msra.mxu0 0
    %879 = vmatprep.subr.bf16.mxu0 0
    %880 = vmatpush1.bf16.msra.mxu0 0
    %881 = vmatprep.mubr.bf16.mxu0 0
    %882 = vmatmul.mubr.bf16.gmra.mrb[0].mxu0 %v835
    %v883 = vpop.f32.mrb[0].mxu0
    %v884 = vadd.f32 0.0, %v883
    %v885 = vpop.f32.mrb[0].mxu0
    %v886 = vpop.f32.mrb[0].mxu0
    %v887 = vadd.f32 0.0, %v886
    %v888 = vpop.f32.mrb[0].mxu0
    %889 = vmatprep.mubr.bf16.mxu0 0
    %890 = vmatmul.mubr.bf16.gmra.mrb[0].mxu0 %v838
    %v891 = vpop.f32.mrb[0].mxu0
    %v892 = vadd.f32 0.0, %v891
    %v893 = vpop.f32.mrb[0].mxu0
    %v894 = vpop.f32.mrb[0].mxu0
    %v895 = vadd.f32 0.0, %v894
    %v896 = vpop.f32.mrb[0].mxu0
    %897 = vmatprep.mubr.bf16.mxu0 0
    %898 = vmatmul.mubr.bf16.gmra.mrb[0].mxu0 %v841
    %v899 = vpop.f32.mrb[0].mxu0
    %v900 = vadd.f32 0.0, %v899
    %v901 = vpop.f32.mrb[0].mxu0
    %v902 = vpop.f32.mrb[0].mxu0
    %v903 = vadd.f32 0.0, %v902
    %v904 = vpop.f32.mrb[0].mxu0
    %905 = vmatprep.mubr.bf16.mxu0 0
    %906 = vmatmul.mubr.bf16.gmra.mrb[0].mxu0 %v844
    %v907 = vpop.f32.mrb[0].mxu0
    %v908 = vadd.f32 0.0, %v907
    %v909 = vpop.f32.mrb[0].mxu0
    %v910 = vpop.f32.mrb[0].mxu0
    %v911 = vadd.f32 0.0, %v910
    %v912 = vpop.f32.mrb[0].mxu0
    %913 = vmatprep.mubr.bf16.mxu0 0
    %914 = vmatmul.mubr.bf16.gmra.mrb[0].mxu0 %v847
    %v915 = vpop.f32.mrb[0].mxu0
    %v916 = vadd.f32 0.0, %v915
    %v917 = vpop.f32.mrb[0].mxu0
    %v918 = vpop.f32.mrb[0].mxu0
    %v919 = vpop.f32.mrb[0].mxu0
    %920 = vdwg.mxu0
    %v921 = vsel %vm344, %v884, 0.0
    %v922 = vsel %vm344, %v887, 0.0
    %v923 = vadd.f32 %v921, %v922
    %v924 = vsel %vm344, %v892, 0.0
    %v925 = vadd.f32 %v923, %v924
    %v926 = vsel %vm344, %v895, 0.0
    %v927 = vadd.f32 %v925, %v926
    %v928 = vsel %vm344, %v900, 0.0
    %v929 = vadd.f32 %v927, %v928
    %v930 = vsel %vm344, %v903, 0.0
    %v931 = vadd.f32 %v929, %v930
    %v932 = vsel %vm344, %v908, 0.0
    %v933 = vadd.f32 %v931, %v932
    %v934 = vsel %vm344, %v911, 0.0
    %v935 = vadd.f32 %v933, %v934
    %v936 = vsel %vm344, %v916, 0.0
    %v937 = vadd.f32 %v935, %v936
    %v938 = vrot.slane %v937, 4
    %v939 = vadd.f32 %v937, %v938
    %v940 = vrot.slane %v939, 2
    %v941 = vadd.f32 %v939, %v940
    %v942 = vrot.slane %v941, 1
    %v943 = vadd.f32 %v941, %v942
    %v944 = vrcp.pop 8.0
    %v945 = vmul.f32 %v943, %v944
    %v946 = vmul.f32 %v884, %v884
    %v947 = vmul.f32 %v887, %v887
    %v948 = vmul.f32 %v892, %v892
    %v949 = vmul.f32 %v895, %v895
    %v950 = vmul.f32 %v900, %v900
    %v951 = vmul.f32 %v903, %v903
    %v952 = vmul.f32 %v908, %v908
    %v953 = vmul.f32 %v911, %v911
    %v954 = vmul.f32 %v916, %v916
    %v955 = vsel %vm344, %v946, 0.0
    %v956 = vsel %vm344, %v947, 0.0
    %v957 = vadd.f32 %v955, %v956
    %v958 = vsel %vm344, %v948, 0.0
    %v959 = vadd.f32 %v957, %v958
    %v960 = vsel %vm344, %v949, 0.0
    %v961 = vadd.f32 %v959, %v960
    %v962 = vsel %vm344, %v950, 0.0
    %v963 = vadd.f32 %v961, %v962
    %v964 = vsel %vm344, %v951, 0.0
    %v965 = vadd.f32 %v963, %v964
    %v966 = vsel %vm344, %v952, 0.0
    %v967 = vadd.f32 %v965, %v966
    %v968 = vsel %vm344, %v953, 0.0
    %v969 = vadd.f32 %v967, %v968
    %v970 = vsel %vm344, %v954, 0.0
    %v971 = vadd.f32 %v969, %v970
    %v972 = vrot.slane %v971, 4
    %v973 = vadd.f32 %v971, %v972
    %v974 = vrot.slane %v973, 2
    %v975 = vadd.f32 %v973, %v974
    %v976 = vrot.slane %v975, 1
    %v977 = vadd.f32 %v975, %v976
    %v978 = vmul.f32 %v977, %v944
    %v979 = vmul.f32 %v945, %v945
    %v980 = vsub.f32 %v978, %v979
    %v981 = vsub.f32 %v884, %v945
    %v982 = vsub.f32 %v887, %v945
    %v983 = vsub.f32 %v892, %v945
    %v984 = vsub.f32 %v895, %v945
    %v985 = vsub.f32 %v900, %v945
    %v986 = vsub.f32 %v903, %v945
    %v987 = vsub.f32 %v908, %v945
    %v988 = vsub.f32 %v911, %v945
    %v989 = vsub.f32 %v916, %v945
    %v990 = vmax.f32 %v980, 0.0
    %v991 = vadd.f32 %v990, 1e-05
    %v992 = vrsqrt.pop %v991
    %v993 = vmul.f32 %v981, %v992
    %v994 = vmul.f32 %v982, %v992
    %v995 = vmul.f32 %v983, %v992
    %v996 = vmul.f32 %v984, %v992
    %v997 = vmul.f32 %v985, %v992
    %v998 = vmul.f32 %v986, %v992
    %v999 = vmul.f32 %v987, %v992
    %v1000 = vmul.f32 %v988, %v992
    %v1001 = vmul.f32 %v989, %v992
    %v1002 = vmax.f32 %v993, 0.0
    %v1003 = vmax.f32 %v994, 0.0
    %v1004 = vmax.f32 %v995, 0.0
    %v1005 = vmax.f32 %v996, 0.0
    %v1006 = vmax.f32 %v997, 0.0
    %v1007 = vmax.f32 %v998, 0.0
    %v1008 = vmax.f32 %v999, 0.0
    %v1009 = vmax.f32 %v1000, 0.0
    %v1010 = vmax.f32 %v1001, 0.0
    %s1011 = scalar_lea.vmem [#allocation7], 36
    %v1012 = vld [vmem:[%s1011] sm:$0xf]
    %v1013 = vld [vmem:[%s1011 + $0x4] sm:$0xf]
    %v1014 = vld [vmem:[%s1011 + $0x8] sm:$0xf]
    %v1015 = vld [vmem:[%s1011 + $0xc] sm:$0xf]
    %v1016 = vld [vmem:[%s1011 + $0x10] sm:$0xf]
    %v1017 = vld [vmem:[%s1011 + $0x14] sm:$0xf]
    %v1018 = vld [vmem:[%s1011 + $0x18] sm:$0xf]
    %v1019 = vld [vmem:[%s1011 + $0x1c] sm:$0xf]
    %v1020 = vld [vmem:[%s1011 + $0x20] sm:$0xf]
    %v1021 = vpack.c.bf16 %v1003, %v1002
    %v1022 = vpack.c.bf16 %v1005, %v1004
    %v1023 = vpack.c.bf16 %v1007, %v1006
    %v1024 = vpack.c.bf16 %v1009, %v1008
    %v1025 = vpack.c.bf16 %v1010, %v1010
    %v1035 = vunpack.c.l.b16 %v1012
    %v1036 = vunpack.c.l.b16 %v1013
    %v1037 = vunpack.c.l.b16 %v1014
    %v1038 = vunpack.c.l.b16 %v1015
    %v1039 = vunpack.c.l.b16 %v1016
    %v1040 = vunpack.c.l.b16 %v1017
    %v1041 = vunpack.c.l.b16 %v1018
    %v1042 = vunpack.c.l.b16 %v1019
    %v1043 = vunpack.c.l.b16 %v1020
    %v1044 = vpack.c.b16 %v1036, %v1035
    %v1045 = vpack.c.b16 %v1038, %v1037
    %v1046 = vpack.c.b16 %v1040, %v1039
    %v1047 = vpack.c.b16 %v1042, %v1041
    %v1048 = vpack.c.b16 %v1043, %v1043
    %v1050 = vsel %vm471, %v1044, 0
    %v1053 = vsel %vm471, %v1045, 0
    %v1056 = vsel %vm471, %v1046, 0
    %v1059 = vsel %vm471, %v1047, 0
    %v1062 = vsel %vm471, %v1048, 0
    %v1065 = vsel %vm487, %v1025, 0
    %1067 = vmatprep.subr.bf16.mxu0 0
    %1068 = vmatpush1.bf16.msra.mxu0 %v1021
    %1069 = vmatprep.subr.bf16.mxu0 0
    %1070 = vmatpush1.bf16.msra.mxu0 %v1022
    %1071 = vmatprep.subr.bf16.mxu0 0
    %1072 = vmatpush1.bf16.msra.mxu0 %v1023
    %1073 = vmatprep.subr.bf16.mxu0 0
    %1074 = vmatpush1.bf16.msra.mxu0 %v1024
    %1075 = vmatprep.subr.bf16.mxu0 0
    %1076 = vmatpush1.bf16.msra.mxu0 %v1065
    %1077 = vmatprep.subr.bf16.mxu0 0
    %1078 = vmatpush1.bf16.msra.mxu0 0
    %1079 = vmatprep.subr.bf16.mxu0 0
    %1080 = vmatpush1.bf16.msra.mxu0 0
    %1081 = vmatprep.subr.bf16.mxu0 0
    %1082 = vmatpush1.bf16.msra.mxu0 0
    %1083 = vmatprep.subr.bf16.mxu0 0
    %1084 = vmatpush1.bf16.msra.mxu0 0
    %1085 = vmatprep.subr.bf16.mxu0 0
    %1086 = vmatpush1.bf16.msra.mxu0 0
    %1087 = vmatprep.subr.bf16.mxu0 0
    %1088 = vmatpush1.bf16.msra.mxu0 0
    %1089 = vmatprep.subr.bf16.mxu0 0
    %1090 = vmatpush1.bf16.msra.mxu0 0
    %1091 = vmatprep.subr.bf16.mxu0 0
    %1092 = vmatpush1.bf16.msra.mxu0 0
    %1093 = vmatprep.subr.bf16.mxu0 0
    %1094 = vmatpush1.bf16.msra.mxu0 0
    %1095 = vmatprep.subr.bf16.mxu0 0
    %1096 = vmatpush1.bf16.msra.mxu0 0
    %1097 = vmatprep.subr.bf16.mxu0 0
    %1098 = vmatpush1.bf16.msra.mxu0 0
    %1099 = vmatprep.mubr.bf16.mxu0 0
    %1100 = vmatmul.mubr.bf16.gmra.mrb[0].mxu0 %v1050
    %v1101 = vpop.f32.mrb[0].mxu0
    %v1102 = vadd.f32 0.0, %v1101
    %v1103 = vpop.f32.mrb[0].mxu0
    %v1104 = vpop.f32.mrb[0].mxu0
    %v1105 = vadd.f32 0.0, %v1104
    %v1106 = vpop.f32.mrb[0].mxu0
    %1107 = vmatprep.mubr.bf16.mxu0 0
    %1108 = vmatmul.mubr.bf16.gmra.mrb[0].mxu0 %v1053
    %v1109 = vpop.f32.mrb[0].mxu0
    %v1110 = vadd.f32 0.0, %v1109
    %v1111 = vpop.f32.mrb[0].mxu0
    %v1112 = vpop.f32.mrb[0].mxu0
    %v1113 = vadd.f32 0.0, %v1112
    %v1114 = vpop.f32.mrb[0].mxu0
    %1115 = vmatprep.mubr.bf16.mxu0 0
    %1116 = vmatmul.mubr.bf16.gmra.mrb[0].mxu0 %v1056
    %v1117 = vpop.f32.mrb[0].mxu0
    %v1118 = vadd.f32 0.0, %v1117
    %v1119 = vpop.f32.mrb[0].mxu0
    %v1120 = vpop.f32.mrb[0].mxu0
    %v1121 = vadd.f32 0.0, %v1120
    %v1122 = vpop.f32.mrb[0].mxu0
    %1123 = vmatprep.mubr.bf16.mxu0 0
    %1124 = vmatmul.mubr.bf16.gmra.mrb[0].mxu0 %v1059
    %v1125 = vpop.f32.mrb[0].mxu0
    %v1126 = vadd.f32 0.0, %v1125
    %v1127 = vpop.f32.mrb[0].mxu0
    %v1128 = vpop.f32.mrb[0].mxu0
    %v1129 = vadd.f32 0.0, %v1128
    %v1130 = vpop.f32.mrb[0].mxu0
    %1131 = vmatprep.mubr.bf16.mxu0 0
    %1132 = vmatmul.mubr.bf16.gmra.mrb[0].mxu0 %v1062
    %v1133 = vpop.f32.mrb[0].mxu0
    %v1134 = vadd.f32 0.0, %v1133
    %v1135 = vpop.f32.mrb[0].mxu0
    %v1136 = vpop.f32.mrb[0].mxu0
    %v1137 = vpop.f32.mrb[0].mxu0
    %1138 = vdwg.mxu0
    %vm1139 = vcmp.ge.s32.totalorder %v438, 8
    %vm1140 = vcmp.lt.s32.totalorder %v438, 16
    %vm1141 = vmand %vm1139, %vm1140
    %v1142 = vsel %vm1141, %v1102, 0.0
    %v1143 = vsel %vm1141, %v1105, 0.0
    %v1144 = vsel %vm1141, %v1110, 0.0
    %v1145 = vsel %vm1141, %v1113, 0.0
    %v1146 = vsel %vm1141, %v1118, 0.0
    %v1147 = vsel %vm1141, %v1121, 0.0
    %v1148 = vsel %vm1141, %v1126, 0.0
    %v1149 = vsel %vm1141, %v1129, 0.0
    %v1150 = vsel %vm1141, %v1134, 0.0
    %v1151 = vadd.f32 %v792, %v1142
    %v1152 = vadd.f32 %v793, %v1143
    %v1153 = vadd.f32 %v794, %v1144
    %v1154 = vadd.f32 %v795, %v1145
    %v1155 = vadd.f32 %v796, %v1146
    %v1156 = vadd.f32 %v797, %v1147
    %v1157 = vadd.f32 %v798, %v1148
    %v1158 = vadd.f32 %v799, %v1149
    %v1159 = vadd.f32 %v800, %v1150
    %s1160 = scalar_lea.vmem [#allocation6], 72
    %v1161 = vld [vmem:[%s1160] sm:$0xf]
    %v1162 = vld [vmem:[%s1160 + $0x4] sm:$0xf]
    %v1163 = vld [vmem:[%s1160 + $0x8] sm:$0xf]
    %v1164 = vld [vmem:[%s1160 + $0xc] sm:$0xf]
    %v1165 = vld [vmem:[%s1160 + $0x10] sm:$0xf]
    %v1166 = vld [vmem:[%s1160 + $0x14] sm:$0xf]
    %v1167 = vld [vmem:[%s1160 + $0x18] sm:$0xf]
    %v1168 = vld [vmem:[%s1160 + $0x1c] sm:$0xf]
    %v1169 = vld [vmem:[%s1160 + $0x20] sm:$0xf]
    %v1179 = vunpack.c.l.b16 %v1161
    %v1180 = vunpack.c.l.b16 %v1162
    %v1181 = vunpack.c.l.b16 %v1163
    %v1182 = vunpack.c.l.b16 %v1164
    %v1183 = vunpack.c.l.b16 %v1165
    %v1184 = vunpack.c.l.b16 %v1166
    %v1185 = vunpack.c.l.b16 %v1167
    %v1186 = vunpack.c.l.b16 %v1168
    %v1187 = vunpack.c.l.b16 %v1169
    %v1188 = vpack.c.b16 %v1180, %v1179
    %v1189 = vpack.c.b16 %v1182, %v1181
    %v1190 = vpack.c.b16 %v1184, %v1183
    %v1191 = vpack.c.b16 %v1186, %v1185
    %v1192 = vpack.c.b16 %v1187, %v1187
    %v1194 = vsel %vm471, %v1188, 0
    %v1197 = vsel %vm471, %v1189, 0
    %v1200 = vsel %vm471, %v1190, 0
    %v1203 = vsel %vm471, %v1191, 0
    %v1206 = vsel %vm471, %v1192, 0
    %1208 = vmatprep.subr.bf16.mxu0 0
    %1209 = vmatpush1.bf16.msra.mxu0 %v432
    %1210 = vmatprep.subr.bf16.mxu0 0
    %1211 = vmatpush1.bf16.msra.mxu0 %v433
    %1212 = vmatprep.subr.bf16.mxu0 0
    %1213 = vmatpush1.bf16.msra.mxu0 %v434
    %1214 = vmatprep.subr.bf16.mxu0 0
    %1215 = vmatpush1.bf16.msra.mxu0 %v435
    %1216 = vmatprep.subr.bf16.mxu0 0
    %1217 = vmatpush1.bf16.msra.mxu0 %v489
    %1218 = vmatprep.subr.bf16.mxu0 0
    %1219 = vmatpush1.bf16.msra.mxu0 0
    %1220 = vmatprep.subr.bf16.mxu0 0
    %1221 = vmatpush1.bf16.msra.mxu0 0
    %1222 = vmatprep.subr.bf16.mxu0 0
    %1223 = vmatpush1.bf16.msra.mxu0 0
    %1224 = vmatprep.subr.bf16.mxu0 0
    %1225 = vmatpush1.bf16.msra.mxu0 0
    %1226 = vmatprep.subr.bf16.mxu0 0
    %1227 = vmatpush1.bf16.msra.mxu0 0
    %1228 = vmatprep.subr.bf16.mxu0 0
    %1229 = vmatpush1.bf16.msra.mxu0 0
    %1230 = vmatprep.subr.bf16.mxu0 0
    %1231 = vmatpush1.bf16.msra.mxu0 0
    %1232 = vmatprep.subr.bf16.mxu0 0
    %1233 = vmatpush1.bf16.msra.mxu0 0
    %1234 = vmatprep.subr.bf16.mxu0 0
    %1235 = vmatpush1.bf16.msra.mxu0 0
    %1236 = vmatprep.subr.bf16.mxu0 0
    %1237 = vmatpush1.bf16.msra.mxu0 0
    %1238 = vmatprep.subr.bf16.mxu0 0
    %1239 = vmatpush1.bf16.msra.mxu0 0
    %1240 = vmatprep.mubr.bf16.mxu0 0
    %1241 = vmatmul.mubr.bf16.gmra.mrb[0].mxu0 %v1194
    %v1242 = vpop.f32.mrb[0].mxu0
    %v1243 = vadd.f32 0.0, %v1242
    %v1244 = vpop.f32.mrb[0].mxu0
    %v1245 = vpop.f32.mrb[0].mxu0
    %v1246 = vadd.f32 0.0, %v1245
    %v1247 = vpop.f32.mrb[0].mxu0
    %1248 = vmatprep.mubr.bf16.mxu0 0
    %1249 = vmatmul.mubr.bf16.gmra.mrb[0].mxu0 %v1197
    %v1250 = vpop.f32.mrb[0].mxu0
    %v1251 = vadd.f32 0.0, %v1250
    %v1252 = vpop.f32.mrb[0].mxu0
    %v1253 = vpop.f32.mrb[0].mxu0
    %v1254 = vadd.f32 0.0, %v1253
    %v1255 = vpop.f32.mrb[0].mxu0
    %1256 = vmatprep.mubr.bf16.mxu0 0
    %1257 = vmatmul.mubr.bf16.gmra.mrb[0].mxu0 %v1200
    %v1258 = vpop.f32.mrb[0].mxu0
    %v1259 = vadd.f32 0.0, %v1258
    %v1260 = vpop.f32.mrb[0].mxu0
    %v1261 = vpop.f32.mrb[0].mxu0
    %v1262 = vadd.f32 0.0, %v1261
    %v1263 = vpop.f32.mrb[0].mxu0
    %1264 = vmatprep.mubr.bf16.mxu0 0
    %1265 = vmatmul.mubr.bf16.gmra.mrb[0].mxu0 %v1203
    %v1266 = vpop.f32.mrb[0].mxu0
    %v1267 = vadd.f32 0.0, %v1266
    %v1268 = vpop.f32.mrb[0].mxu0
    %v1269 = vpop.f32.mrb[0].mxu0
    %v1270 = vadd.f32 0.0, %v1269
    %v1271 = vpop.f32.mrb[0].mxu0
    %1272 = vmatprep.mubr.bf16.mxu0 0
    %1273 = vmatmul.mubr.bf16.gmra.mrb[0].mxu0 %v1206
    %v1274 = vpop.f32.mrb[0].mxu0
    %v1275 = vadd.f32 0.0, %v1274
    %v1276 = vpop.f32.mrb[0].mxu0
    %v1277 = vpop.f32.mrb[0].mxu0
    %v1278 = vpop.f32.mrb[0].mxu0
    %1279 = vdwg.mxu0
    %v1280 = vsel %vm344, %v1243, 0.0
    %v1281 = vsel %vm344, %v1246, 0.0
    %v1282 = vadd.f32 %v1280, %v1281
    %v1283 = vsel %vm344, %v1251, 0.0
    %v1284 = vadd.f32 %v1282, %v1283
    %v1285 = vsel %vm344, %v1254, 0.0
    %v1286 = vadd.f32 %v1284, %v1285
    %v1287 = vsel %vm344, %v1259, 0.0
    %v1288 = vadd.f32 %v1286, %v1287
    %v1289 = vsel %vm344, %v1262, 0.0
    %v1290 = vadd.f32 %v1288, %v1289
    %v1291 = vsel %vm344, %v1267, 0.0
    %v1292 = vadd.f32 %v1290, %v1291
    %v1293 = vsel %vm344, %v1270, 0.0
    %v1294 = vadd.f32 %v1292, %v1293
    %v1295 = vsel %vm344, %v1275, 0.0
    %v1296 = vadd.f32 %v1294, %v1295
    %v1297 = vrot.slane %v1296, 4
    %v1298 = vadd.f32 %v1296, %v1297
    %v1299 = vrot.slane %v1298, 2
    %v1300 = vadd.f32 %v1298, %v1299
    %v1301 = vrot.slane %v1300, 1
    %v1302 = vadd.f32 %v1300, %v1301
    %v1303 = vrcp.pop 18.0
    %v1304 = vmul.f32 %v1302, %v1303
    %v1305 = vmul.f32 %v1243, %v1243
    %v1306 = vmul.f32 %v1246, %v1246
    %v1307 = vmul.f32 %v1251, %v1251
    %v1308 = vmul.f32 %v1254, %v1254
    %v1309 = vmul.f32 %v1259, %v1259
    %v1310 = vmul.f32 %v1262, %v1262
    %v1311 = vmul.f32 %v1267, %v1267
    %v1312 = vmul.f32 %v1270, %v1270
    %v1313 = vmul.f32 %v1275, %v1275
    %v1314 = vsel %vm344, %v1305, 0.0
    %v1315 = vsel %vm344, %v1306, 0.0
    %v1316 = vadd.f32 %v1314, %v1315
    %v1317 = vsel %vm344, %v1307, 0.0
    %v1318 = vadd.f32 %v1316, %v1317
    %v1319 = vsel %vm344, %v1308, 0.0
    %v1320 = vadd.f32 %v1318, %v1319
    %v1321 = vsel %vm344, %v1309, 0.0
    %v1322 = vadd.f32 %v1320, %v1321
    %v1323 = vsel %vm344, %v1310, 0.0
    %v1324 = vadd.f32 %v1322, %v1323
    %v1325 = vsel %vm344, %v1311, 0.0
    %v1326 = vadd.f32 %v1324, %v1325
    %v1327 = vsel %vm344, %v1312, 0.0
    %v1328 = vadd.f32 %v1326, %v1327
    %v1329 = vsel %vm344, %v1313, 0.0
    %v1330 = vadd.f32 %v1328, %v1329
    %v1331 = vrot.slane %v1330, 4
    %v1332 = vadd.f32 %v1330, %v1331
    %v1333 = vrot.slane %v1332, 2
    %v1334 = vadd.f32 %v1332, %v1333
    %v1335 = vrot.slane %v1334, 1
    %v1336 = vadd.f32 %v1334, %v1335
    %v1337 = vmul.f32 %v1336, %v1303
    %v1338 = vmul.f32 %v1304, %v1304
    %v1339 = vsub.f32 %v1337, %v1338
    %v1340 = vsub.f32 %v1243, %v1304
    %v1341 = vsub.f32 %v1246, %v1304
    %v1342 = vsub.f32 %v1251, %v1304
    %v1343 = vsub.f32 %v1254, %v1304
    %v1344 = vsub.f32 %v1259, %v1304
    %v1345 = vsub.f32 %v1262, %v1304
    %v1346 = vsub.f32 %v1267, %v1304
    %v1347 = vsub.f32 %v1270, %v1304
    %v1348 = vsub.f32 %v1275, %v1304
    %v1349 = vmax.f32 %v1339, 0.0
    %v1350 = vadd.f32 %v1349, 1e-05
    %v1351 = vrsqrt.pop %v1350
    %v1352 = vmul.f32 %v1340, %v1351
    %v1353 = vmul.f32 %v1341, %v1351
    %v1354 = vmul.f32 %v1342, %v1351
    %v1355 = vmul.f32 %v1343, %v1351
    %v1356 = vmul.f32 %v1344, %v1351
    %v1357 = vmul.f32 %v1345, %v1351
    %v1358 = vmul.f32 %v1346, %v1351
    %v1359 = vmul.f32 %v1347, %v1351
    %v1360 = vmul.f32 %v1348, %v1351
    %v1361 = vmax.f32 %v1352, 0.0
    %v1362 = vmax.f32 %v1353, 0.0
    %v1363 = vmax.f32 %v1354, 0.0
    %v1364 = vmax.f32 %v1355, 0.0
    %v1365 = vmax.f32 %v1356, 0.0
    %v1366 = vmax.f32 %v1357, 0.0
    %v1367 = vmax.f32 %v1358, 0.0
    %v1368 = vmax.f32 %v1359, 0.0
    %v1369 = vmax.f32 %v1360, 0.0
    %s1370 = scalar_lea.vmem [#allocation7], 72
    %v1371 = vld [vmem:[%s1370] sm:$0xf]
    %v1372 = vld [vmem:[%s1370 + $0x4] sm:$0xf]
    %v1373 = vld [vmem:[%s1370 + $0x8] sm:$0xf]
    %v1374 = vld [vmem:[%s1370 + $0xc] sm:$0xf]
    %v1375 = vld [vmem:[%s1370 + $0x10] sm:$0xf]
    %v1376 = vld [vmem:[%s1370 + $0x14] sm:$0xf]
    %v1377 = vld [vmem:[%s1370 + $0x18] sm:$0xf]
    %v1378 = vld [vmem:[%s1370 + $0x1c] sm:$0xf]
    %v1379 = vld [vmem:[%s1370 + $0x20] sm:$0xf]
    %v1380 = vpack.c.bf16 %v1362, %v1361
    %v1381 = vpack.c.bf16 %v1364, %v1363
    %v1382 = vpack.c.bf16 %v1366, %v1365
    %v1383 = vpack.c.bf16 %v1368, %v1367
    %v1384 = vpack.c.bf16 %v1369, %v1369
    %v1394 = vunpack.c.l.b16 %v1371
    %v1395 = vunpack.c.l.b16 %v1372
    %v1396 = vunpack.c.l.b16 %v1373
    %v1397 = vunpack.c.l.b16 %v1374
    %v1398 = vunpack.c.l.b16 %v1375
    %v1399 = vunpack.c.l.b16 %v1376
    %v1400 = vunpack.c.l.b16 %v1377
    %v1401 = vunpack.c.l.b16 %v1378
    %v1402 = vunpack.c.l.b16 %v1379
    %v1403 = vpack.c.b16 %v1395, %v1394
    %v1404 = vpack.c.b16 %v1397, %v1396
    %v1405 = vpack.c.b16 %v1399, %v1398
    %v1406 = vpack.c.b16 %v1401, %v1400
    %v1407 = vpack.c.b16 %v1402, %v1402
    %v1409 = vsel %vm471, %v1403, 0
    %v1412 = vsel %vm471, %v1404, 0
    %v1415 = vsel %vm471, %v1405, 0
    %v1418 = vsel %vm471, %v1406, 0
    %v1421 = vsel %vm471, %v1407, 0
    %v1424 = vsel %vm487, %v1384, 0
    %1426 = vmatprep.subr.bf16.mxu0 0
    %1427 = vmatpush1.bf16.msra.mxu0 %v1380
    %1428 = vmatprep.subr.bf16.mxu0 0
    %1429 = vmatpush1.bf16.msra.mxu0 %v1381
    %1430 = vmatprep.subr.bf16.mxu0 0
    %1431 = vmatpush1.bf16.msra.mxu0 %v1382
    %1432 = vmatprep.subr.bf16.mxu0 0
    %1433 = vmatpush1.bf16.msra.mxu0 %v1383
    %1434 = vmatprep.subr.bf16.mxu0 0
    %1435 = vmatpush1.bf16.msra.mxu0 %v1424
    %1436 = vmatprep.subr.bf16.mxu0 0
    %1437 = vmatpush1.bf16.msra.mxu0 0
    %1438 = vmatprep.subr.bf16.mxu0 0
    %1439 = vmatpush1.bf16.msra.mxu0 0
    %1440 = vmatprep.subr.bf16.mxu0 0
    %1441 = vmatpush1.bf16.msra.mxu0 0
    %1442 = vmatprep.subr.bf16.mxu0 0
    %1443 = vmatpush1.bf16.msra.mxu0 0
    %1444 = vmatprep.subr.bf16.mxu0 0
    %1445 = vmatpush1.bf16.msra.mxu0 0
    %1446 = vmatprep.subr.bf16.mxu0 0
    %1447 = vmatpush1.bf16.msra.mxu0 0
    %1448 = vmatprep.subr.bf16.mxu0 0
    %1449 = vmatpush1.bf16.msra.mxu0 0
    %1450 = vmatprep.subr.bf16.mxu0 0
    %1451 = vmatpush1.bf16.msra.mxu0 0
    %1452 = vmatprep.subr.bf16.mxu0 0
    %1453 = vmatpush1.bf16.msra.mxu0 0
    %1454 = vmatprep.subr.bf16.mxu0 0
    %1455 = vmatpush1.bf16.msra.mxu0 0
    %1456 = vmatprep.subr.bf16.mxu0 0
    %1457 = vmatpush1.bf16.msra.mxu0 0
    %1458 = vmatprep.mubr.bf16.mxu0 0
    %1459 = vmatmul.mubr.bf16.gmra.mrb[0].mxu0 %v1409
    %v1460 = vpop.f32.mrb[0].mxu0
    %v1461 = vadd.f32 0.0, %v1460
    %v1462 = vpop.f32.mrb[0].mxu0
    %v1463 = vpop.f32.mrb[0].mxu0
    %v1464 = vadd.f32 0.0, %v1463
    %v1465 = vpop.f32.mrb[0].mxu0
    %1466 = vmatprep.mubr.bf16.mxu0 0
    %1467 = vmatmul.mubr.bf16.gmra.mrb[0].mxu0 %v1412
    %v1468 = vpop.f32.mrb[0].mxu0
    %v1469 = vadd.f32 0.0, %v1468
    %v1470 = vpop.f32.mrb[0].mxu0
    %v1471 = vpop.f32.mrb[0].mxu0
    %v1472 = vadd.f32 0.0, %v1471
    %v1473 = vpop.f32.mrb[0].mxu0
    %1474 = vmatprep.mubr.bf16.mxu0 0
    %1475 = vmatmul.mubr.bf16.gmra.mrb[0].mxu0 %v1415
    %v1476 = vpop.f32.mrb[0].mxu0
    %v1477 = vadd.f32 0.0, %v1476
    %v1478 = vpop.f32.mrb[0].mxu0
    %v1479 = vpop.f32.mrb[0].mxu0
    %v1480 = vadd.f32 0.0, %v1479
    %v1481 = vpop.f32.mrb[0].mxu0
    %1482 = vmatprep.mubr.bf16.mxu0 0
    %1483 = vmatmul.mubr.bf16.gmra.mrb[0].mxu0 %v1418
    %v1484 = vpop.f32.mrb[0].mxu0
    %v1485 = vadd.f32 0.0, %v1484
    %v1486 = vpop.f32.mrb[0].mxu0
    %v1487 = vpop.f32.mrb[0].mxu0
    %v1488 = vadd.f32 0.0, %v1487
    %v1489 = vpop.f32.mrb[0].mxu0
    %1490 = vmatprep.mubr.bf16.mxu0 0
    %1491 = vmatmul.mubr.bf16.gmra.mrb[0].mxu0 %v1421
    %v1492 = vpop.f32.mrb[0].mxu0
    %v1493 = vadd.f32 0.0, %v1492
    %v1494 = vpop.f32.mrb[0].mxu0
    %v1495 = vpop.f32.mrb[0].mxu0
    %v1496 = vpop.f32.mrb[0].mxu0
    %1497 = vdwg.mxu0
    %vm1498 = vcmp.ge.s32.totalorder %v438, 16
    %vm1499 = vcmp.lt.s32.totalorder %v438, 24
    %vm1500 = vmand %vm1498, %vm1499
    %v1501 = vsel %vm1500, %v1461, 0.0
    %v1502 = vsel %vm1500, %v1464, 0.0
    %v1503 = vsel %vm1500, %v1469, 0.0
    %v1504 = vsel %vm1500, %v1472, 0.0
    %v1505 = vsel %vm1500, %v1477, 0.0
    %v1506 = vsel %vm1500, %v1480, 0.0
    %v1507 = vsel %vm1500, %v1485, 0.0
    %v1508 = vsel %vm1500, %v1488, 0.0
    %v1509 = vsel %vm1500, %v1493, 0.0
    %v1510 = vadd.f32 %v1151, %v1501
    %v1511 = vadd.f32 %v1152, %v1502
    %v1512 = vadd.f32 %v1153, %v1503
    %v1513 = vadd.f32 %v1154, %v1504
    %v1514 = vadd.f32 %v1155, %v1505
    %v1515 = vadd.f32 %v1156, %v1506
    %v1516 = vadd.f32 %v1157, %v1507
    %v1517 = vadd.f32 %v1158, %v1508
    %v1518 = vadd.f32 %v1159, %v1509
    %s1519 = scalar_lea.vmem [#allocation6], 108
    %v1520 = vld [vmem:[%s1519] sm:$0xf]
    %v1521 = vld [vmem:[%s1519 + $0x4] sm:$0xf]
    %v1522 = vld [vmem:[%s1519 + $0x8] sm:$0xf]
    %v1523 = vld [vmem:[%s1519 + $0xc] sm:$0xf]
    %v1524 = vld [vmem:[%s1519 + $0x10] sm:$0xf]
    %v1525 = vld [vmem:[%s1519 + $0x14] sm:$0xf]
    %v1526 = vld [vmem:[%s1519 + $0x18] sm:$0xf]
    %v1527 = vld [vmem:[%s1519 + $0x1c] sm:$0xf]
    %v1528 = vld [vmem:[%s1519 + $0x20] sm:$0xf]
    %v1538 = vunpack.c.l.b16 %v1520
    %v1539 = vunpack.c.l.b16 %v1521
    %v1540 = vunpack.c.l.b16 %v1522
    %v1541 = vunpack.c.l.b16 %v1523
    %v1542 = vunpack.c.l.b16 %v1524
    %v1543 = vunpack.c.l.b16 %v1525
    %v1544 = vunpack.c.l.b16 %v1526
    %v1545 = vunpack.c.l.b16 %v1527
    %v1546 = vunpack.c.l.b16 %v1528
    %v1547 = vpack.c.b16 %v1539, %v1538
    %v1548 = vpack.c.b16 %v1541, %v1540
    %v1549 = vpack.c.b16 %v1543, %v1542
    %v1550 = vpack.c.b16 %v1545, %v1544
    %v1551 = vpack.c.b16 %v1546, %v1546
    %v1553 = vsel %vm471, %v1547, 0
    %v1556 = vsel %vm471, %v1548, 0
    %v1559 = vsel %vm471, %v1549, 0
    %v1562 = vsel %vm471, %v1550, 0
    %v1565 = vsel %vm471, %v1551, 0
    %1567 = vmatprep.subr.bf16.mxu0 0
    %1568 = vmatpush1.bf16.msra.mxu0 %v432
    %1569 = vmatprep.subr.bf16.mxu0 0
    %1570 = vmatpush1.bf16.msra.mxu0 %v433
    %1571 = vmatprep.subr.bf16.mxu0 0
    %1572 = vmatpush1.bf16.msra.mxu0 %v434
    %1573 = vmatprep.subr.bf16.mxu0 0
    %1574 = vmatpush1.bf16.msra.mxu0 %v435
    %1575 = vmatprep.subr.bf16.mxu0 0
    %1576 = vmatpush1.bf16.msra.mxu0 %v489
    %1577 = vmatprep.subr.bf16.mxu0 0
    %1578 = vmatpush1.bf16.msra.mxu0 0
    %1579 = vmatprep.subr.bf16.mxu0 0
    %1580 = vmatpush1.bf16.msra.mxu0 0
    %1581 = vmatprep.subr.bf16.mxu0 0
    %1582 = vmatpush1.bf16.msra.mxu0 0
    %1583 = vmatprep.subr.bf16.mxu0 0
    %1584 = vmatpush1.bf16.msra.mxu0 0
    %1585 = vmatprep.subr.bf16.mxu0 0
    %1586 = vmatpush1.bf16.msra.mxu0 0
    %1587 = vmatprep.subr.bf16.mxu0 0
    %1588 = vmatpush1.bf16.msra.mxu0 0
    %1589 = vmatprep.subr.bf16.mxu0 0
    %1590 = vmatpush1.bf16.msra.mxu0 0
    %1591 = vmatprep.subr.bf16.mxu0 0
    %1592 = vmatpush1.bf16.msra.mxu0 0
    %1593 = vmatprep.subr.bf16.mxu0 0
    %1594 = vmatpush1.bf16.msra.mxu0 0
    %1595 = vmatprep.subr.bf16.mxu0 0
    %1596 = vmatpush1.bf16.msra.mxu0 0
    %1597 = vmatprep.subr.bf16.mxu0 0
    %1598 = vmatpush1.bf16.msra.mxu0 0
    %1599 = vmatprep.mubr.bf16.mxu0 0
    %1600 = vmatmul.mubr.bf16.gmra.mrb[0].mxu0 %v1553
    %v1601 = vpop.f32.mrb[0].mxu0
    %v1602 = vadd.f32 0.0, %v1601
    %v1603 = vpop.f32.mrb[0].mxu0
    %v1604 = vpop.f32.mrb[0].mxu0
    %v1605 = vadd.f32 0.0, %v1604
    %v1606 = vpop.f32.mrb[0].mxu0
    %1607 = vmatprep.mubr.bf16.mxu0 0
    %1608 = vmatmul.mubr.bf16.gmra.mrb[0].mxu0 %v1556
    %v1609 = vpop.f32.mrb[0].mxu0
    %v1610 = vadd.f32 0.0, %v1609
    %v1611 = vpop.f32.mrb[0].mxu0
    %v1612 = vpop.f32.mrb[0].mxu0
    %v1613 = vadd.f32 0.0, %v1612
    %v1614 = vpop.f32.mrb[0].mxu0
    %1615 = vmatprep.mubr.bf16.mxu0 0
    %1616 = vmatmul.mubr.bf16.gmra.mrb[0].mxu0 %v1559
    %v1617 = vpop.f32.mrb[0].mxu0
    %v1618 = vadd.f32 0.0, %v1617
    %v1619 = vpop.f32.mrb[0].mxu0
    %v1620 = vpop.f32.mrb[0].mxu0
    %v1621 = vadd.f32 0.0, %v1620
    %v1622 = vpop.f32.mrb[0].mxu0
    %1623 = vmatprep.mubr.bf16.mxu0 0
    %1624 = vmatmul.mubr.bf16.gmra.mrb[0].mxu0 %v1562
    %v1625 = vpop.f32.mrb[0].mxu0
    %v1626 = vadd.f32 0.0, %v1625
    %v1627 = vpop.f32.mrb[0].mxu0
    %v1628 = vpop.f32.mrb[0].mxu0
    %v1629 = vadd.f32 0.0, %v1628
    %v1630 = vpop.f32.mrb[0].mxu0
    %1631 = vmatprep.mubr.bf16.mxu0 0
    %1632 = vmatmul.mubr.bf16.gmra.mrb[0].mxu0 %v1565
    %v1633 = vpop.f32.mrb[0].mxu0
    %v1634 = vadd.f32 0.0, %v1633
    %v1635 = vpop.f32.mrb[0].mxu0
    %v1636 = vpop.f32.mrb[0].mxu0
    %v1637 = vpop.f32.mrb[0].mxu0
    %1638 = vdwg.mxu0
    %v1639 = vsel %vm344, %v1602, 0.0
    %v1640 = vsel %vm344, %v1605, 0.0
    %v1641 = vadd.f32 %v1639, %v1640
    %v1642 = vsel %vm344, %v1610, 0.0
    %v1643 = vadd.f32 %v1641, %v1642
    %v1644 = vsel %vm344, %v1613, 0.0
    %v1645 = vadd.f32 %v1643, %v1644
    %v1646 = vsel %vm344, %v1618, 0.0
    %v1647 = vadd.f32 %v1645, %v1646
    %v1648 = vsel %vm344, %v1621, 0.0
    %v1649 = vadd.f32 %v1647, %v1648
    %v1650 = vsel %vm344, %v1626, 0.0
    %v1651 = vadd.f32 %v1649, %v1650
    %v1652 = vsel %vm344, %v1629, 0.0
    %v1653 = vadd.f32 %v1651, %v1652
    %v1654 = vsel %vm344, %v1634, 0.0
    %v1655 = vadd.f32 %v1653, %v1654
    %v1656 = vrot.slane %v1655, 4
    %v1657 = vadd.f32 %v1655, %v1656
    %v1658 = vrot.slane %v1657, 2
    %v1659 = vadd.f32 %v1657, %v1658
    %v1660 = vrot.slane %v1659, 1
    %v1661 = vadd.f32 %v1659, %v1660
    %v1662 = vrcp.pop 72.0
    %v1663 = vmul.f32 %v1661, %v1662
    %v1664 = vmul.f32 %v1602, %v1602
    %v1665 = vmul.f32 %v1605, %v1605
    %v1666 = vmul.f32 %v1610, %v1610
    %v1667 = vmul.f32 %v1613, %v1613
    %v1668 = vmul.f32 %v1618, %v1618
    %v1669 = vmul.f32 %v1621, %v1621
    %v1670 = vmul.f32 %v1626, %v1626
    %v1671 = vmul.f32 %v1629, %v1629
    %v1672 = vmul.f32 %v1634, %v1634
    %v1673 = vsel %vm344, %v1664, 0.0
    %v1674 = vsel %vm344, %v1665, 0.0
    %v1675 = vadd.f32 %v1673, %v1674
    %v1676 = vsel %vm344, %v1666, 0.0
    %v1677 = vadd.f32 %v1675, %v1676
    %v1678 = vsel %vm344, %v1667, 0.0
    %v1679 = vadd.f32 %v1677, %v1678
    %v1680 = vsel %vm344, %v1668, 0.0
    %v1681 = vadd.f32 %v1679, %v1680
    %v1682 = vsel %vm344, %v1669, 0.0
    %v1683 = vadd.f32 %v1681, %v1682
    %v1684 = vsel %vm344, %v1670, 0.0
    %v1685 = vadd.f32 %v1683, %v1684
    %v1686 = vsel %vm344, %v1671, 0.0
    %v1687 = vadd.f32 %v1685, %v1686
    %v1688 = vsel %vm344, %v1672, 0.0
    %v1689 = vadd.f32 %v1687, %v1688
    %v1690 = vrot.slane %v1689, 4
    %v1691 = vadd.f32 %v1689, %v1690
    %v1692 = vrot.slane %v1691, 2
    %v1693 = vadd.f32 %v1691, %v1692
    %v1694 = vrot.slane %v1693, 1
    %v1695 = vadd.f32 %v1693, %v1694
    %v1696 = vmul.f32 %v1695, %v1662
    %v1697 = vmul.f32 %v1663, %v1663
    %v1698 = vsub.f32 %v1696, %v1697
    %v1699 = vsub.f32 %v1602, %v1663
    %v1700 = vsub.f32 %v1605, %v1663
    %v1701 = vsub.f32 %v1610, %v1663
    %v1702 = vsub.f32 %v1613, %v1663
    %v1703 = vsub.f32 %v1618, %v1663
    %v1704 = vsub.f32 %v1621, %v1663
    %v1705 = vsub.f32 %v1626, %v1663
    %v1706 = vsub.f32 %v1629, %v1663
    %v1707 = vsub.f32 %v1634, %v1663
    %v1708 = vmax.f32 %v1698, 0.0
    %v1709 = vadd.f32 %v1708, 1e-05
    %v1710 = vrsqrt.pop %v1709
    %v1711 = vmul.f32 %v1699, %v1710
    %v1712 = vmul.f32 %v1700, %v1710
    %v1713 = vmul.f32 %v1701, %v1710
    %v1714 = vmul.f32 %v1702, %v1710
    %v1715 = vmul.f32 %v1703, %v1710
    %v1716 = vmul.f32 %v1704, %v1710
    %v1717 = vmul.f32 %v1705, %v1710
    %v1718 = vmul.f32 %v1706, %v1710
    %v1719 = vmul.f32 %v1707, %v1710
    %v1720 = vmax.f32 %v1711, 0.0
    %v1721 = vmax.f32 %v1712, 0.0
    %v1722 = vmax.f32 %v1713, 0.0
    %v1723 = vmax.f32 %v1714, 0.0
    %v1724 = vmax.f32 %v1715, 0.0
    %v1725 = vmax.f32 %v1716, 0.0
    %v1726 = vmax.f32 %v1717, 0.0
    %v1727 = vmax.f32 %v1718, 0.0
    %v1728 = vmax.f32 %v1719, 0.0
    %s1729 = scalar_lea.vmem [#allocation7], 108
    %v1730 = vld [vmem:[%s1729] sm:$0xf]
    %v1731 = vld [vmem:[%s1729 + $0x4] sm:$0xf]
    %v1732 = vld [vmem:[%s1729 + $0x8] sm:$0xf]
    %v1733 = vld [vmem:[%s1729 + $0xc] sm:$0xf]
    %v1734 = vld [vmem:[%s1729 + $0x10] sm:$0xf]
    %v1735 = vld [vmem:[%s1729 + $0x14] sm:$0xf]
    %v1736 = vld [vmem:[%s1729 + $0x18] sm:$0xf]
    %v1737 = vld [vmem:[%s1729 + $0x1c] sm:$0xf]
    %v1738 = vld [vmem:[%s1729 + $0x20] sm:$0xf]
    %v1739 = vpack.c.bf16 %v1721, %v1720
    %v1740 = vpack.c.bf16 %v1723, %v1722
    %v1741 = vpack.c.bf16 %v1725, %v1724
    %v1742 = vpack.c.bf16 %v1727, %v1726
    %v1743 = vpack.c.bf16 %v1728, %v1728
    %v1753 = vunpack.c.l.b16 %v1730
    %v1754 = vunpack.c.l.b16 %v1731
    %v1755 = vunpack.c.l.b16 %v1732
    %v1756 = vunpack.c.l.b16 %v1733
    %v1757 = vunpack.c.l.b16 %v1734
    %v1758 = vunpack.c.l.b16 %v1735
    %v1759 = vunpack.c.l.b16 %v1736
    %v1760 = vunpack.c.l.b16 %v1737
    %v1761 = vunpack.c.l.b16 %v1738
    %v1762 = vpack.c.b16 %v1754, %v1753
    %v1763 = vpack.c.b16 %v1756, %v1755
    %v1764 = vpack.c.b16 %v1758, %v1757
    %v1765 = vpack.c.b16 %v1760, %v1759
    %v1766 = vpack.c.b16 %v1761, %v1761
    %v1768 = vsel %vm471, %v1762, 0
    %v1771 = vsel %vm471, %v1763, 0
    %v1774 = vsel %vm471, %v1764, 0
    %v1777 = vsel %vm471, %v1765, 0
    %v1780 = vsel %vm471, %v1766, 0
    %v1783 = vsel %vm487, %v1743, 0
    %1785 = vmatprep.subr.bf16.mxu0 0
    %1786 = vmatpush1.bf16.msra.mxu0 %v1739
    %1787 = vmatprep.subr.bf16.mxu0 0
    %1788 = vmatpush1.bf16.msra.mxu0 %v1740
    %1789 = vmatprep.subr.bf16.mxu0 0
    %1790 = vmatpush1.bf16.msra.mxu0 %v1741
    %1791 = vmatprep.subr.bf16.mxu0 0
    %1792 = vmatpush1.bf16.msra.mxu0 %v1742
    %1793 = vmatprep.subr.bf16.mxu0 0
    %1794 = vmatpush1.bf16.msra.mxu0 %v1783
    %1795 = vmatprep.subr.bf16.mxu0 0
    %1796 = vmatpush1.bf16.msra.mxu0 0
    %1797 = vmatprep.subr.bf16.mxu0 0
    %1798 = vmatpush1.bf16.msra.mxu0 0
    %1799 = vmatprep.subr.bf16.mxu0 0
    %1800 = vmatpush1.bf16.msra.mxu0 0
    %1801 = vmatprep.subr.bf16.mxu0 0
    %1802 = vmatpush1.bf16.msra.mxu0 0
    %1803 = vmatprep.subr.bf16.mxu0 0
    %1804 = vmatpush1.bf16.msra.mxu0 0
    %1805 = vmatprep.subr.bf16.mxu0 0
    %1806 = vmatpush1.bf16.msra.mxu0 0
    %1807 = vmatprep.subr.bf16.mxu0 0
    %1808 = vmatpush1.bf16.msra.mxu0 0
    %1809 = vmatprep.subr.bf16.mxu0 0
    %1810 = vmatpush1.bf16.msra.mxu0 0
    %1811 = vmatprep.subr.bf16.mxu0 0
    %1812 = vmatpush1.bf16.msra.mxu0 0
    %1813 = vmatprep.subr.bf16.mxu0 0
    %1814 = vmatpush1.bf16.msra.mxu0 0
    %1815 = vmatprep.subr.bf16.mxu0 0
    %1816 = vmatpush1.bf16.msra.mxu0 0
    %1817 = vmatprep.mubr.bf16.mxu0 0
    %1818 = vmatmul.mubr.bf16.gmra.mrb[0].mxu0 %v1768
    %v1819 = vpop.f32.mrb[0].mxu0
    %v1820 = vadd.f32 0.0, %v1819
    %v1821 = vpop.f32.mrb[0].mxu0
    %v1822 = vpop.f32.mrb[0].mxu0
    %v1823 = vadd.f32 0.0, %v1822
    %v1824 = vpop.f32.mrb[0].mxu0
    %1825 = vmatprep.mubr.bf16.mxu0 0
    %1826 = vmatmul.mubr.bf16.gmra.mrb[0].mxu0 %v1771
    %v1827 = vpop.f32.mrb[0].mxu0
    %v1828 = vadd.f32 0.0, %v1827
    %v1829 = vpop.f32.mrb[0].mxu0
    %v1830 = vpop.f32.mrb[0].mxu0
    %v1831 = vadd.f32 0.0, %v1830
    %v1832 = vpop.f32.mrb[0].mxu0
    %1833 = vmatprep.mubr.bf16.mxu0 0
    %1834 = vmatmul.mubr.bf16.gmra.mrb[0].mxu0 %v1774
    %v1835 = vpop.f32.mrb[0].mxu0
    %v1836 = vadd.f32 0.0, %v1835
    %v1837 = vpop.f32.mrb[0].mxu0
    %v1838 = vpop.f32.mrb[0].mxu0
    %v1839 = vadd.f32 0.0, %v1838
    %v1840 = vpop.f32.mrb[0].mxu0
    %1841 = vmatprep.mubr.bf16.mxu0 0
    %1842 = vmatmul.mubr.bf16.gmra.mrb[0].mxu0 %v1777
    %v1843 = vpop.f32.mrb[0].mxu0
    %v1844 = vadd.f32 0.0, %v1843
    %v1845 = vpop.f32.mrb[0].mxu0
    %v1846 = vpop.f32.mrb[0].mxu0
    %v1847 = vadd.f32 0.0, %v1846
    %v1848 = vpop.f32.mrb[0].mxu0
    %1849 = vmatprep.mubr.bf16.mxu0 0
    %1850 = vmatmul.mubr.bf16.gmra.mrb[0].mxu0 %v1780
    %v1851 = vpop.f32.mrb[0].mxu0
    %v1852 = vadd.f32 0.0, %v1851
    %v1853 = vpop.f32.mrb[0].mxu0
    %v1854 = vpop.f32.mrb[0].mxu0
    %v1855 = vpop.f32.mrb[0].mxu0
    %1856 = vdwg.mxu0
    %vm1857 = vcmp.ge.s32.totalorder %v438, 24
    %vm1858 = vcmp.lt.s32.totalorder %v438, 32
    %vm1859 = vmand %vm1857, %vm1858
    %v1860 = vsel %vm1859, %v1820, 0.0
    %v1861 = vsel %vm1859, %v1823, 0.0
    %v1862 = vsel %vm1859, %v1828, 0.0
    %v1863 = vsel %vm1859, %v1831, 0.0
    %v1864 = vsel %vm1859, %v1836, 0.0
    %v1865 = vsel %vm1859, %v1839, 0.0
    %v1866 = vsel %vm1859, %v1844, 0.0
    %v1867 = vsel %vm1859, %v1847, 0.0
    %v1868 = vsel %vm1859, %v1852, 0.0
    %v1869 = vadd.f32 %v1510, %v1860
    %v1870 = vadd.f32 %v1511, %v1861
    %v1871 = vadd.f32 %v1512, %v1862
    %v1872 = vadd.f32 %v1513, %v1863
    %v1873 = vadd.f32 %v1514, %v1864
    %v1874 = vadd.f32 %v1515, %v1865
    %v1875 = vadd.f32 %v1516, %v1866
    %v1876 = vadd.f32 %v1517, %v1867
    %v1877 = vadd.f32 %v1518, %v1868
    %v1878 = vpack.c.bf16 %v1870, %v1869
    %v1879 = vpack.c.bf16 %v1872, %v1871
    %v1880 = vpack.c.bf16 %v1874, %v1873
    %v1881 = vpack.c.bf16 %v1876, %v1875
    %v1882 = vpack.c.bf16 %v1877, %v1877
    %1888 = vrot.lane.b32.xlu0 %v1878, 32
    %v1889 = vpop.permute.xlu0 %1888
    %1890 = vrot.lane.b32.xlu0 %v1879, 32
    %v1891 = vpop.permute.xlu0 %1890
    %1892 = vrot.lane.b32.xlu0 %v1880, 32
    %v1893 = vpop.permute.xlu0 %1892
    %1894 = vrot.lane.b32.xlu0 %v1881, 32
    %v1895 = vpop.permute.xlu0 %1894
    %1896 = vrot.lane.b32.xlu0 %v1882, 32
    %v1897 = vpop.permute.xlu0 %1896
    %v1899 = vsel %vm344, %v323, %v1889
    %v1901 = vsel %vm344, %v324, %v1891
    %v1903 = vsel %vm344, %v325, %v1893
    %v1905 = vsel %vm344, %v326, %v1895
    %v1907 = vsel %vm344, %v327, %v1897
    %v1908 = vld [vmem:[%s6] sm:$0xf]
    %v1909 = vld [vmem:[%s6 + $0x4] sm:$0xf]
    %v1910 = vld [vmem:[%s6 + $0x8] sm:$0xf]
    %v1911 = vld [vmem:[%s6 + $0xc] sm:$0xf]
    %v1912 = vld [vmem:[%s6 + $0x10] sm:$0xf]
    %v1913 = vld [vmem:[%s6 + $0x14] sm:$0xf]
    %v1914 = vld [vmem:[%s6 + $0x18] sm:$0xf]
    %v1915 = vld [vmem:[%s6 + $0x1c] sm:$0xf]
    %v1924 = vunpack.c.l.b16 %v1908
    %v1925 = vunpack.c.l.b16 %v1909
    %v1926 = vunpack.c.l.b16 %v1910
    %v1927 = vunpack.c.l.b16 %v1911
    %v1928 = vunpack.c.l.b16 %v1912
    %v1929 = vunpack.c.l.b16 %v1913
    %v1930 = vunpack.c.l.b16 %v1914
    %v1931 = vunpack.c.l.b16 %v1915
    %v1932 = vpack.c.b16 %v1925, %v1924
    %v1933 = vpack.c.b16 %v1927, %v1926
    %v1934 = vpack.c.b16 %v1929, %v1928
    %v1935 = vpack.c.b16 %v1931, %v1930
    %vm1940 = vcmask 523264
    %v1941 = vsel %vm1940, %v1899, 0
    %v1943 = vsel %vm1940, %v1901, 0
    %v1945 = vsel %vm1940, %v1903, 0
    %v1947 = vsel %vm1940, %v1905, 0
    %v1949 = vsel %vm1940, %v1907, 0
    %1951 = vmatprep.subr.bf16.mxu0 0
    %1952 = vmatpush1.bf16.msra.mxu0 %v1932
    %1953 = vmatprep.subr.bf16.mxu0 0
    %1954 = vmatpush1.bf16.msra.mxu0 %v1933
    %1955 = vmatprep.subr.bf16.mxu0 0
    %1956 = vmatpush1.bf16.msra.mxu0 %v1934
    %1957 = vmatprep.subr.bf16.mxu0 0
    %1958 = vmatpush1.bf16.msra.mxu0 %v1935
    %1959 = vmatprep.subr.bf16.mxu0 0
    %1960 = vmatpush1.bf16.msra.mxu0 0
    %1961 = vmatprep.subr.bf16.mxu0 0
    %1962 = vmatpush1.bf16.msra.mxu0 0
    %1963 = vmatprep.subr.bf16.mxu0 0
    %1964 = vmatpush1.bf16.msra.mxu0 0
    %1965 = vmatprep.subr.bf16.mxu0 0
    %1966 = vmatpush1.bf16.msra.mxu0 0
    %1967 = vmatprep.subr.bf16.mxu0 0
    %1968 = vmatpush1.bf16.msra.mxu0 0
    %1969 = vmatprep.subr.bf16.mxu0 0
    %1970 = vmatpush1.bf16.msra.mxu0 0
    %1971 = vmatprep.subr.bf16.mxu0 0
    %1972 = vmatpush1.bf16.msra.mxu0 0
    %1973 = vmatprep.subr.bf16.mxu0 0
    %1974 = vmatpush1.bf16.msra.mxu0 0
    %1975 = vmatprep.subr.bf16.mxu0 0
    %1976 = vmatpush1.bf16.msra.mxu0 0
    %1977 = vmatprep.subr.bf16.mxu0 0
    %1978 = vmatpush1.bf16.msra.mxu0 0
    %1979 = vmatprep.subr.bf16.mxu0 0
    %1980 = vmatpush1.bf16.msra.mxu0 0
    %1981 = vmatprep.subr.bf16.mxu0 0
    %1982 = vmatpush1.bf16.msra.mxu0 0
    %1983 = vmatprep.mubr.bf16.mxu0 0
    %1984 = vmatmul.mubr.bf16.gmra.mrb[0].mxu0 %v1941
    %v1985 = vpop.f32.mrb[0].mxu0
    %v1986 = vadd.f32 0.0, %v1985
    %v1987 = vpop.f32.mrb[0].mxu0
    %v1988 = vpop.f32.mrb[0].mxu0
    %v1989 = vadd.f32 0.0, %v1988
    %v1990 = vpop.f32.mrb[0].mxu0
    %1991 = vmatprep.mubr.bf16.mxu0 0
    %1992 = vmatmul.mubr.bf16.gmra.mrb[0].mxu0 %v1943
    %v1993 = vpop.f32.mrb[0].mxu0
    %v1994 = vadd.f32 0.0, %v1993
    %v1995 = vpop.f32.mrb[0].mxu0
    %v1996 = vpop.f32.mrb[0].mxu0
    %v1997 = vadd.f32 0.0, %v1996
    %v1998 = vpop.f32.mrb[0].mxu0
    %1999 = vmatprep.mubr.bf16.mxu0 0
    %2000 = vmatmul.mubr.bf16.gmra.mrb[0].mxu0 %v1945
    %v2001 = vpop.f32.mrb[0].mxu0
    %v2002 = vadd.f32 0.0, %v2001
    %v2003 = vpop.f32.mrb[0].mxu0
    %v2004 = vpop.f32.mrb[0].mxu0
    %v2005 = vadd.f32 0.0, %v2004
    %v2006 = vpop.f32.mrb[0].mxu0
    %2007 = vmatprep.mubr.bf16.mxu0 0
    %2008 = vmatmul.mubr.bf16.gmra.mrb[0].mxu0 %v1947
    %v2009 = vpop.f32.mrb[0].mxu0
    %v2010 = vadd.f32 0.0, %v2009
    %v2011 = vpop.f32.mrb[0].mxu0
    %v2012 = vpop.f32.mrb[0].mxu0
    %v2013 = vadd.f32 0.0, %v2012
    %v2014 = vpop.f32.mrb[0].mxu0
    %2015 = vmatprep.mubr.bf16.mxu0 0
    %2016 = vmatmul.mubr.bf16.gmra.mrb[0].mxu0 %v1949
    %v2017 = vpop.f32.mrb[0].mxu0
    %v2018 = vadd.f32 0.0, %v2017
    %v2019 = vpop.f32.mrb[0].mxu0
    %v2020 = vpop.f32.mrb[0].mxu0
    %v2021 = vpop.f32.mrb[0].mxu0
    %2022 = vdwg.mxu0
    %v2023 = vld [vmem:[#allocation9] sm:$0xf]
    %v2024 = vld [vmem:[#allocation9 + $0x4] sm:$0xf]
    %v2025 = vld [vmem:[#allocation9 + $0x8] sm:$0xf]
    %v2026 = vld [vmem:[#allocation9 + $0xc] sm:$0xf]
    %v2027 = vld [vmem:[#allocation9 + $0x10] sm:$0xf]
    %v2028 = vld [vmem:[#allocation9 + $0x14] sm:$0xf]
    %v2029 = vld [vmem:[#allocation9 + $0x18] sm:$0xf]
    %v2030 = vld [vmem:[#allocation9 + $0x1c] sm:$0xf]
    %v2031 = vld [vmem:[#allocation9 + $0x20] sm:$0xf]
    %v2032 = vpack.c.bf16 %v1989, %v1986
    %v2033 = vpack.c.bf16 %v1997, %v1994
    %v2034 = vpack.c.bf16 %v2005, %v2002
    %v2035 = vpack.c.bf16 %v2013, %v2010
    %v2036 = vpack.c.bf16 %v2018, %v2018
    %s2037 = scalar_lea.vmem %s6, 32
    %v2038 = vld [vmem:[%s2037] sm:$0xf]
    %v2039 = vld [vmem:[%s2037 + $0x4] sm:$0xf]
    %v2040 = vld [vmem:[%s2037 + $0x8] sm:$0xf]
    %v2041 = vld [vmem:[%s2037 + $0xc] sm:$0xf]
    %v2042 = vld [vmem:[%s2037 + $0x10] sm:$0xf]
    %v2043 = vld [vmem:[%s2037 + $0x14] sm:$0xf]
    %v2044 = vld [vmem:[%s2037 + $0x18] sm:$0xf]
    %v2045 = vld [vmem:[%s2037 + $0x1c] sm:$0xf]
    %v2054 = vunpack.c.l.b16 %v2038
    %v2055 = vunpack.c.l.b16 %v2039
    %v2056 = vunpack.c.l.b16 %v2040
    %v2057 = vunpack.c.l.b16 %v2041
    %v2058 = vunpack.c.l.b16 %v2042
    %v2059 = vunpack.c.l.b16 %v2043
    %v2060 = vunpack.c.l.b16 %v2044
    %v2061 = vunpack.c.l.b16 %v2045
    %v2062 = vpack.c.b16 %v2055, %v2054
    %v2063 = vpack.c.b16 %v2057, %v2056
    %v2064 = vpack.c.b16 %v2059, %v2058
    %v2065 = vpack.c.b16 %v2061, %v2060
    %2070 = vmatprep.subr.bf16.mxu0 0
    %2071 = vmatpush1.bf16.msra.mxu0 %v2062
    %2072 = vmatprep.subr.bf16.mxu0 0
    %2073 = vmatpush1.bf16.msra.mxu0 %v2063
    %2074 = vmatprep.subr.bf16.mxu0 0
    %2075 = vmatpush1.bf16.msra.mxu0 %v2064
    %2076 = vmatprep.subr.bf16.mxu0 0
    %2077 = vmatpush1.bf16.msra.mxu0 %v2065
    %2078 = vmatprep.subr.bf16.mxu0 0
    %2079 = vmatpush1.bf16.msra.mxu0 0
    %2080 = vmatprep.subr.bf16.mxu0 0
    %2081 = vmatpush1.bf16.msra.mxu0 0
    %2082 = vmatprep.subr.bf16.mxu0 0
    %2083 = vmatpush1.bf16.msra.mxu0 0
    %2084 = vmatprep.subr.bf16.mxu0 0
    %2085 = vmatpush1.bf16.msra.mxu0 0
    %2086 = vmatprep.subr.bf16.mxu0 0
    %2087 = vmatpush1.bf16.msra.mxu0 0
    %2088 = vmatprep.subr.bf16.mxu0 0
    %2089 = vmatpush1.bf16.msra.mxu0 0
    %2090 = vmatprep.subr.bf16.mxu0 0
    %2091 = vmatpush1.bf16.msra.mxu0 0
    %2092 = vmatprep.subr.bf16.mxu0 0
    %2093 = vmatpush1.bf16.msra.mxu0 0
    %2094 = vmatprep.subr.bf16.mxu0 0
    %2095 = vmatpush1.bf16.msra.mxu0 0
    %2096 = vmatprep.subr.bf16.mxu0 0
    %2097 = vmatpush1.bf16.msra.mxu0 0
    %2098 = vmatprep.subr.bf16.mxu0 0
    %2099 = vmatpush1.bf16.msra.mxu0 0
    %2100 = vmatprep.subr.bf16.mxu0 0
    %2101 = vmatpush1.bf16.msra.mxu0 0
    %2102 = vmatprep.mubr.bf16.mxu0 0
    %2103 = vmatmul.mubr.bf16.gmra.mrb[0].mxu0 %v1941
    %v2104 = vpop.f32.mrb[0].mxu0
    %v2105 = vadd.f32 0.0, %v2104
    %v2106 = vpop.f32.mrb[0].mxu0
    %v2107 = vpop.f32.mrb[0].mxu0
    %v2108 = vadd.f32 0.0, %v2107
    %v2109 = vpop.f32.mrb[0].mxu0
    %2110 = vmatprep.mubr.bf16.mxu0 0
    %2111 = vmatmul.mubr.bf16.gmra.mrb[0].mxu0 %v1943
    %v2112 = vpop.f32.mrb[0].mxu0
    %v2113 = vadd.f32 0.0, %v2112
    %v2114 = vpop.f32.mrb[0].mxu0
    %v2115 = vpop.f32.mrb[0].mxu0
    %v2116 = vadd.f32 0.0, %v2115
    %v2117 = vpop.f32.mrb[0].mxu0
    %2118 = vmatprep.mubr.bf16.mxu0 0
    %2119 = vmatmul.mubr.bf16.gmra.mrb[0].mxu0 %v1945
    %v2120 = vpop.f32.mrb[0].mxu0
    %v2121 = vadd.f32 0.0, %v2120
    %v2122 = vpop.f32.mrb[0].mxu0
    %v2123 = vpop.f32.mrb[0].mxu0
    %v2124 = vadd.f32 0.0, %v2123
    %v2125 = vpop.f32.mrb[0].mxu0
    %2126 = vmatprep.mubr.bf16.mxu0 0
    %2127 = vmatmul.mubr.bf16.gmra.mrb[0].mxu0 %v1947
    %v2128 = vpop.f32.mrb[0].mxu0
    %v2129 = vadd.f32 0.0, %v2128
    %v2130 = vpop.f32.mrb[0].mxu0
    %v2131 = vpop.f32.mrb[0].mxu0
    %v2132 = vadd.f32 0.0, %v2131
    %v2133 = vpop.f32.mrb[0].mxu0
    %2134 = vmatprep.mubr.bf16.mxu0 0
    %2135 = vmatmul.mubr.bf16.gmra.mrb[0].mxu0 %v1949
    %v2136 = vpop.f32.mrb[0].mxu0
    %v2137 = vadd.f32 0.0, %v2136
    %v2138 = vpop.f32.mrb[0].mxu0
    %v2139 = vpop.f32.mrb[0].mxu0
    %v2140 = vpop.f32.mrb[0].mxu0
    %2141 = vdwg.mxu0
    %s2142 = scalar_lea.vmem [#allocation9], 36
    %v2143 = vld [vmem:[%s2142] sm:$0xf]
    %v2144 = vld [vmem:[%s2142 + $0x4] sm:$0xf]
    %v2145 = vld [vmem:[%s2142 + $0x8] sm:$0xf]
    %v2146 = vld [vmem:[%s2142 + $0xc] sm:$0xf]
    %v2147 = vld [vmem:[%s2142 + $0x10] sm:$0xf]
    %v2148 = vld [vmem:[%s2142 + $0x14] sm:$0xf]
    %v2149 = vld [vmem:[%s2142 + $0x18] sm:$0xf]
    %v2150 = vld [vmem:[%s2142 + $0x1c] sm:$0xf]
    %v2151 = vld [vmem:[%s2142 + $0x20] sm:$0xf]
    %v2152 = vpack.c.bf16 %v2108, %v2105
    %v2153 = vpack.c.bf16 %v2116, %v2113
    %v2154 = vpack.c.bf16 %v2124, %v2121
    %v2155 = vpack.c.bf16 %v2132, %v2129
    %v2156 = vpack.c.bf16 %v2137, %v2137
    %v2166 = vunpack.c.l.b16 %v2143
    %v2167 = vunpack.c.l.b16 %v2144
    %v2168 = vunpack.c.l.b16 %v2145
    %v2169 = vunpack.c.l.b16 %v2146
    %v2170 = vunpack.c.l.b16 %v2147
    %v2171 = vunpack.c.l.b16 %v2148
    %v2172 = vunpack.c.l.b16 %v2149
    %v2173 = vunpack.c.l.b16 %v2150
    %v2174 = vunpack.c.l.b16 %v2151
    %v2175 = vpack.c.b16 %v2167, %v2166
    %v2176 = vpack.c.b16 %v2169, %v2168
    %v2177 = vpack.c.b16 %v2171, %v2170
    %v2178 = vpack.c.b16 %v2173, %v2172
    %v2179 = vpack.c.b16 %v2174, %v2174
    %v2181 = vsel %vm471, %v2175, 0
    %v2184 = vsel %vm471, %v2176, 0
    %v2187 = vsel %vm471, %v2177, 0
    %v2190 = vsel %vm471, %v2178, 0
    %v2193 = vsel %vm471, %v2179, 0
    %v2196 = vsel %vm487, %v2156, 0
    %2198 = vmatprep.subr.bf16.mxu0 0
    %2199 = vmatpush1.bf16.msra.mxu0 %v2152
    %2200 = vmatprep.subr.bf16.mxu0 0
    %2201 = vmatpush1.bf16.msra.mxu0 %v2153
    %2202 = vmatprep.subr.bf16.mxu0 0
    %2203 = vmatpush1.bf16.msra.mxu0 %v2154
    %2204 = vmatprep.subr.bf16.mxu0 0
    %2205 = vmatpush1.bf16.msra.mxu0 %v2155
    %2206 = vmatprep.subr.bf16.mxu0 0
    %2207 = vmatpush1.bf16.msra.mxu0 %v2196
    %2208 = vmatprep.subr.bf16.mxu0 0
    %2209 = vmatpush1.bf16.msra.mxu0 0
    %2210 = vmatprep.subr.bf16.mxu0 0
    %2211 = vmatpush1.bf16.msra.mxu0 0
    %2212 = vmatprep.subr.bf16.mxu0 0
    %2213 = vmatpush1.bf16.msra.mxu0 0
    %2214 = vmatprep.subr.bf16.mxu0 0
    %2215 = vmatpush1.bf16.msra.mxu0 0
    %2216 = vmatprep.subr.bf16.mxu0 0
    %2217 = vmatpush1.bf16.msra.mxu0 0
    %2218 = vmatprep.subr.bf16.mxu0 0
    %2219 = vmatpush1.bf16.msra.mxu0 0
    %2220 = vmatprep.subr.bf16.mxu0 0
    %2221 = vmatpush1.bf16.msra.mxu0 0
    %2222 = vmatprep.subr.bf16.mxu0 0
    %2223 = vmatpush1.bf16.msra.mxu0 0
    %2224 = vmatprep.subr.bf16.mxu0 0
    %2225 = vmatpush1.bf16.msra.mxu0 0
    %2226 = vmatprep.subr.bf16.mxu0 0
    %2227 = vmatpush1.bf16.msra.mxu0 0
    %2228 = vmatprep.subr.bf16.mxu0 0
    %2229 = vmatpush1.bf16.msra.mxu0 0
    %2230 = vmatprep.mubr.bf16.mxu0 0
    %2231 = vmatmul.mubr.bf16.gmra.mrb[0].mxu0 %v2181
    %v2232 = vpop.f32.mrb[0].mxu0
    %v2233 = vadd.f32 0.0, %v2232
    %v2234 = vpop.f32.mrb[0].mxu0
    %v2235 = vpop.f32.mrb[0].mxu0
    %v2236 = vadd.f32 0.0, %v2235
    %v2237 = vpop.f32.mrb[0].mxu0
    %2238 = vmatprep.mubr.bf16.mxu0 0
    %2239 = vmatmul.mubr.bf16.gmra.mrb[0].mxu0 %v2184
    %v2240 = vpop.f32.mrb[0].mxu0
    %v2241 = vadd.f32 0.0, %v2240
    %v2242 = vpop.f32.mrb[0].mxu0
    %v2243 = vpop.f32.mrb[0].mxu0
    %v2244 = vadd.f32 0.0, %v2243
    %v2245 = vpop.f32.mrb[0].mxu0
    %2246 = vmatprep.mubr.bf16.mxu0 0
    %2247 = vmatmul.mubr.bf16.gmra.mrb[0].mxu0 %v2187
    %v2248 = vpop.f32.mrb[0].mxu0
    %v2249 = vadd.f32 0.0, %v2248
    %v2250 = vpop.f32.mrb[0].mxu0
    %v2251 = vpop.f32.mrb[0].mxu0
    %v2252 = vadd.f32 0.0, %v2251
    %v2253 = vpop.f32.mrb[0].mxu0
    %2254 = vmatprep.mubr.bf16.mxu0 0
    %2255 = vmatmul.mubr.bf16.gmra.mrb[0].mxu0 %v2190
    %v2256 = vpop.f32.mrb[0].mxu0
    %v2257 = vadd.f32 0.0, %v2256
    %v2258 = vpop.f32.mrb[0].mxu0
    %v2259 = vpop.f32.mrb[0].mxu0
    %v2260 = vadd.f32 0.0, %v2259
    %v2261 = vpop.f32.mrb[0].mxu0
    %2262 = vmatprep.mubr.bf16.mxu0 0
    %2263 = vmatmul.mubr.bf16.gmra.mrb[0].mxu0 %v2193
    %v2264 = vpop.f32.mrb[0].mxu0
    %v2265 = vadd.f32 0.0, %v2264
    %v2266 = vpop.f32.mrb[0].mxu0
    %v2267 = vpop.f32.mrb[0].mxu0
    %v2268 = vpop.f32.mrb[0].mxu0
    %2269 = vdwg.mxu0
    %v2279 = vunpack.c.l.b16 %v2023
    %v2280 = vunpack.c.l.b16 %v2024
    %v2281 = vunpack.c.l.b16 %v2025
    %v2282 = vunpack.c.l.b16 %v2026
    %v2283 = vunpack.c.l.b16 %v2027
    %v2284 = vunpack.c.l.b16 %v2028
    %v2285 = vunpack.c.l.b16 %v2029
    %v2286 = vunpack.c.l.b16 %v2030
    %v2287 = vunpack.c.l.b16 %v2031
    %v2288 = vpack.c.b16 %v2280, %v2279
    %v2289 = vpack.c.b16 %v2282, %v2281
    %v2290 = vpack.c.b16 %v2284, %v2283
    %v2291 = vpack.c.b16 %v2286, %v2285
    %v2292 = vpack.c.b16 %v2287, %v2287
    %v2294 = vsel %vm471, %v2288, 0
    %v2297 = vsel %vm471, %v2289, 0
    %v2300 = vsel %vm471, %v2290, 0
    %v2303 = vsel %vm471, %v2291, 0
    %v2306 = vsel %vm471, %v2292, 0
    %v2309 = vsel %vm487, %v2036, 0
    %2311 = vmatprep.subr.bf16.mxu0 0
    %2312 = vmatpush1.bf16.msra.mxu0 %v2032
    %2313 = vmatprep.subr.bf16.mxu0 0
    %2314 = vmatpush1.bf16.msra.mxu0 %v2033
    %2315 = vmatprep.subr.bf16.mxu0 0
    %2316 = vmatpush1.bf16.msra.mxu0 %v2034
    %2317 = vmatprep.subr.bf16.mxu0 0
    %2318 = vmatpush1.bf16.msra.mxu0 %v2035
    %2319 = vmatprep.subr.bf16.mxu0 0
    %2320 = vmatpush1.bf16.msra.mxu0 %v2309
    %2321 = vmatprep.subr.bf16.mxu0 0
    %2322 = vmatpush1.bf16.msra.mxu0 0
    %2323 = vmatprep.subr.bf16.mxu0 0
    %2324 = vmatpush1.bf16.msra.mxu0 0
    %2325 = vmatprep.subr.bf16.mxu0 0
    %2326 = vmatpush1.bf16.msra.mxu0 0
    %2327 = vmatprep.subr.bf16.mxu0 0
    %2328 = vmatpush1.bf16.msra.mxu0 0
    %2329 = vmatprep.subr.bf16.mxu0 0
    %2330 = vmatpush1.bf16.msra.mxu0 0
    %2331 = vmatprep.subr.bf16.mxu0 0
    %2332 = vmatpush1.bf16.msra.mxu0 0
    %2333 = vmatprep.subr.bf16.mxu0 0
    %2334 = vmatpush1.bf16.msra.mxu0 0
    %2335 = vmatprep.subr.bf16.mxu0 0
    %2336 = vmatpush1.bf16.msra.mxu0 0
    %2337 = vmatprep.subr.bf16.mxu0 0
    %2338 = vmatpush1.bf16.msra.mxu0 0
    %2339 = vmatprep.subr.bf16.mxu0 0
    %2340 = vmatpush1.bf16.msra.mxu0 0
    %2341 = vmatprep.subr.bf16.mxu0 0
    %2342 = vmatpush1.bf16.msra.mxu0 0
    %2343 = vmatprep.mubr.bf16.mxu0 0
    %2344 = vmatmul.mubr.bf16.gmra.mrb[0].mxu0 %v2294
    %v2345 = vpop.f32.mrb[0].mxu0
    %v2346 = vadd.f32 %v2233, %v2345
    %v2347 = vpop.f32.mrb[0].mxu0
    %v2348 = vpop.f32.mrb[0].mxu0
    %v2349 = vadd.f32 %v2236, %v2348
    %v2350 = vpop.f32.mrb[0].mxu0
    %2351 = vmatprep.mubr.bf16.mxu0 0
    %2352 = vmatmul.mubr.bf16.gmra.mrb[0].mxu0 %v2297
    %v2353 = vpop.f32.mrb[0].mxu0
    %v2354 = vadd.f32 %v2241, %v2353
    %v2355 = vpop.f32.mrb[0].mxu0
    %v2356 = vpop.f32.mrb[0].mxu0
    %v2357 = vadd.f32 %v2244, %v2356
    %v2358 = vpop.f32.mrb[0].mxu0
    %2359 = vmatprep.mubr.bf16.mxu0 0
    %2360 = vmatmul.mubr.bf16.gmra.mrb[0].mxu0 %v2300
    %v2361 = vpop.f32.mrb[0].mxu0
    %v2362 = vadd.f32 %v2249, %v2361
    %v2363 = vpop.f32.mrb[0].mxu0
    %v2364 = vpop.f32.mrb[0].mxu0
    %v2365 = vadd.f32 %v2252, %v2364
    %v2366 = vpop.f32.mrb[0].mxu0
    %2367 = vmatprep.mubr.bf16.mxu0 0
    %2368 = vmatmul.mubr.bf16.gmra.mrb[0].mxu0 %v2303
    %v2369 = vpop.f32.mrb[0].mxu0
    %v2370 = vadd.f32 %v2257, %v2369
    %v2371 = vpop.f32.mrb[0].mxu0
    %v2372 = vpop.f32.mrb[0].mxu0
    %v2373 = vadd.f32 %v2260, %v2372
    %v2374 = vpop.f32.mrb[0].mxu0
    %2375 = vmatprep.mubr.bf16.mxu0 0
    %2376 = vmatmul.mubr.bf16.gmra.mrb[0].mxu0 %v2306
    %v2377 = vpop.f32.mrb[0].mxu0
    %v2378 = vadd.f32 %v2265, %v2377
    %v2379 = vpop.f32.mrb[0].mxu0
    %v2380 = vpop.f32.mrb[0].mxu0
    %v2381 = vpop.f32.mrb[0].mxu0
    %2382 = vdwg.mxu0
    %s2383 = scalar_lea.vmem %s6, 64
    %v2384 = vld [vmem:[%s2383] sm:$0xf]
    %v2385 = vld [vmem:[%s2383 + $0x4] sm:$0xf]
    %v2386 = vld [vmem:[%s2383 + $0x8] sm:$0xf]
    %v2387 = vld [vmem:[%s2383 + $0xc] sm:$0xf]
    %v2388 = vld [vmem:[%s2383 + $0x10] sm:$0xf]
    %v2389 = vld [vmem:[%s2383 + $0x14] sm:$0xf]
    %v2390 = vld [vmem:[%s2383 + $0x18] sm:$0xf]
    %v2391 = vld [vmem:[%s2383 + $0x1c] sm:$0xf]
    %v2400 = vunpack.c.l.b16 %v2384
    %v2401 = vunpack.c.l.b16 %v2385
    %v2402 = vunpack.c.l.b16 %v2386
    %v2403 = vunpack.c.l.b16 %v2387
    %v2404 = vunpack.c.l.b16 %v2388
    %v2405 = vunpack.c.l.b16 %v2389
    %v2406 = vunpack.c.l.b16 %v2390
    %v2407 = vunpack.c.l.b16 %v2391
    %v2408 = vpack.c.b16 %v2401, %v2400
    %v2409 = vpack.c.b16 %v2403, %v2402
    %v2410 = vpack.c.b16 %v2405, %v2404
    %v2411 = vpack.c.b16 %v2407, %v2406
    %2416 = vmatprep.subr.bf16.mxu0 0
    %2417 = vmatpush1.bf16.msra.mxu0 %v2408
    %2418 = vmatprep.subr.bf16.mxu0 0
    %2419 = vmatpush1.bf16.msra.mxu0 %v2409
    %2420 = vmatprep.subr.bf16.mxu0 0
    %2421 = vmatpush1.bf16.msra.mxu0 %v2410
    %2422 = vmatprep.subr.bf16.mxu0 0
    %2423 = vmatpush1.bf16.msra.mxu0 %v2411
    %2424 = vmatprep.subr.bf16.mxu0 0
    %2425 = vmatpush1.bf16.msra.mxu0 0
    %2426 = vmatprep.subr.bf16.mxu0 0
    %2427 = vmatpush1.bf16.msra.mxu0 0
    %2428 = vmatprep.subr.bf16.mxu0 0
    %2429 = vmatpush1.bf16.msra.mxu0 0
    %2430 = vmatprep.subr.bf16.mxu0 0
    %2431 = vmatpush1.bf16.msra.mxu0 0
    %2432 = vmatprep.subr.bf16.mxu0 0
    %2433 = vmatpush1.bf16.msra.mxu0 0
    %2434 = vmatprep.subr.bf16.mxu0 0
    %2435 = vmatpush1.bf16.msra.mxu0 0
    %2436 = vmatprep.subr.bf16.mxu0 0
    %2437 = vmatpush1.bf16.msra.mxu0 0
    %2438 = vmatprep.subr.bf16.mxu0 0
    %2439 = vmatpush1.bf16.msra.mxu0 0
    %2440 = vmatprep.subr.bf16.mxu0 0
    %2441 = vmatpush1.bf16.msra.mxu0 0
    %2442 = vmatprep.subr.bf16.mxu0 0
    %2443 = vmatpush1.bf16.msra.mxu0 0
    %2444 = vmatprep.subr.bf16.mxu0 0
    %2445 = vmatpush1.bf16.msra.mxu0 0
    %2446 = vmatprep.subr.bf16.mxu0 0
    %2447 = vmatpush1.bf16.msra.mxu0 0
    %2448 = vmatprep.mubr.bf16.mxu0 0
    %2449 = vmatmul.mubr.bf16.gmra.mrb[0].mxu0 %v1941
    %v2450 = vpop.f32.mrb[0].mxu0
    %v2451 = vadd.f32 0.0, %v2450
    %v2452 = vpop.f32.mrb[0].mxu0
    %v2453 = vpop.f32.mrb[0].mxu0
    %v2454 = vadd.f32 0.0, %v2453
    %v2455 = vpop.f32.mrb[0].mxu0
    %2456 = vmatprep.mubr.bf16.mxu0 0
    %2457 = vmatmul.mubr.bf16.gmra.mrb[0].mxu0 %v1943
    %v2458 = vpop.f32.mrb[0].mxu0
    %v2459 = vadd.f32 0.0, %v2458
    %v2460 = vpop.f32.mrb[0].mxu0
    %v2461 = vpop.f32.mrb[0].mxu0
    %v2462 = vadd.f32 0.0, %v2461
    %v2463 = vpop.f32.mrb[0].mxu0
    %2464 = vmatprep.mubr.bf16.mxu0 0
    %2465 = vmatmul.mubr.bf16.gmra.mrb[0].mxu0 %v1945
    %v2466 = vpop.f32.mrb[0].mxu0
    %v2467 = vadd.f32 0.0, %v2466
    %v2468 = vpop.f32.mrb[0].mxu0
    %v2469 = vpop.f32.mrb[0].mxu0
    %v2470 = vadd.f32 0.0, %v2469
    %v2471 = vpop.f32.mrb[0].mxu0
    %2472 = vmatprep.mubr.bf16.mxu0 0
    %2473 = vmatmul.mubr.bf16.gmra.mrb[0].mxu0 %v1947
    %v2474 = vpop.f32.mrb[0].mxu0
    %v2475 = vadd.f32 0.0, %v2474
    %v2476 = vpop.f32.mrb[0].mxu0
    %v2477 = vpop.f32.mrb[0].mxu0
    %v2478 = vadd.f32 0.0, %v2477
    %v2479 = vpop.f32.mrb[0].mxu0
    %2480 = vmatprep.mubr.bf16.mxu0 0
    %2481 = vmatmul.mubr.bf16.gmra.mrb[0].mxu0 %v1949
    %v2482 = vpop.f32.mrb[0].mxu0
    %v2483 = vadd.f32 0.0, %v2482
    %v2484 = vpop.f32.mrb[0].mxu0
    %v2485 = vpop.f32.mrb[0].mxu0
    %v2486 = vpop.f32.mrb[0].mxu0
    %2487 = vdwg.mxu0
    %s2488 = scalar_lea.vmem [#allocation9], 72
    %v2489 = vld [vmem:[%s2488] sm:$0xf]
    %v2490 = vld [vmem:[%s2488 + $0x4] sm:$0xf]
    %v2491 = vld [vmem:[%s2488 + $0x8] sm:$0xf]
    %v2492 = vld [vmem:[%s2488 + $0xc] sm:$0xf]
    %v2493 = vld [vmem:[%s2488 + $0x10] sm:$0xf]
    %v2494 = vld [vmem:[%s2488 + $0x14] sm:$0xf]
    %v2495 = vld [vmem:[%s2488 + $0x18] sm:$0xf]
    %v2496 = vld [vmem:[%s2488 + $0x1c] sm:$0xf]
    %v2497 = vld [vmem:[%s2488 + $0x20] sm:$0xf]
    %v2498 = vpack.c.bf16 %v2454, %v2451
    %v2499 = vpack.c.bf16 %v2462, %v2459
    %v2500 = vpack.c.bf16 %v2470, %v2467
    %v2501 = vpack.c.bf16 %v2478, %v2475
    %v2502 = vpack.c.bf16 %v2483, %v2483
    %v2512 = vunpack.c.l.b16 %v2489
    %v2513 = vunpack.c.l.b16 %v2490
    %v2514 = vunpack.c.l.b16 %v2491
    %v2515 = vunpack.c.l.b16 %v2492
    %v2516 = vunpack.c.l.b16 %v2493
    %v2517 = vunpack.c.l.b16 %v2494
    %v2518 = vunpack.c.l.b16 %v2495
    %v2519 = vunpack.c.l.b16 %v2496
    %v2520 = vunpack.c.l.b16 %v2497
    %v2521 = vpack.c.b16 %v2513, %v2512
    %v2522 = vpack.c.b16 %v2515, %v2514
    %v2523 = vpack.c.b16 %v2517, %v2516
    %v2524 = vpack.c.b16 %v2519, %v2518
    %v2525 = vpack.c.b16 %v2520, %v2520
    %v2527 = vsel %vm471, %v2521, 0
    %v2530 = vsel %vm471, %v2522, 0
    %v2533 = vsel %vm471, %v2523, 0
    %v2536 = vsel %vm471, %v2524, 0
    %v2539 = vsel %vm471, %v2525, 0
    %v2542 = vsel %vm487, %v2502, 0
    %2544 = vmatprep.subr.bf16.mxu0 0
    %2545 = vmatpush1.bf16.msra.mxu0 %v2498
    %2546 = vmatprep.subr.bf16.mxu0 0
    %2547 = vmatpush1.bf16.msra.mxu0 %v2499
    %2548 = vmatprep.subr.bf16.mxu0 0
    %2549 = vmatpush1.bf16.msra.mxu0 %v2500
    %2550 = vmatprep.subr.bf16.mxu0 0
    %2551 = vmatpush1.bf16.msra.mxu0 %v2501
    %2552 = vmatprep.subr.bf16.mxu0 0
    %2553 = vmatpush1.bf16.msra.mxu0 %v2542
    %2554 = vmatprep.subr.bf16.mxu0 0
    %2555 = vmatpush1.bf16.msra.mxu0 0
    %2556 = vmatprep.subr.bf16.mxu0 0
    %2557 = vmatpush1.bf16.msra.mxu0 0
    %2558 = vmatprep.subr.bf16.mxu0 0
    %2559 = vmatpush1.bf16.msra.mxu0 0
    %2560 = vmatprep.subr.bf16.mxu0 0
    %2561 = vmatpush1.bf16.msra.mxu0 0
    %2562 = vmatprep.subr.bf16.mxu0 0
    %2563 = vmatpush1.bf16.msra.mxu0 0
    %2564 = vmatprep.subr.bf16.mxu0 0
    %2565 = vmatpush1.bf16.msra.mxu0 0
    %2566 = vmatprep.subr.bf16.mxu0 0
    %2567 = vmatpush1.bf16.msra.mxu0 0
    %2568 = vmatprep.subr.bf16.mxu0 0
    %2569 = vmatpush1.bf16.msra.mxu0 0
    %2570 = vmatprep.subr.bf16.mxu0 0
    %2571 = vmatpush1.bf16.msra.mxu0 0
    %2572 = vmatprep.subr.bf16.mxu0 0
    %2573 = vmatpush1.bf16.msra.mxu0 0
    %2574 = vmatprep.subr.bf16.mxu0 0
    %2575 = vmatpush1.bf16.msra.mxu0 0
    %2576 = vmatprep.mubr.bf16.mxu0 0
    %2577 = vmatmul.mubr.bf16.gmra.mrb[0].mxu0 %v2527
    %v2578 = vpop.f32.mrb[0].mxu0
    %v2579 = vadd.f32 0.0, %v2578
    %v2580 = vpop.f32.mrb[0].mxu0
    %v2581 = vpop.f32.mrb[0].mxu0
    %v2582 = vadd.f32 0.0, %v2581
    %v2583 = vpop.f32.mrb[0].mxu0
    %2584 = vmatprep.mubr.bf16.mxu0 0
    %2585 = vmatmul.mubr.bf16.gmra.mrb[0].mxu0 %v2530
    %v2586 = vpop.f32.mrb[0].mxu0
    %v2587 = vadd.f32 0.0, %v2586
    %v2588 = vpop.f32.mrb[0].mxu0
    %v2589 = vpop.f32.mrb[0].mxu0
    %v2590 = vadd.f32 0.0, %v2589
    %v2591 = vpop.f32.mrb[0].mxu0
    %2592 = vmatprep.mubr.bf16.mxu0 0
    %2593 = vmatmul.mubr.bf16.gmra.mrb[0].mxu0 %v2533
    %v2594 = vpop.f32.mrb[0].mxu0
    %v2595 = vadd.f32 0.0, %v2594
    %v2596 = vpop.f32.mrb[0].mxu0
    %v2597 = vpop.f32.mrb[0].mxu0
    %v2598 = vadd.f32 0.0, %v2597
    %v2599 = vpop.f32.mrb[0].mxu0
    %2600 = vmatprep.mubr.bf16.mxu0 0
    %2601 = vmatmul.mubr.bf16.gmra.mrb[0].mxu0 %v2536
    %v2602 = vpop.f32.mrb[0].mxu0
    %v2603 = vadd.f32 0.0, %v2602
    %v2604 = vpop.f32.mrb[0].mxu0
    %v2605 = vpop.f32.mrb[0].mxu0
    %v2606 = vadd.f32 0.0, %v2605
    %v2607 = vpop.f32.mrb[0].mxu0
    %2608 = vmatprep.mubr.bf16.mxu0 0
    %2609 = vmatmul.mubr.bf16.gmra.mrb[0].mxu0 %v2539
    %v2610 = vpop.f32.mrb[0].mxu0
    %v2611 = vadd.f32 0.0, %v2610
    %v2612 = vpop.f32.mrb[0].mxu0
    %v2613 = vpop.f32.mrb[0].mxu0
    %v2614 = vpop.f32.mrb[0].mxu0
    %2615 = vdwg.mxu0
    %v2616 = vadd.f32 %v2346, %v2579
    %v2617 = vadd.f32 %v2349, %v2582
    %v2618 = vadd.f32 %v2354, %v2587
    %v2619 = vadd.f32 %v2357, %v2590
    %v2620 = vadd.f32 %v2362, %v2595
    %v2621 = vadd.f32 %v2365, %v2598
    %v2622 = vadd.f32 %v2370, %v2603
    %v2623 = vadd.f32 %v2373, %v2606
    %v2624 = vadd.f32 %v2378, %v2611
    %s2625 = scalar_lea.vmem %s6, 96
    %v2626 = vld [vmem:[%s2625] sm:$0xf]
    %v2627 = vld [vmem:[%s2625 + $0x4] sm:$0xf]
    %v2628 = vld [vmem:[%s2625 + $0x8] sm:$0xf]
    %v2629 = vld [vmem:[%s2625 + $0xc] sm:$0xf]
    %v2630 = vld [vmem:[%s2625 + $0x10] sm:$0xf]
    %v2631 = vld [vmem:[%s2625 + $0x14] sm:$0xf]
    %v2632 = vld [vmem:[%s2625 + $0x18] sm:$0xf]
    %v2633 = vld [vmem:[%s2625 + $0x1c] sm:$0xf]
    %v2642 = vunpack.c.l.b16 %v2626
    %v2643 = vunpack.c.l.b16 %v2627
    %v2644 = vunpack.c.l.b16 %v2628
    %v2645 = vunpack.c.l.b16 %v2629
    %v2646 = vunpack.c.l.b16 %v2630
    %v2647 = vunpack.c.l.b16 %v2631
    %v2648 = vunpack.c.l.b16 %v2632
    %v2649 = vunpack.c.l.b16 %v2633
    %v2650 = vpack.c.b16 %v2643, %v2642
    %v2651 = vpack.c.b16 %v2645, %v2644
    %v2652 = vpack.c.b16 %v2647, %v2646
    %v2653 = vpack.c.b16 %v2649, %v2648
    %2658 = vmatprep.subr.bf16.mxu0 0
    %2659 = vmatpush1.bf16.msra.mxu0 %v2650
    %2660 = vmatprep.subr.bf16.mxu0 0
    %2661 = vmatpush1.bf16.msra.mxu0 %v2651
    %2662 = vmatprep.subr.bf16.mxu0 0
    %2663 = vmatpush1.bf16.msra.mxu0 %v2652
    %2664 = vmatprep.subr.bf16.mxu0 0
    %2665 = vmatpush1.bf16.msra.mxu0 %v2653
    %2666 = vmatprep.subr.bf16.mxu0 0
    %2667 = vmatpush1.bf16.msra.mxu0 0
    %2668 = vmatprep.subr.bf16.mxu0 0
    %2669 = vmatpush1.bf16.msra.mxu0 0
    %2670 = vmatprep.subr.bf16.mxu0 0
    %2671 = vmatpush1.bf16.msra.mxu0 0
    %2672 = vmatprep.subr.bf16.mxu0 0
    %2673 = vmatpush1.bf16.msra.mxu0 0
    %2674 = vmatprep.subr.bf16.mxu0 0
    %2675 = vmatpush1.bf16.msra.mxu0 0
    %2676 = vmatprep.subr.bf16.mxu0 0
    %2677 = vmatpush1.bf16.msra.mxu0 0
    %2678 = vmatprep.subr.bf16.mxu0 0
    %2679 = vmatpush1.bf16.msra.mxu0 0
    %2680 = vmatprep.subr.bf16.mxu0 0
    %2681 = vmatpush1.bf16.msra.mxu0 0
    %2682 = vmatprep.subr.bf16.mxu0 0
    %2683 = vmatpush1.bf16.msra.mxu0 0
    %2684 = vmatprep.subr.bf16.mxu0 0
    %2685 = vmatpush1.bf16.msra.mxu0 0
    %2686 = vmatprep.subr.bf16.mxu0 0
    %2687 = vmatpush1.bf16.msra.mxu0 0
    %2688 = vmatprep.subr.bf16.mxu0 0
    %2689 = vmatpush1.bf16.msra.mxu0 0
    %2690 = vmatprep.mubr.bf16.mxu0 0
    %2691 = vmatmul.mubr.bf16.gmra.mrb[0].mxu0 %v1941
    %v2692 = vpop.f32.mrb[0].mxu0
    %v2693 = vadd.f32 0.0, %v2692
    %v2694 = vpop.f32.mrb[0].mxu0
    %v2695 = vpop.f32.mrb[0].mxu0
    %v2696 = vadd.f32 0.0, %v2695
    %v2697 = vpop.f32.mrb[0].mxu0
    %2698 = vmatprep.mubr.bf16.mxu0 0
    %2699 = vmatmul.mubr.bf16.gmra.mrb[0].mxu0 %v1943
    %v2700 = vpop.f32.mrb[0].mxu0
    %v2701 = vadd.f32 0.0, %v2700
    %v2702 = vpop.f32.mrb[0].mxu0
    %v2703 = vpop.f32.mrb[0].mxu0
    %v2704 = vadd.f32 0.0, %v2703
    %v2705 = vpop.f32.mrb[0].mxu0
    %2706 = vmatprep.mubr.bf16.mxu0 0
    %2707 = vmatmul.mubr.bf16.gmra.mrb[0].mxu0 %v1945
    %v2708 = vpop.f32.mrb[0].mxu0
    %v2709 = vadd.f32 0.0, %v2708
    %v2710 = vpop.f32.mrb[0].mxu0
    %v2711 = vpop.f32.mrb[0].mxu0
    %v2712 = vadd.f32 0.0, %v2711
    %v2713 = vpop.f32.mrb[0].mxu0
    %2714 = vmatprep.mubr.bf16.mxu0 0
    %2715 = vmatmul.mubr.bf16.gmra.mrb[0].mxu0 %v1947
    %v2716 = vpop.f32.mrb[0].mxu0
    %v2717 = vadd.f32 0.0, %v2716
    %v2718 = vpop.f32.mrb[0].mxu0
    %v2719 = vpop.f32.mrb[0].mxu0
    %v2720 = vadd.f32 0.0, %v2719
    %v2721 = vpop.f32.mrb[0].mxu0
    %2722 = vmatprep.mubr.bf16.mxu0 0
    %2723 = vmatmul.mubr.bf16.gmra.mrb[0].mxu0 %v1949
    %v2724 = vpop.f32.mrb[0].mxu0
    %v2725 = vadd.f32 0.0, %v2724
    %v2726 = vpop.f32.mrb[0].mxu0
    %v2727 = vpop.f32.mrb[0].mxu0
    %v2728 = vpop.f32.mrb[0].mxu0
    %2729 = vdwg.mxu0
    %s2730 = scalar_lea.vmem [#allocation9], 108
    %v2731 = vld [vmem:[%s2730] sm:$0xf]
    %v2732 = vld [vmem:[%s2730 + $0x4] sm:$0xf]
    %v2733 = vld [vmem:[%s2730 + $0x8] sm:$0xf]
    %v2734 = vld [vmem:[%s2730 + $0xc] sm:$0xf]
    %v2735 = vld [vmem:[%s2730 + $0x10] sm:$0xf]
    %v2736 = vld [vmem:[%s2730 + $0x14] sm:$0xf]
    %v2737 = vld [vmem:[%s2730 + $0x18] sm:$0xf]
    %v2738 = vld [vmem:[%s2730 + $0x1c] sm:$0xf]
    %v2739 = vld [vmem:[%s2730 + $0x20] sm:$0xf]
    %v2740 = vpack.c.bf16 %v2696, %v2693
    %v2741 = vpack.c.bf16 %v2704, %v2701
    %v2742 = vpack.c.bf16 %v2712, %v2709
    %v2743 = vpack.c.bf16 %v2720, %v2717
    %v2744 = vpack.c.bf16 %v2725, %v2725
    %v2754 = vunpack.c.l.b16 %v2731
    %v2755 = vunpack.c.l.b16 %v2732
    %v2756 = vunpack.c.l.b16 %v2733
    %v2757 = vunpack.c.l.b16 %v2734
    %v2758 = vunpack.c.l.b16 %v2735
    %v2759 = vunpack.c.l.b16 %v2736
    %v2760 = vunpack.c.l.b16 %v2737
    %v2761 = vunpack.c.l.b16 %v2738
    %v2762 = vunpack.c.l.b16 %v2739
    %v2763 = vpack.c.b16 %v2755, %v2754
    %v2764 = vpack.c.b16 %v2757, %v2756
    %v2765 = vpack.c.b16 %v2759, %v2758
    %v2766 = vpack.c.b16 %v2761, %v2760
    %v2767 = vpack.c.b16 %v2762, %v2762
    %v2769 = vsel %vm471, %v2763, 0
    %v2772 = vsel %vm471, %v2764, 0
    %v2775 = vsel %vm471, %v2765, 0
    %v2778 = vsel %vm471, %v2766, 0
    %v2781 = vsel %vm471, %v2767, 0
    %v2784 = vsel %vm487, %v2744, 0
    %2786 = vmatprep.subr.bf16.mxu0 0
    %2787 = vmatpush1.bf16.msra.mxu0 %v2740
    %2788 = vmatprep.subr.bf16.mxu0 0
    %2789 = vmatpush1.bf16.msra.mxu0 %v2741
    %2790 = vmatprep.subr.bf16.mxu0 0
    %2791 = vmatpush1.bf16.msra.mxu0 %v2742
    %2792 = vmatprep.subr.bf16.mxu0 0
    %2793 = vmatpush1.bf16.msra.mxu0 %v2743
    %2794 = vmatprep.subr.bf16.mxu0 0
    %2795 = vmatpush1.bf16.msra.mxu0 %v2784
    %2796 = vmatprep.subr.bf16.mxu0 0
    %2797 = vmatpush1.bf16.msra.mxu0 0
    %2798 = vmatprep.subr.bf16.mxu0 0
    %2799 = vmatpush1.bf16.msra.mxu0 0
    %2800 = vmatprep.subr.bf16.mxu0 0
    %2801 = vmatpush1.bf16.msra.mxu0 0
    %2802 = vmatprep.subr.bf16.mxu0 0
    %2803 = vmatpush1.bf16.msra.mxu0 0
    %2804 = vmatprep.subr.bf16.mxu0 0
    %2805 = vmatpush1.bf16.msra.mxu0 0
    %2806 = vmatprep.subr.bf16.mxu0 0
    %2807 = vmatpush1.bf16.msra.mxu0 0
    %2808 = vmatprep.subr.bf16.mxu0 0
    %2809 = vmatpush1.bf16.msra.mxu0 0
    %2810 = vmatprep.subr.bf16.mxu0 0
    %2811 = vmatpush1.bf16.msra.mxu0 0
    %2812 = vmatprep.subr.bf16.mxu0 0
    %2813 = vmatpush1.bf16.msra.mxu0 0
    %2814 = vmatprep.subr.bf16.mxu0 0
    %2815 = vmatpush1.bf16.msra.mxu0 0
    %2816 = vmatprep.subr.bf16.mxu0 0
    %2817 = vmatpush1.bf16.msra.mxu0 0
    %2818 = vmatprep.mubr.bf16.mxu0 0
    %2819 = vmatmul.mubr.bf16.gmra.mrb[0].mxu0 %v2769
    %v2820 = vpop.f32.mrb[0].mxu0
    %v2821 = vadd.f32 0.0, %v2820
    %v2822 = vpop.f32.mrb[0].mxu0
    %v2823 = vpop.f32.mrb[0].mxu0
    %v2824 = vadd.f32 0.0, %v2823
    %v2825 = vpop.f32.mrb[0].mxu0
    %2826 = vmatprep.mubr.bf16.mxu0 0
    %2827 = vmatmul.mubr.bf16.gmra.mrb[0].mxu0 %v2772
    %v2828 = vpop.f32.mrb[0].mxu0
    %v2829 = vadd.f32 0.0, %v2828
    %v2830 = vpop.f32.mrb[0].mxu0
    %v2831 = vpop.f32.mrb[0].mxu0
    %v2832 = vadd.f32 0.0, %v2831
    %v2833 = vpop.f32.mrb[0].mxu0
    %2834 = vmatprep.mubr.bf16.mxu0 0
    %2835 = vmatmul.mubr.bf16.gmra.mrb[0].mxu0 %v2775
    %v2836 = vpop.f32.mrb[0].mxu0
    %v2837 = vadd.f32 0.0, %v2836
    %v2838 = vpop.f32.mrb[0].mxu0
    %v2839 = vpop.f32.mrb[0].mxu0
    %v2840 = vadd.f32 0.0, %v2839
    %v2841 = vpop.f32.mrb[0].mxu0
    %2842 = vmatprep.mubr.bf16.mxu0 0
    %2843 = vmatmul.mubr.bf16.gmra.mrb[0].mxu0 %v2778
    %v2844 = vpop.f32.mrb[0].mxu0
    %v2845 = vadd.f32 0.0, %v2844
    %v2846 = vpop.f32.mrb[0].mxu0
    %v2847 = vpop.f32.mrb[0].mxu0
    %v2848 = vadd.f32 0.0, %v2847
    %v2849 = vpop.f32.mrb[0].mxu0
    %2850 = vmatprep.mubr.bf16.mxu0 0
    %2851 = vmatmul.mubr.bf16.gmra.mrb[0].mxu0 %v2781
    %v2852 = vpop.f32.mrb[0].mxu0
    %v2853 = vadd.f32 0.0, %v2852
    %v2854 = vpop.f32.mrb[0].mxu0
    %v2855 = vpop.f32.mrb[0].mxu0
    %v2856 = vpop.f32.mrb[0].mxu0
    %2857 = vdwg.mxu0
    %v2858 = vadd.f32 %v2616, %v2821
    %v2859 = vadd.f32 %v2617, %v2824
    %v2860 = vadd.f32 %v2618, %v2829
    %v2861 = vadd.f32 %v2619, %v2832
    %v2862 = vadd.f32 %v2620, %v2837
    %v2863 = vadd.f32 %v2621, %v2840
    %v2864 = vadd.f32 %v2622, %v2845
    %v2865 = vadd.f32 %v2623, %v2848
    %v2866 = vadd.f32 %v2624, %v2853
    %s2867 = scalar_lea.vmem %s6, 128
    %v2868 = vld [vmem:[%s2867] sm:$0xf]
    %v2869 = vld [vmem:[%s2867 + $0x4] sm:$0xf]
    %v2870 = vld [vmem:[%s2867 + $0x8] sm:$0xf]
    %v2871 = vld [vmem:[%s2867 + $0xc] sm:$0xf]
    %v2872 = vld [vmem:[%s2867 + $0x10] sm:$0xf]
    %v2873 = vld [vmem:[%s2867 + $0x14] sm:$0xf]
    %v2874 = vld [vmem:[%s2867 + $0x18] sm:$0xf]
    %v2875 = vld [vmem:[%s2867 + $0x1c] sm:$0xf]
    %v2884 = vunpack.c.l.b16 %v2868
    %v2885 = vunpack.c.l.b16 %v2869
    %v2886 = vunpack.c.l.b16 %v2870
    %v2887 = vunpack.c.l.b16 %v2871
    %v2888 = vunpack.c.l.b16 %v2872
    %v2889 = vunpack.c.l.b16 %v2873
    %v2890 = vunpack.c.l.b16 %v2874
    %v2891 = vunpack.c.l.b16 %v2875
    %v2892 = vpack.c.b16 %v2885, %v2884
    %v2893 = vpack.c.b16 %v2887, %v2886
    %v2894 = vpack.c.b16 %v2889, %v2888
    %v2895 = vpack.c.b16 %v2891, %v2890
    %2900 = vmatprep.subr.bf16.mxu0 0
    %2901 = vmatpush1.bf16.msra.mxu0 %v2892
    %2902 = vmatprep.subr.bf16.mxu0 0
    %2903 = vmatpush1.bf16.msra.mxu0 %v2893
    %2904 = vmatprep.subr.bf16.mxu0 0
    %2905 = vmatpush1.bf16.msra.mxu0 %v2894
    %2906 = vmatprep.subr.bf16.mxu0 0
    %2907 = vmatpush1.bf16.msra.mxu0 %v2895
    %2908 = vmatprep.subr.bf16.mxu0 0
    %2909 = vmatpush1.bf16.msra.mxu0 0
    %2910 = vmatprep.subr.bf16.mxu0 0
    %2911 = vmatpush1.bf16.msra.mxu0 0
    %2912 = vmatprep.subr.bf16.mxu0 0
    %2913 = vmatpush1.bf16.msra.mxu0 0
    %2914 = vmatprep.subr.bf16.mxu0 0
    %2915 = vmatpush1.bf16.msra.mxu0 0
    %2916 = vmatprep.subr.bf16.mxu0 0
    %2917 = vmatpush1.bf16.msra.mxu0 0
    %2918 = vmatprep.subr.bf16.mxu0 0
    %2919 = vmatpush1.bf16.msra.mxu0 0
    %2920 = vmatprep.subr.bf16.mxu0 0
    %2921 = vmatpush1.bf16.msra.mxu0 0
    %2922 = vmatprep.subr.bf16.mxu0 0
    %2923 = vmatpush1.bf16.msra.mxu0 0
    %2924 = vmatprep.subr.bf16.mxu0 0
    %2925 = vmatpush1.bf16.msra.mxu0 0
    %2926 = vmatprep.subr.bf16.mxu0 0
    %2927 = vmatpush1.bf16.msra.mxu0 0
    %2928 = vmatprep.subr.bf16.mxu0 0
    %2929 = vmatpush1.bf16.msra.mxu0 0
    %2930 = vmatprep.subr.bf16.mxu0 0
    %2931 = vmatpush1.bf16.msra.mxu0 0
    %2932 = vmatprep.mubr.bf16.mxu0 0
    %2933 = vmatmul.mubr.bf16.gmra.mrb[0].mxu0 %v1941
    %v2934 = vpop.f32.mrb[0].mxu0
    %v2935 = vadd.f32 0.0, %v2934
    %v2936 = vpop.f32.mrb[0].mxu0
    %v2937 = vpop.f32.mrb[0].mxu0
    %v2938 = vadd.f32 0.0, %v2937
    %v2939 = vpop.f32.mrb[0].mxu0
    %2940 = vmatprep.mubr.bf16.mxu0 0
    %2941 = vmatmul.mubr.bf16.gmra.mrb[0].mxu0 %v1943
    %v2942 = vpop.f32.mrb[0].mxu0
    %v2943 = vadd.f32 0.0, %v2942
    %v2944 = vpop.f32.mrb[0].mxu0
    %v2945 = vpop.f32.mrb[0].mxu0
    %v2946 = vadd.f32 0.0, %v2945
    %v2947 = vpop.f32.mrb[0].mxu0
    %2948 = vmatprep.mubr.bf16.mxu0 0
    %2949 = vmatmul.mubr.bf16.gmra.mrb[0].mxu0 %v1945
    %v2950 = vpop.f32.mrb[0].mxu0
    %v2951 = vadd.f32 0.0, %v2950
    %v2952 = vpop.f32.mrb[0].mxu0
    %v2953 = vpop.f32.mrb[0].mxu0
    %v2954 = vadd.f32 0.0, %v2953
    %v2955 = vpop.f32.mrb[0].mxu0
    %2956 = vmatprep.mubr.bf16.mxu0 0
    %2957 = vmatmul.mubr.bf16.gmra.mrb[0].mxu0 %v1947
    %v2958 = vpop.f32.mrb[0].mxu0
    %v2959 = vadd.f32 0.0, %v2958
    %v2960 = vpop.f32.mrb[0].mxu0
    %v2961 = vpop.f32.mrb[0].mxu0
    %v2962 = vadd.f32 0.0, %v2961
    %v2963 = vpop.f32.mrb[0].mxu0
    %2964 = vmatprep.mubr.bf16.mxu0 0
    %2965 = vmatmul.mubr.bf16.gmra.mrb[0].mxu0 %v1949
    %v2966 = vpop.f32.mrb[0].mxu0
    %v2967 = vadd.f32 0.0, %v2966
    %v2968 = vpop.f32.mrb[0].mxu0
    %v2969 = vpop.f32.mrb[0].mxu0
    %v2970 = vpop.f32.mrb[0].mxu0
    %2971 = vdwg.mxu0
    %s2972 = scalar_lea.vmem [#allocation9], 144
    %v2973 = vld [vmem:[%s2972] sm:$0xf]
    %v2974 = vld [vmem:[%s2972 + $0x4] sm:$0xf]
    %v2975 = vld [vmem:[%s2972 + $0x8] sm:$0xf]
    %v2976 = vld [vmem:[%s2972 + $0xc] sm:$0xf]
    %v2977 = vld [vmem:[%s2972 + $0x10] sm:$0xf]
    %v2978 = vld [vmem:[%s2972 + $0x14] sm:$0xf]
    %v2979 = vld [vmem:[%s2972 + $0x18] sm:$0xf]
    %v2980 = vld [vmem:[%s2972 + $0x1c] sm:$0xf]
    %v2981 = vld [vmem:[%s2972 + $0x20] sm:$0xf]
    %v2982 = vpack.c.bf16 %v2938, %v2935
    %v2983 = vpack.c.bf16 %v2946, %v2943
    %v2984 = vpack.c.bf16 %v2954, %v2951
    %v2985 = vpack.c.bf16 %v2962, %v2959
    %v2986 = vpack.c.bf16 %v2967, %v2967
    %v2996 = vunpack.c.l.b16 %v2973
    %v2997 = vunpack.c.l.b16 %v2974
    %v2998 = vunpack.c.l.b16 %v2975
    %v2999 = vunpack.c.l.b16 %v2976
    %v3000 = vunpack.c.l.b16 %v2977
    %v3001 = vunpack.c.l.b16 %v2978
    %v3002 = vunpack.c.l.b16 %v2979
    %v3003 = vunpack.c.l.b16 %v2980
    %v3004 = vunpack.c.l.b16 %v2981
    %v3005 = vpack.c.b16 %v2997, %v2996
    %v3006 = vpack.c.b16 %v2999, %v2998
    %v3007 = vpack.c.b16 %v3001, %v3000
    %v3008 = vpack.c.b16 %v3003, %v3002
    %v3009 = vpack.c.b16 %v3004, %v3004
    %v3011 = vsel %vm471, %v3005, 0
    %v3014 = vsel %vm471, %v3006, 0
    %v3017 = vsel %vm471, %v3007, 0
    %v3020 = vsel %vm471, %v3008, 0
    %v3023 = vsel %vm471, %v3009, 0
    %v3026 = vsel %vm487, %v2986, 0
    %3028 = vmatprep.subr.bf16.mxu0 0
    %3029 = vmatpush1.bf16.msra.mxu0 %v2982
    %3030 = vmatprep.subr.bf16.mxu0 0
    %3031 = vmatpush1.bf16.msra.mxu0 %v2983
    %3032 = vmatprep.subr.bf16.mxu0 0
    %3033 = vmatpush1.bf16.msra.mxu0 %v2984
    %3034 = vmatprep.subr.bf16.mxu0 0
    %3035 = vmatpush1.bf16.msra.mxu0 %v2985
    %3036 = vmatprep.subr.bf16.mxu0 0
    %3037 = vmatpush1.bf16.msra.mxu0 %v3026
    %3038 = vmatprep.subr.bf16.mxu0 0
    %3039 = vmatpush1.bf16.msra.mxu0 0
    %3040 = vmatprep.subr.bf16.mxu0 0
    %3041 = vmatpush1.bf16.msra.mxu0 0
    %3042 = vmatprep.subr.bf16.mxu0 0
    %3043 = vmatpush1.bf16.msra.mxu0 0
    %3044 = vmatprep.subr.bf16.mxu0 0
    %3045 = vmatpush1.bf16.msra.mxu0 0
    %3046 = vmatprep.subr.bf16.mxu0 0
    %3047 = vmatpush1.bf16.msra.mxu0 0
    %3048 = vmatprep.subr.bf16.mxu0 0
    %3049 = vmatpush1.bf16.msra.mxu0 0
    %3050 = vmatprep.subr.bf16.mxu0 0
    %3051 = vmatpush1.bf16.msra.mxu0 0
    %3052 = vmatprep.subr.bf16.mxu0 0
    %3053 = vmatpush1.bf16.msra.mxu0 0
    %3054 = vmatprep.subr.bf16.mxu0 0
    %3055 = vmatpush1.bf16.msra.mxu0 0
    %3056 = vmatprep.subr.bf16.mxu0 0
    %3057 = vmatpush1.bf16.msra.mxu0 0
    %3058 = vmatprep.subr.bf16.mxu0 0
    %3059 = vmatpush1.bf16.msra.mxu0 0
    %3060 = vmatprep.mubr.bf16.mxu0 0
    %3061 = vmatmul.mubr.bf16.gmra.mrb[0].mxu0 %v3011
    %v3062 = vpop.f32.mrb[0].mxu0
    %v3063 = vadd.f32 0.0, %v3062
    %v3064 = vpop.f32.mrb[0].mxu0
    %v3065 = vpop.f32.mrb[0].mxu0
    %v3066 = vadd.f32 0.0, %v3065
    %v3067 = vpop.f32.mrb[0].mxu0
    %3068 = vmatprep.mubr.bf16.mxu0 0
    %3069 = vmatmul.mubr.bf16.gmra.mrb[0].mxu0 %v3014
    %v3070 = vpop.f32.mrb[0].mxu0
    %v3071 = vadd.f32 0.0, %v3070
    %v3072 = vpop.f32.mrb[0].mxu0
    %v3073 = vpop.f32.mrb[0].mxu0
    %v3074 = vadd.f32 0.0, %v3073
    %v3075 = vpop.f32.mrb[0].mxu0
    %3076 = vmatprep.mubr.bf16.mxu0 0
    %3077 = vmatmul.mubr.bf16.gmra.mrb[0].mxu0 %v3017
    %v3078 = vpop.f32.mrb[0].mxu0
    %v3079 = vadd.f32 0.0, %v3078
    %v3080 = vpop.f32.mrb[0].mxu0
    %v3081 = vpop.f32.mrb[0].mxu0
    %v3082 = vadd.f32 0.0, %v3081
    %v3083 = vpop.f32.mrb[0].mxu0
    %3084 = vmatprep.mubr.bf16.mxu0 0
    %3085 = vmatmul.mubr.bf16.gmra.mrb[0].mxu0 %v3020
    %v3086 = vpop.f32.mrb[0].mxu0
    %v3087 = vadd.f32 0.0, %v3086
    %v3088 = vpop.f32.mrb[0].mxu0
    %v3089 = vpop.f32.mrb[0].mxu0
    %v3090 = vadd.f32 0.0, %v3089
    %v3091 = vpop.f32.mrb[0].mxu0
    %3092 = vmatprep.mubr.bf16.mxu0 0
    %3093 = vmatmul.mubr.bf16.gmra.mrb[0].mxu0 %v3023
    %v3094 = vpop.f32.mrb[0].mxu0
    %v3095 = vadd.f32 0.0, %v3094
    %v3096 = vpop.f32.mrb[0].mxu0
    %v3097 = vpop.f32.mrb[0].mxu0
    %v3098 = vpop.f32.mrb[0].mxu0
    %3099 = vdwg.mxu0
    %v3100 = vadd.f32 %v2858, %v3063
    %v3101 = vadd.f32 %v2859, %v3066
    %v3102 = vadd.f32 %v2860, %v3071
    %v3103 = vadd.f32 %v2861, %v3074
    %v3104 = vadd.f32 %v2862, %v3079
    %v3105 = vadd.f32 %v2863, %v3082
    %v3106 = vadd.f32 %v2864, %v3087
    %v3107 = vadd.f32 %v2865, %v3090
    %v3108 = vadd.f32 %v2866, %v3095
    %s3109 = scalar_lea.vmem %s6, 160
    %v3110 = vld [vmem:[%s3109] sm:$0xf]
    %v3111 = vld [vmem:[%s3109 + $0x4] sm:$0xf]
    %v3112 = vld [vmem:[%s3109 + $0x8] sm:$0xf]
    %v3113 = vld [vmem:[%s3109 + $0xc] sm:$0xf]
    %v3114 = vld [vmem:[%s3109 + $0x10] sm:$0xf]
    %v3115 = vld [vmem:[%s3109 + $0x14] sm:$0xf]
    %v3116 = vld [vmem:[%s3109 + $0x18] sm:$0xf]
    %v3117 = vld [vmem:[%s3109 + $0x1c] sm:$0xf]
    %v3126 = vunpack.c.l.b16 %v3110
    %v3127 = vunpack.c.l.b16 %v3111
    %v3128 = vunpack.c.l.b16 %v3112
    %v3129 = vunpack.c.l.b16 %v3113
    %v3130 = vunpack.c.l.b16 %v3114
    %v3131 = vunpack.c.l.b16 %v3115
    %v3132 = vunpack.c.l.b16 %v3116
    %v3133 = vunpack.c.l.b16 %v3117
    %v3134 = vpack.c.b16 %v3127, %v3126
    %v3135 = vpack.c.b16 %v3129, %v3128
    %v3136 = vpack.c.b16 %v3131, %v3130
    %v3137 = vpack.c.b16 %v3133, %v3132
    %3142 = vmatprep.subr.bf16.mxu0 0
    %3143 = vmatpush1.bf16.msra.mxu0 %v3134
    %3144 = vmatprep.subr.bf16.mxu0 0
    %3145 = vmatpush1.bf16.msra.mxu0 %v3135
    %3146 = vmatprep.subr.bf16.mxu0 0
    %3147 = vmatpush1.bf16.msra.mxu0 %v3136
    %3148 = vmatprep.subr.bf16.mxu0 0
    %3149 = vmatpush1.bf16.msra.mxu0 %v3137
    %3150 = vmatprep.subr.bf16.mxu0 0
    %3151 = vmatpush1.bf16.msra.mxu0 0
    %3152 = vmatprep.subr.bf16.mxu0 0
    %3153 = vmatpush1.bf16.msra.mxu0 0
    %3154 = vmatprep.subr.bf16.mxu0 0
    %3155 = vmatpush1.bf16.msra.mxu0 0
    %3156 = vmatprep.subr.bf16.mxu0 0
    %3157 = vmatpush1.bf16.msra.mxu0 0
    %3158 = vmatprep.subr.bf16.mxu0 0
    %3159 = vmatpush1.bf16.msra.mxu0 0
    %3160 = vmatprep.subr.bf16.mxu0 0
    %3161 = vmatpush1.bf16.msra.mxu0 0
    %3162 = vmatprep.subr.bf16.mxu0 0
    %3163 = vmatpush1.bf16.msra.mxu0 0
    %3164 = vmatprep.subr.bf16.mxu0 0
    %3165 = vmatpush1.bf16.msra.mxu0 0
    %3166 = vmatprep.subr.bf16.mxu0 0
    %3167 = vmatpush1.bf16.msra.mxu0 0
    %3168 = vmatprep.subr.bf16.mxu0 0
    %3169 = vmatpush1.bf16.msra.mxu0 0
    %3170 = vmatprep.subr.bf16.mxu0 0
    %3171 = vmatpush1.bf16.msra.mxu0 0
    %3172 = vmatprep.subr.bf16.mxu0 0
    %3173 = vmatpush1.bf16.msra.mxu0 0
    %3174 = vmatprep.mubr.bf16.mxu0 0
    %3175 = vmatmul.mubr.bf16.gmra.mrb[0].mxu0 %v1941
    %v3176 = vpop.f32.mrb[0].mxu0
    %v3177 = vadd.f32 0.0, %v3176
    %v3178 = vpop.f32.mrb[0].mxu0
    %v3179 = vpop.f32.mrb[0].mxu0
    %v3180 = vadd.f32 0.0, %v3179
    %v3181 = vpop.f32.mrb[0].mxu0
    %3182 = vmatprep.mubr.bf16.mxu0 0
    %3183 = vmatmul.mubr.bf16.gmra.mrb[0].mxu0 %v1943
    %v3184 = vpop.f32.mrb[0].mxu0
    %v3185 = vadd.f32 0.0, %v3184
    %v3186 = vpop.f32.mrb[0].mxu0
    %v3187 = vpop.f32.mrb[0].mxu0
    %v3188 = vadd.f32 0.0, %v3187
    %v3189 = vpop.f32.mrb[0].mxu0
    %3190 = vmatprep.mubr.bf16.mxu0 0
    %3191 = vmatmul.mubr.bf16.gmra.mrb[0].mxu0 %v1945
    %v3192 = vpop.f32.mrb[0].mxu0
    %v3193 = vadd.f32 0.0, %v3192
    %v3194 = vpop.f32.mrb[0].mxu0
    %v3195 = vpop.f32.mrb[0].mxu0
    %v3196 = vadd.f32 0.0, %v3195
    %v3197 = vpop.f32.mrb[0].mxu0
    %3198 = vmatprep.mubr.bf16.mxu0 0
    %3199 = vmatmul.mubr.bf16.gmra.mrb[0].mxu0 %v1947
    %v3200 = vpop.f32.mrb[0].mxu0
    %v3201 = vadd.f32 0.0, %v3200
    %v3202 = vpop.f32.mrb[0].mxu0
    %v3203 = vpop.f32.mrb[0].mxu0
    %v3204 = vadd.f32 0.0, %v3203
    %v3205 = vpop.f32.mrb[0].mxu0
    %3206 = vmatprep.mubr.bf16.mxu0 0
    %3207 = vmatmul.mubr.bf16.gmra.mrb[0].mxu0 %v1949
    %v3208 = vpop.f32.mrb[0].mxu0
    %v3209 = vadd.f32 0.0, %v3208
    %v3210 = vpop.f32.mrb[0].mxu0
    %v3211 = vpop.f32.mrb[0].mxu0
    %v3212 = vpop.f32.mrb[0].mxu0
    %3213 = vdwg.mxu0
    %s3214 = scalar_lea.vmem [#allocation9], 180
    %v3215 = vld [vmem:[%s3214] sm:$0xf]
    %v3216 = vld [vmem:[%s3214 + $0x4] sm:$0xf]
    %v3217 = vld [vmem:[%s3214 + $0x8] sm:$0xf]
    %v3218 = vld [vmem:[%s3214 + $0xc] sm:$0xf]
    %v3219 = vld [vmem:[%s3214 + $0x10] sm:$0xf]
    %v3220 = vld [vmem:[%s3214 + $0x14] sm:$0xf]
    %v3221 = vld [vmem:[%s3214 + $0x18] sm:$0xf]
    %v3222 = vld [vmem:[%s3214 + $0x1c] sm:$0xf]
    %v3223 = vld [vmem:[%s3214 + $0x20] sm:$0xf]
    %v3224 = vpack.c.bf16 %v3180, %v3177
    %v3225 = vpack.c.bf16 %v3188, %v3185
    %v3226 = vpack.c.bf16 %v3196, %v3193
    %v3227 = vpack.c.bf16 %v3204, %v3201
    %v3228 = vpack.c.bf16 %v3209, %v3209
    %v3238 = vunpack.c.l.b16 %v3215
    %v3239 = vunpack.c.l.b16 %v3216
    %v3240 = vunpack.c.l.b16 %v3217
    %v3241 = vunpack.c.l.b16 %v3218
    %v3242 = vunpack.c.l.b16 %v3219
    %v3243 = vunpack.c.l.b16 %v3220
    %v3244 = vunpack.c.l.b16 %v3221
    %v3245 = vunpack.c.l.b16 %v3222
    %v3246 = vunpack.c.l.b16 %v3223
    %v3247 = vpack.c.b16 %v3239, %v3238
    %v3248 = vpack.c.b16 %v3241, %v3240
    %v3249 = vpack.c.b16 %v3243, %v3242
    %v3250 = vpack.c.b16 %v3245, %v3244
    %v3251 = vpack.c.b16 %v3246, %v3246
    %v3253 = vsel %vm471, %v3247, 0
    %v3256 = vsel %vm471, %v3248, 0
    %v3259 = vsel %vm471, %v3249, 0
    %v3262 = vsel %vm471, %v3250, 0
    %v3265 = vsel %vm471, %v3251, 0
    %v3268 = vsel %vm487, %v3228, 0
    %3270 = vmatprep.subr.bf16.mxu0 0
    %3271 = vmatpush1.bf16.msra.mxu0 %v3224
    %3272 = vmatprep.subr.bf16.mxu0 0
    %3273 = vmatpush1.bf16.msra.mxu0 %v3225
    %3274 = vmatprep.subr.bf16.mxu0 0
    %3275 = vmatpush1.bf16.msra.mxu0 %v3226
    %3276 = vmatprep.subr.bf16.mxu0 0
    %3277 = vmatpush1.bf16.msra.mxu0 %v3227
    %3278 = vmatprep.subr.bf16.mxu0 0
    %3279 = vmatpush1.bf16.msra.mxu0 %v3268
    %3280 = vmatprep.subr.bf16.mxu0 0
    %3281 = vmatpush1.bf16.msra.mxu0 0
    %3282 = vmatprep.subr.bf16.mxu0 0
    %3283 = vmatpush1.bf16.msra.mxu0 0
    %3284 = vmatprep.subr.bf16.mxu0 0
    %3285 = vmatpush1.bf16.msra.mxu0 0
    %3286 = vmatprep.subr.bf16.mxu0 0
    %3287 = vmatpush1.bf16.msra.mxu0 0
    %3288 = vmatprep.subr.bf16.mxu0 0
    %3289 = vmatpush1.bf16.msra.mxu0 0
    %3290 = vmatprep.subr.bf16.mxu0 0
    %3291 = vmatpush1.bf16.msra.mxu0 0
    %3292 = vmatprep.subr.bf16.mxu0 0
    %3293 = vmatpush1.bf16.msra.mxu0 0
    %3294 = vmatprep.subr.bf16.mxu0 0
    %3295 = vmatpush1.bf16.msra.mxu0 0
    %3296 = vmatprep.subr.bf16.mxu0 0
    %3297 = vmatpush1.bf16.msra.mxu0 0
    %3298 = vmatprep.subr.bf16.mxu0 0
    %3299 = vmatpush1.bf16.msra.mxu0 0
    %3300 = vmatprep.subr.bf16.mxu0 0
    %3301 = vmatpush1.bf16.msra.mxu0 0
    %3302 = vmatprep.mubr.bf16.mxu0 0
    %3303 = vmatmul.mubr.bf16.gmra.mrb[0].mxu0 %v3253
    %v3304 = vpop.f32.mrb[0].mxu0
    %v3305 = vadd.f32 0.0, %v3304
    %v3306 = vpop.f32.mrb[0].mxu0
    %v3307 = vpop.f32.mrb[0].mxu0
    %v3308 = vadd.f32 0.0, %v3307
    %v3309 = vpop.f32.mrb[0].mxu0
    %3310 = vmatprep.mubr.bf16.mxu0 0
    %3311 = vmatmul.mubr.bf16.gmra.mrb[0].mxu0 %v3256
    %v3312 = vpop.f32.mrb[0].mxu0
    %v3313 = vadd.f32 0.0, %v3312
    %v3314 = vpop.f32.mrb[0].mxu0
    %v3315 = vpop.f32.mrb[0].mxu0
    %v3316 = vadd.f32 0.0, %v3315
    %v3317 = vpop.f32.mrb[0].mxu0
    %3318 = vmatprep.mubr.bf16.mxu0 0
    %3319 = vmatmul.mubr.bf16.gmra.mrb[0].mxu0 %v3259
    %v3320 = vpop.f32.mrb[0].mxu0
    %v3321 = vadd.f32 0.0, %v3320
    %v3322 = vpop.f32.mrb[0].mxu0
    %v3323 = vpop.f32.mrb[0].mxu0
    %v3324 = vadd.f32 0.0, %v3323
    %v3325 = vpop.f32.mrb[0].mxu0
    %3326 = vmatprep.mubr.bf16.mxu0 0
    %3327 = vmatmul.mubr.bf16.gmra.mrb[0].mxu0 %v3262
    %v3328 = vpop.f32.mrb[0].mxu0
    %v3329 = vadd.f32 0.0, %v3328
    %v3330 = vpop.f32.mrb[0].mxu0
    %v3331 = vpop.f32.mrb[0].mxu0
    %v3332 = vadd.f32 0.0, %v3331
    %v3333 = vpop.f32.mrb[0].mxu0
    %3334 = vmatprep.mubr.bf16.mxu0 0
    %3335 = vmatmul.mubr.bf16.gmra.mrb[0].mxu0 %v3265
    %v3336 = vpop.f32.mrb[0].mxu0
    %v3337 = vadd.f32 0.0, %v3336
    %v3338 = vpop.f32.mrb[0].mxu0
    %v3339 = vpop.f32.mrb[0].mxu0
    %v3340 = vpop.f32.mrb[0].mxu0
    %3341 = vdwg.mxu0
    %v3342 = vadd.f32 %v3100, %v3305
    %v3343 = vadd.f32 %v3101, %v3308
    %v3344 = vadd.f32 %v3102, %v3313
    %v3345 = vadd.f32 %v3103, %v3316
    %v3346 = vadd.f32 %v3104, %v3321
    %v3347 = vadd.f32 %v3105, %v3324
    %v3348 = vadd.f32 %v3106, %v3329
    %v3349 = vadd.f32 %v3107, %v3332
    %v3350 = vadd.f32 %v3108, %v3337
    %s3351 = scalar_lea.vmem %s6, 192
    %v3352 = vld [vmem:[%s3351] sm:$0xf]
    %v3353 = vld [vmem:[%s3351 + $0x4] sm:$0xf]
    %v3354 = vld [vmem:[%s3351 + $0x8] sm:$0xf]
    %v3355 = vld [vmem:[%s3351 + $0xc] sm:$0xf]
    %v3356 = vld [vmem:[%s3351 + $0x10] sm:$0xf]
    %v3357 = vld [vmem:[%s3351 + $0x14] sm:$0xf]
    %v3358 = vld [vmem:[%s3351 + $0x18] sm:$0xf]
    %v3359 = vld [vmem:[%s3351 + $0x1c] sm:$0xf]
    %v3368 = vunpack.c.l.b16 %v3352
    %v3369 = vunpack.c.l.b16 %v3353
    %v3370 = vunpack.c.l.b16 %v3354
    %v3371 = vunpack.c.l.b16 %v3355
    %v3372 = vunpack.c.l.b16 %v3356
    %v3373 = vunpack.c.l.b16 %v3357
    %v3374 = vunpack.c.l.b16 %v3358
    %v3375 = vunpack.c.l.b16 %v3359
    %v3376 = vpack.c.b16 %v3369, %v3368
    %v3377 = vpack.c.b16 %v3371, %v3370
    %v3378 = vpack.c.b16 %v3373, %v3372
    %v3379 = vpack.c.b16 %v3375, %v3374
    %3384 = vmatprep.subr.bf16.mxu0 0
    %3385 = vmatpush1.bf16.msra.mxu0 %v3376
    %3386 = vmatprep.subr.bf16.mxu0 0
    %3387 = vmatpush1.bf16.msra.mxu0 %v3377
    %3388 = vmatprep.subr.bf16.mxu0 0
    %3389 = vmatpush1.bf16.msra.mxu0 %v3378
    %3390 = vmatprep.subr.bf16.mxu0 0
    %3391 = vmatpush1.bf16.msra.mxu0 %v3379
    %3392 = vmatprep.subr.bf16.mxu0 0
    %3393 = vmatpush1.bf16.msra.mxu0 0
    %3394 = vmatprep.subr.bf16.mxu0 0
    %3395 = vmatpush1.bf16.msra.mxu0 0
    %3396 = vmatprep.subr.bf16.mxu0 0
    %3397 = vmatpush1.bf16.msra.mxu0 0
    %3398 = vmatprep.subr.bf16.mxu0 0
    %3399 = vmatpush1.bf16.msra.mxu0 0
    %3400 = vmatprep.subr.bf16.mxu0 0
    %3401 = vmatpush1.bf16.msra.mxu0 0
    %3402 = vmatprep.subr.bf16.mxu0 0
    %3403 = vmatpush1.bf16.msra.mxu0 0
    %3404 = vmatprep.subr.bf16.mxu0 0
    %3405 = vmatpush1.bf16.msra.mxu0 0
    %3406 = vmatprep.subr.bf16.mxu0 0
    %3407 = vmatpush1.bf16.msra.mxu0 0
    %3408 = vmatprep.subr.bf16.mxu0 0
    %3409 = vmatpush1.bf16.msra.mxu0 0
    %3410 = vmatprep.subr.bf16.mxu0 0
    %3411 = vmatpush1.bf16.msra.mxu0 0
    %3412 = vmatprep.subr.bf16.mxu0 0
    %3413 = vmatpush1.bf16.msra.mxu0 0
    %3414 = vmatprep.subr.bf16.mxu0 0
    %3415 = vmatpush1.bf16.msra.mxu0 0
    %3416 = vmatprep.mubr.bf16.mxu0 0
    %3417 = vmatmul.mubr.bf16.gmra.mrb[0].mxu0 %v1941
    %v3418 = vpop.f32.mrb[0].mxu0
    %v3419 = vadd.f32 0.0, %v3418
    %v3420 = vpop.f32.mrb[0].mxu0
    %v3421 = vpop.f32.mrb[0].mxu0
    %v3422 = vadd.f32 0.0, %v3421
    %v3423 = vpop.f32.mrb[0].mxu0
    %3424 = vmatprep.mubr.bf16.mxu0 0
    %3425 = vmatmul.mubr.bf16.gmra.mrb[0].mxu0 %v1943
    %v3426 = vpop.f32.mrb[0].mxu0
    %v3427 = vadd.f32 0.0, %v3426
    %v3428 = vpop.f32.mrb[0].mxu0
    %v3429 = vpop.f32.mrb[0].mxu0
    %v3430 = vadd.f32 0.0, %v3429
    %v3431 = vpop.f32.mrb[0].mxu0
    %3432 = vmatprep.mubr.bf16.mxu0 0
    %3433 = vmatmul.mubr.bf16.gmra.mrb[0].mxu0 %v1945
    %v3434 = vpop.f32.mrb[0].mxu0
    %v3435 = vadd.f32 0.0, %v3434
    %v3436 = vpop.f32.mrb[0].mxu0
    %v3437 = vpop.f32.mrb[0].mxu0
    %v3438 = vadd.f32 0.0, %v3437
    %v3439 = vpop.f32.mrb[0].mxu0
    %3440 = vmatprep.mubr.bf16.mxu0 0
    %3441 = vmatmul.mubr.bf16.gmra.mrb[0].mxu0 %v1947
    %v3442 = vpop.f32.mrb[0].mxu0
    %v3443 = vadd.f32 0.0, %v3442
    %v3444 = vpop.f32.mrb[0].mxu0
    %v3445 = vpop.f32.mrb[0].mxu0
    %v3446 = vadd.f32 0.0, %v3445
    %v3447 = vpop.f32.mrb[0].mxu0
    %3448 = vmatprep.mubr.bf16.mxu0 0
    %3449 = vmatmul.mubr.bf16.gmra.mrb[0].mxu0 %v1949
    %v3450 = vpop.f32.mrb[0].mxu0
    %v3451 = vadd.f32 0.0, %v3450
    %v3452 = vpop.f32.mrb[0].mxu0
    %v3453 = vpop.f32.mrb[0].mxu0
    %v3454 = vpop.f32.mrb[0].mxu0
    %3455 = vdwg.mxu0
    %s3456 = scalar_lea.vmem [#allocation9], 216
    %v3457 = vld [vmem:[%s3456] sm:$0xf]
    %v3458 = vld [vmem:[%s3456 + $0x4] sm:$0xf]
    %v3459 = vld [vmem:[%s3456 + $0x8] sm:$0xf]
    %v3460 = vld [vmem:[%s3456 + $0xc] sm:$0xf]
    %v3461 = vld [vmem:[%s3456 + $0x10] sm:$0xf]
    %v3462 = vld [vmem:[%s3456 + $0x14] sm:$0xf]
    %v3463 = vld [vmem:[%s3456 + $0x18] sm:$0xf]
    %v3464 = vld [vmem:[%s3456 + $0x1c] sm:$0xf]
    %v3465 = vld [vmem:[%s3456 + $0x20] sm:$0xf]
    %v3466 = vpack.c.bf16 %v3422, %v3419
    %v3467 = vpack.c.bf16 %v3430, %v3427
    %v3468 = vpack.c.bf16 %v3438, %v3435
    %v3469 = vpack.c.bf16 %v3446, %v3443
    %v3470 = vpack.c.bf16 %v3451, %v3451
    %v3480 = vunpack.c.l.b16 %v3457
    %v3481 = vunpack.c.l.b16 %v3458
    %v3482 = vunpack.c.l.b16 %v3459
    %v3483 = vunpack.c.l.b16 %v3460
    %v3484 = vunpack.c.l.b16 %v3461
    %v3485 = vunpack.c.l.b16 %v3462
    %v3486 = vunpack.c.l.b16 %v3463
    %v3487 = vunpack.c.l.b16 %v3464
    %v3488 = vunpack.c.l.b16 %v3465
    %v3489 = vpack.c.b16 %v3481, %v3480
    %v3490 = vpack.c.b16 %v3483, %v3482
    %v3491 = vpack.c.b16 %v3485, %v3484
    %v3492 = vpack.c.b16 %v3487, %v3486
    %v3493 = vpack.c.b16 %v3488, %v3488
    %v3495 = vsel %vm471, %v3489, 0
    %v3498 = vsel %vm471, %v3490, 0
    %v3501 = vsel %vm471, %v3491, 0
    %v3504 = vsel %vm471, %v3492, 0
    %v3507 = vsel %vm471, %v3493, 0
    %v3510 = vsel %vm487, %v3470, 0
    %3512 = vmatprep.subr.bf16.mxu0 0
    %3513 = vmatpush1.bf16.msra.mxu0 %v3466
    %3514 = vmatprep.subr.bf16.mxu0 0
    %3515 = vmatpush1.bf16.msra.mxu0 %v3467
    %3516 = vmatprep.subr.bf16.mxu0 0
    %3517 = vmatpush1.bf16.msra.mxu0 %v3468
    %3518 = vmatprep.subr.bf16.mxu0 0
    %3519 = vmatpush1.bf16.msra.mxu0 %v3469
    %3520 = vmatprep.subr.bf16.mxu0 0
    %3521 = vmatpush1.bf16.msra.mxu0 %v3510
    %3522 = vmatprep.subr.bf16.mxu0 0
    %3523 = vmatpush1.bf16.msra.mxu0 0
    %3524 = vmatprep.subr.bf16.mxu0 0
    %3525 = vmatpush1.bf16.msra.mxu0 0
    %3526 = vmatprep.subr.bf16.mxu0 0
    %3527 = vmatpush1.bf16.msra.mxu0 0
    %3528 = vmatprep.subr.bf16.mxu0 0
    %3529 = vmatpush1.bf16.msra.mxu0 0
    %3530 = vmatprep.subr.bf16.mxu0 0
    %3531 = vmatpush1.bf16.msra.mxu0 0
    %3532 = vmatprep.subr.bf16.mxu0 0
    %3533 = vmatpush1.bf16.msra.mxu0 0
    %3534 = vmatprep.subr.bf16.mxu0 0
    %3535 = vmatpush1.bf16.msra.mxu0 0
    %3536 = vmatprep.subr.bf16.mxu0 0
    %3537 = vmatpush1.bf16.msra.mxu0 0
    %3538 = vmatprep.subr.bf16.mxu0 0
    %3539 = vmatpush1.bf16.msra.mxu0 0
    %3540 = vmatprep.subr.bf16.mxu0 0
    %3541 = vmatpush1.bf16.msra.mxu0 0
    %3542 = vmatprep.subr.bf16.mxu0 0
    %3543 = vmatpush1.bf16.msra.mxu0 0
    %3544 = vmatprep.mubr.bf16.mxu0 0
    %3545 = vmatmul.mubr.bf16.gmra.mrb[0].mxu0 %v3495
    %v3546 = vpop.f32.mrb[0].mxu0
    %v3547 = vadd.f32 0.0, %v3546
    %v3548 = vpop.f32.mrb[0].mxu0
    %v3549 = vpop.f32.mrb[0].mxu0
    %v3550 = vadd.f32 0.0, %v3549
    %v3551 = vpop.f32.mrb[0].mxu0
    %3552 = vmatprep.mubr.bf16.mxu0 0
    %3553 = vmatmul.mubr.bf16.gmra.mrb[0].mxu0 %v3498
    %v3554 = vpop.f32.mrb[0].mxu0
    %v3555 = vadd.f32 0.0, %v3554
    %v3556 = vpop.f32.mrb[0].mxu0
    %v3557 = vpop.f32.mrb[0].mxu0
    %v3558 = vadd.f32 0.0, %v3557
    %v3559 = vpop.f32.mrb[0].mxu0
    %3560 = vmatprep.mubr.bf16.mxu0 0
    %3561 = vmatmul.mubr.bf16.gmra.mrb[0].mxu0 %v3501
    %v3562 = vpop.f32.mrb[0].mxu0
    %v3563 = vadd.f32 0.0, %v3562
    %v3564 = vpop.f32.mrb[0].mxu0
    %v3565 = vpop.f32.mrb[0].mxu0
    %v3566 = vadd.f32 0.0, %v3565
    %v3567 = vpop.f32.mrb[0].mxu0
    %3568 = vmatprep.mubr.bf16.mxu0 0
    %3569 = vmatmul.mubr.bf16.gmra.mrb[0].mxu0 %v3504
    %v3570 = vpop.f32.mrb[0].mxu0
    %v3571 = vadd.f32 0.0, %v3570
    %v3572 = vpop.f32.mrb[0].mxu0
    %v3573 = vpop.f32.mrb[0].mxu0
    %v3574 = vadd.f32 0.0, %v3573
    %v3575 = vpop.f32.mrb[0].mxu0
    %3576 = vmatprep.mubr.bf16.mxu0 0
    %3577 = vmatmul.mubr.bf16.gmra.mrb[0].mxu0 %v3507
    %v3578 = vpop.f32.mrb[0].mxu0
    %v3579 = vadd.f32 0.0, %v3578
    %v3580 = vpop.f32.mrb[0].mxu0
    %v3581 = vpop.f32.mrb[0].mxu0
    %v3582 = vpop.f32.mrb[0].mxu0
    %3583 = vdwg.mxu0
    %v3584 = vadd.f32 %v3342, %v3547
    %v3585 = vadd.f32 %v3343, %v3550
    %v3586 = vadd.f32 %v3344, %v3555
    %v3587 = vadd.f32 %v3345, %v3558
    %v3588 = vadd.f32 %v3346, %v3563
    %v3589 = vadd.f32 %v3347, %v3566
    %v3590 = vadd.f32 %v3348, %v3571
    %v3591 = vadd.f32 %v3349, %v3574
    %v3592 = vadd.f32 %v3350, %v3579
    %s3593 = scalar_lea.vmem %s6, 224
    %v3594 = vld [vmem:[%s3593] sm:$0xf]
    %v3595 = vld [vmem:[%s3593 + $0x4] sm:$0xf]
    %v3596 = vld [vmem:[%s3593 + $0x8] sm:$0xf]
    %v3597 = vld [vmem:[%s3593 + $0xc] sm:$0xf]
    %v3598 = vld [vmem:[%s3593 + $0x10] sm:$0xf]
    %v3599 = vld [vmem:[%s3593 + $0x14] sm:$0xf]
    %v3600 = vld [vmem:[%s3593 + $0x18] sm:$0xf]
    %v3601 = vld [vmem:[%s3593 + $0x1c] sm:$0xf]
    %v3610 = vunpack.c.l.b16 %v3594
    %v3611 = vunpack.c.l.b16 %v3595
    %v3612 = vunpack.c.l.b16 %v3596
    %v3613 = vunpack.c.l.b16 %v3597
    %v3614 = vunpack.c.l.b16 %v3598
    %v3615 = vunpack.c.l.b16 %v3599
    %v3616 = vunpack.c.l.b16 %v3600
    %v3617 = vunpack.c.l.b16 %v3601
    %v3618 = vpack.c.b16 %v3611, %v3610
    %v3619 = vpack.c.b16 %v3613, %v3612
    %v3620 = vpack.c.b16 %v3615, %v3614
    %v3621 = vpack.c.b16 %v3617, %v3616
    %3626 = vmatprep.subr.bf16.mxu0 0
    %3627 = vmatpush1.bf16.msra.mxu0 %v3618
    %3628 = vmatprep.subr.bf16.mxu0 0
    %3629 = vmatpush1.bf16.msra.mxu0 %v3619
    %3630 = vmatprep.subr.bf16.mxu0 0
    %3631 = vmatpush1.bf16.msra.mxu0 %v3620
    %3632 = vmatprep.subr.bf16.mxu0 0
    %3633 = vmatpush1.bf16.msra.mxu0 %v3621
    %3634 = vmatprep.subr.bf16.mxu0 0
    %3635 = vmatpush1.bf16.msra.mxu0 0
    %3636 = vmatprep.subr.bf16.mxu0 0
    %3637 = vmatpush1.bf16.msra.mxu0 0
    %3638 = vmatprep.subr.bf16.mxu0 0
    %3639 = vmatpush1.bf16.msra.mxu0 0
    %3640 = vmatprep.subr.bf16.mxu0 0
    %3641 = vmatpush1.bf16.msra.mxu0 0
    %3642 = vmatprep.subr.bf16.mxu0 0
    %3643 = vmatpush1.bf16.msra.mxu0 0
    %3644 = vmatprep.subr.bf16.mxu0 0
    %3645 = vmatpush1.bf16.msra.mxu0 0
    %3646 = vmatprep.subr.bf16.mxu0 0
    %3647 = vmatpush1.bf16.msra.mxu0 0
    %3648 = vmatprep.subr.bf16.mxu0 0
    %3649 = vmatpush1.bf16.msra.mxu0 0
    %3650 = vmatprep.subr.bf16.mxu0 0
    %3651 = vmatpush1.bf16.msra.mxu0 0
    %3652 = vmatprep.subr.bf16.mxu0 0
    %3653 = vmatpush1.bf16.msra.mxu0 0
    %3654 = vmatprep.subr.bf16.mxu0 0
    %3655 = vmatpush1.bf16.msra.mxu0 0
    %3656 = vmatprep.subr.bf16.mxu0 0
    %3657 = vmatpush1.bf16.msra.mxu0 0
    %3658 = vmatprep.mubr.bf16.mxu0 0
    %3659 = vmatmul.mubr.bf16.gmra.mrb[0].mxu0 %v1941
    %v3660 = vpop.f32.mrb[0].mxu0
    %v3661 = vadd.f32 0.0, %v3660
    %v3662 = vpop.f32.mrb[0].mxu0
    %v3663 = vpop.f32.mrb[0].mxu0
    %v3664 = vadd.f32 0.0, %v3663
    %v3665 = vpop.f32.mrb[0].mxu0
    %3666 = vmatprep.mubr.bf16.mxu0 0
    %3667 = vmatmul.mubr.bf16.gmra.mrb[0].mxu0 %v1943
    %v3668 = vpop.f32.mrb[0].mxu0
    %v3669 = vadd.f32 0.0, %v3668
    %v3670 = vpop.f32.mrb[0].mxu0
    %v3671 = vpop.f32.mrb[0].mxu0
    %v3672 = vadd.f32 0.0, %v3671
    %v3673 = vpop.f32.mrb[0].mxu0
    %3674 = vmatprep.mubr.bf16.mxu0 0
    %3675 = vmatmul.mubr.bf16.gmra.mrb[0].mxu0 %v1945
    %v3676 = vpop.f32.mrb[0].mxu0
    %v3677 = vadd.f32 0.0, %v3676
    %v3678 = vpop.f32.mrb[0].mxu0
    %v3679 = vpop.f32.mrb[0].mxu0
    %v3680 = vadd.f32 0.0, %v3679
    %v3681 = vpop.f32.mrb[0].mxu0
    %3682 = vmatprep.mubr.bf16.mxu0 0
    %3683 = vmatmul.mubr.bf16.gmra.mrb[0].mxu0 %v1947
    %v3684 = vpop.f32.mrb[0].mxu0
    %v3685 = vadd.f32 0.0, %v3684
    %v3686 = vpop.f32.mrb[0].mxu0
    %v3687 = vpop.f32.mrb[0].mxu0
    %v3688 = vadd.f32 0.0, %v3687
    %v3689 = vpop.f32.mrb[0].mxu0
    %3690 = vmatprep.mubr.bf16.mxu0 0
    %3691 = vmatmul.mubr.bf16.gmra.mrb[0].mxu0 %v1949
    %v3692 = vpop.f32.mrb[0].mxu0
    %v3693 = vadd.f32 0.0, %v3692
    %v3694 = vpop.f32.mrb[0].mxu0
    %v3695 = vpop.f32.mrb[0].mxu0
    %v3696 = vpop.f32.mrb[0].mxu0
    %3697 = vdwg.mxu0
    %s3698 = scalar_lea.vmem [#allocation9], 252
    %v3699 = vld [vmem:[%s3698] sm:$0xf]
    %v3700 = vld [vmem:[%s3698 + $0x4] sm:$0xf]
    %v3701 = vld [vmem:[%s3698 + $0x8] sm:$0xf]
    %v3702 = vld [vmem:[%s3698 + $0xc] sm:$0xf]
    %v3703 = vld [vmem:[%s3698 + $0x10] sm:$0xf]
    %v3704 = vld [vmem:[%s3698 + $0x14] sm:$0xf]
    %v3705 = vld [vmem:[%s3698 + $0x18] sm:$0xf]
    %v3706 = vld [vmem:[%s3698 + $0x1c] sm:$0xf]
    %v3707 = vld [vmem:[%s3698 + $0x20] sm:$0xf]
    %v3708 = vpack.c.bf16 %v3664, %v3661
    %v3709 = vpack.c.bf16 %v3672, %v3669
    %v3710 = vpack.c.bf16 %v3680, %v3677
    %v3711 = vpack.c.bf16 %v3688, %v3685
    %v3712 = vpack.c.bf16 %v3693, %v3693
    %v3722 = vunpack.c.l.b16 %v3699
    %v3723 = vunpack.c.l.b16 %v3700
    %v3724 = vunpack.c.l.b16 %v3701
    %v3725 = vunpack.c.l.b16 %v3702
    %v3726 = vunpack.c.l.b16 %v3703
    %v3727 = vunpack.c.l.b16 %v3704
    %v3728 = vunpack.c.l.b16 %v3705
    %v3729 = vunpack.c.l.b16 %v3706
    %v3730 = vunpack.c.l.b16 %v3707
    %v3731 = vpack.c.b16 %v3723, %v3722
    %v3732 = vpack.c.b16 %v3725, %v3724
    %v3733 = vpack.c.b16 %v3727, %v3726
    %v3734 = vpack.c.b16 %v3729, %v3728
    %v3735 = vpack.c.b16 %v3730, %v3730
    %v3737 = vsel %vm471, %v3731, 0
    %v3740 = vsel %vm471, %v3732, 0
    %v3743 = vsel %vm471, %v3733, 0
    %v3746 = vsel %vm471, %v3734, 0
    %v3749 = vsel %vm471, %v3735, 0
    %v3752 = vsel %vm487, %v3712, 0
    %3754 = vmatprep.subr.bf16.mxu0 0
    %3755 = vmatpush1.bf16.msra.mxu0 %v3708
    %3756 = vmatprep.subr.bf16.mxu0 0
    %3757 = vmatpush1.bf16.msra.mxu0 %v3709
    %3758 = vmatprep.subr.bf16.mxu0 0
    %3759 = vmatpush1.bf16.msra.mxu0 %v3710
    %3760 = vmatprep.subr.bf16.mxu0 0
    %3761 = vmatpush1.bf16.msra.mxu0 %v3711
    %3762 = vmatprep.subr.bf16.mxu0 0
    %3763 = vmatpush1.bf16.msra.mxu0 %v3752
    %3764 = vmatprep.subr.bf16.mxu0 0
    %3765 = vmatpush1.bf16.msra.mxu0 0
    %3766 = vmatprep.subr.bf16.mxu0 0
    %3767 = vmatpush1.bf16.msra.mxu0 0
    %3768 = vmatprep.subr.bf16.mxu0 0
    %3769 = vmatpush1.bf16.msra.mxu0 0
    %3770 = vmatprep.subr.bf16.mxu0 0
    %3771 = vmatpush1.bf16.msra.mxu0 0
    %3772 = vmatprep.subr.bf16.mxu0 0
    %3773 = vmatpush1.bf16.msra.mxu0 0
    %3774 = vmatprep.subr.bf16.mxu0 0
    %3775 = vmatpush1.bf16.msra.mxu0 0
    %3776 = vmatprep.subr.bf16.mxu0 0
    %3777 = vmatpush1.bf16.msra.mxu0 0
    %3778 = vmatprep.subr.bf16.mxu0 0
    %3779 = vmatpush1.bf16.msra.mxu0 0
    %3780 = vmatprep.subr.bf16.mxu0 0
    %3781 = vmatpush1.bf16.msra.mxu0 0
    %3782 = vmatprep.subr.bf16.mxu0 0
    %3783 = vmatpush1.bf16.msra.mxu0 0
    %3784 = vmatprep.subr.bf16.mxu0 0
    %3785 = vmatpush1.bf16.msra.mxu0 0
    %3786 = vmatprep.mubr.bf16.mxu0 0
    %3787 = vmatmul.mubr.bf16.gmra.mrb[0].mxu0 %v3737
    %v3788 = vpop.f32.mrb[0].mxu0
    %v3789 = vadd.f32 0.0, %v3788
    %v3790 = vpop.f32.mrb[0].mxu0
    %v3791 = vpop.f32.mrb[0].mxu0
    %v3792 = vadd.f32 0.0, %v3791
    %v3793 = vpop.f32.mrb[0].mxu0
    %3794 = vmatprep.mubr.bf16.mxu0 0
    %3795 = vmatmul.mubr.bf16.gmra.mrb[0].mxu0 %v3740
    %v3796 = vpop.f32.mrb[0].mxu0
    %v3797 = vadd.f32 0.0, %v3796
    %v3798 = vpop.f32.mrb[0].mxu0
    %v3799 = vpop.f32.mrb[0].mxu0
    %v3800 = vadd.f32 0.0, %v3799
    %v3801 = vpop.f32.mrb[0].mxu0
    %3802 = vmatprep.mubr.bf16.mxu0 0
    %3803 = vmatmul.mubr.bf16.gmra.mrb[0].mxu0 %v3743
    %v3804 = vpop.f32.mrb[0].mxu0
    %v3805 = vadd.f32 0.0, %v3804
    %v3806 = vpop.f32.mrb[0].mxu0
    %v3807 = vpop.f32.mrb[0].mxu0
    %v3808 = vadd.f32 0.0, %v3807
    %v3809 = vpop.f32.mrb[0].mxu0
    %3810 = vmatprep.mubr.bf16.mxu0 0
    %3811 = vmatmul.mubr.bf16.gmra.mrb[0].mxu0 %v3746
    %v3812 = vpop.f32.mrb[0].mxu0
    %v3813 = vadd.f32 0.0, %v3812
    %v3814 = vpop.f32.mrb[0].mxu0
    %v3815 = vpop.f32.mrb[0].mxu0
    %v3816 = vadd.f32 0.0, %v3815
    %v3817 = vpop.f32.mrb[0].mxu0
    %3818 = vmatprep.mubr.bf16.mxu0 0
    %3819 = vmatmul.mubr.bf16.gmra.mrb[0].mxu0 %v3749
    %v3820 = vpop.f32.mrb[0].mxu0
    %v3821 = vadd.f32 0.0, %v3820
    %v3822 = vpop.f32.mrb[0].mxu0
    %v3823 = vpop.f32.mrb[0].mxu0
    %v3824 = vpop.f32.mrb[0].mxu0
    %3825 = vdwg.mxu0
    %v3826 = vadd.f32 %v3584, %v3789
    %v3827 = vadd.f32 %v3585, %v3792
    %v3828 = vadd.f32 %v3586, %v3797
    %v3829 = vadd.f32 %v3587, %v3800
    %v3830 = vadd.f32 %v3588, %v3805
    %v3831 = vadd.f32 %v3589, %v3808
    %v3832 = vadd.f32 %v3590, %v3813
    %v3833 = vadd.f32 %v3591, %v3816
    %v3834 = vadd.f32 %v3592, %v3821
    %s3835 = scalar_lea.vmem %s6, 256
    %v3836 = vld [vmem:[%s3835] sm:$0xf]
    %v3837 = vld [vmem:[%s3835 + $0x4] sm:$0xf]
    %v3838 = vld [vmem:[%s3835 + $0x8] sm:$0xf]
    %v3839 = vld [vmem:[%s3835 + $0xc] sm:$0xf]
    %v3840 = vld [vmem:[%s3835 + $0x10] sm:$0xf]
    %v3841 = vld [vmem:[%s3835 + $0x14] sm:$0xf]
    %v3842 = vld [vmem:[%s3835 + $0x18] sm:$0xf]
    %v3843 = vld [vmem:[%s3835 + $0x1c] sm:$0xf]
    %v3852 = vunpack.c.l.b16 %v3836
    %v3853 = vunpack.c.l.b16 %v3837
    %v3854 = vunpack.c.l.b16 %v3838
    %v3855 = vunpack.c.l.b16 %v3839
    %v3856 = vunpack.c.l.b16 %v3840
    %v3857 = vunpack.c.l.b16 %v3841
    %v3858 = vunpack.c.l.b16 %v3842
    %v3859 = vunpack.c.l.b16 %v3843
    %v3860 = vpack.c.b16 %v3853, %v3852
    %v3861 = vpack.c.b16 %v3855, %v3854
    %v3862 = vpack.c.b16 %v3857, %v3856
    %v3863 = vpack.c.b16 %v3859, %v3858
    %3868 = vmatprep.subr.bf16.mxu0 0
    %3869 = vmatpush1.bf16.msra.mxu0 %v3860
    %3870 = vmatprep.subr.bf16.mxu0 0
    %3871 = vmatpush1.bf16.msra.mxu0 %v3861
    %3872 = vmatprep.subr.bf16.mxu0 0
    %3873 = vmatpush1.bf16.msra.mxu0 %v3862
    %3874 = vmatprep.subr.bf16.mxu0 0
    %3875 = vmatpush1.bf16.msra.mxu0 %v3863
    %3876 = vmatprep.subr.bf16.mxu0 0
    %3877 = vmatpush1.bf16.msra.mxu0 0
    %3878 = vmatprep.subr.bf16.mxu0 0
    %3879 = vmatpush1.bf16.msra.mxu0 0
    %3880 = vmatprep.subr.bf16.mxu0 0
    %3881 = vmatpush1.bf16.msra.mxu0 0
    %3882 = vmatprep.subr.bf16.mxu0 0
    %3883 = vmatpush1.bf16.msra.mxu0 0
    %3884 = vmatprep.subr.bf16.mxu0 0
    %3885 = vmatpush1.bf16.msra.mxu0 0
    %3886 = vmatprep.subr.bf16.mxu0 0
    %3887 = vmatpush1.bf16.msra.mxu0 0
    %3888 = vmatprep.subr.bf16.mxu0 0
    %3889 = vmatpush1.bf16.msra.mxu0 0
    %3890 = vmatprep.subr.bf16.mxu0 0
    %3891 = vmatpush1.bf16.msra.mxu0 0
    %3892 = vmatprep.subr.bf16.mxu0 0
    %3893 = vmatpush1.bf16.msra.mxu0 0
    %3894 = vmatprep.subr.bf16.mxu0 0
    %3895 = vmatpush1.bf16.msra.mxu0 0
    %3896 = vmatprep.subr.bf16.mxu0 0
    %3897 = vmatpush1.bf16.msra.mxu0 0
    %3898 = vmatprep.subr.bf16.mxu0 0
    %3899 = vmatpush1.bf16.msra.mxu0 0
    %3900 = vmatprep.mubr.bf16.mxu0 0
    %3901 = vmatmul.mubr.bf16.gmra.mrb[0].mxu0 %v1941
    %v3902 = vpop.f32.mrb[0].mxu0
    %v3903 = vadd.f32 0.0, %v3902
    %v3904 = vpop.f32.mrb[0].mxu0
    %v3905 = vpop.f32.mrb[0].mxu0
    %v3906 = vadd.f32 0.0, %v3905
    %v3907 = vpop.f32.mrb[0].mxu0
    %3908 = vmatprep.mubr.bf16.mxu0 0
    %3909 = vmatmul.mubr.bf16.gmra.mrb[0].mxu0 %v1943
    %v3910 = vpop.f32.mrb[0].mxu0
    %v3911 = vadd.f32 0.0, %v3910
    %v3912 = vpop.f32.mrb[0].mxu0
    %v3913 = vpop.f32.mrb[0].mxu0
    %v3914 = vadd.f32 0.0, %v3913
    %v3915 = vpop.f32.mrb[0].mxu0
    %3916 = vmatprep.mubr.bf16.mxu0 0
    %3917 = vmatmul.mubr.bf16.gmra.mrb[0].mxu0 %v1945
    %v3918 = vpop.f32.mrb[0].mxu0
    %v3919 = vadd.f32 0.0, %v3918
    %v3920 = vpop.f32.mrb[0].mxu0
    %v3921 = vpop.f32.mrb[0].mxu0
    %v3922 = vadd.f32 0.0, %v3921
    %v3923 = vpop.f32.mrb[0].mxu0
    %3924 = vmatprep.mubr.bf16.mxu0 0
    %3925 = vmatmul.mubr.bf16.gmra.mrb[0].mxu0 %v1947
    %v3926 = vpop.f32.mrb[0].mxu0
    %v3927 = vadd.f32 0.0, %v3926
    %v3928 = vpop.f32.mrb[0].mxu0
    %v3929 = vpop.f32.mrb[0].mxu0
    %v3930 = vadd.f32 0.0, %v3929
    %v3931 = vpop.f32.mrb[0].mxu0
    %3932 = vmatprep.mubr.bf16.mxu0 0
    %3933 = vmatmul.mubr.bf16.gmra.mrb[0].mxu0 %v1949
    %v3934 = vpop.f32.mrb[0].mxu0
    %v3935 = vadd.f32 0.0, %v3934
    %v3936 = vpop.f32.mrb[0].mxu0
    %v3937 = vpop.f32.mrb[0].mxu0
    %v3938 = vpop.f32.mrb[0].mxu0
    %3939 = vdwg.mxu0
    %s3940 = scalar_lea.vmem [#allocation9], 288
    %v3941 = vld [vmem:[%s3940] sm:$0xf]
    %v3942 = vld [vmem:[%s3940 + $0x4] sm:$0xf]
    %v3943 = vld [vmem:[%s3940 + $0x8] sm:$0xf]
    %v3944 = vld [vmem:[%s3940 + $0xc] sm:$0xf]
    %v3945 = vld [vmem:[%s3940 + $0x10] sm:$0xf]
    %v3946 = vld [vmem:[%s3940 + $0x14] sm:$0xf]
    %v3947 = vld [vmem:[%s3940 + $0x18] sm:$0xf]
    %v3948 = vld [vmem:[%s3940 + $0x1c] sm:$0xf]
    %v3949 = vld [vmem:[%s3940 + $0x20] sm:$0xf]
    %v3950 = vpack.c.bf16 %v3906, %v3903
    %v3951 = vpack.c.bf16 %v3914, %v3911
    %v3952 = vpack.c.bf16 %v3922, %v3919
    %v3953 = vpack.c.bf16 %v3930, %v3927
    %v3954 = vpack.c.bf16 %v3935, %v3935
    %v3964 = vunpack.c.l.b16 %v3941
    %v3965 = vunpack.c.l.b16 %v3942
    %v3966 = vunpack.c.l.b16 %v3943
    %v3967 = vunpack.c.l.b16 %v3944
    %v3968 = vunpack.c.l.b16 %v3945
    %v3969 = vunpack.c.l.b16 %v3946
    %v3970 = vunpack.c.l.b16 %v3947
    %v3971 = vunpack.c.l.b16 %v3948
    %v3972 = vunpack.c.l.b16 %v3949
    %v3973 = vpack.c.b16 %v3965, %v3964
    %v3974 = vpack.c.b16 %v3967, %v3966
    %v3975 = vpack.c.b16 %v3969, %v3968
    %v3976 = vpack.c.b16 %v3971, %v3970
    %v3977 = vpack.c.b16 %v3972, %v3972
    %v3979 = vsel %vm471, %v3973, 0
    %v3982 = vsel %vm471, %v3974, 0
    %v3985 = vsel %vm471, %v3975, 0
    %v3988 = vsel %vm471, %v3976, 0
    %v3991 = vsel %vm471, %v3977, 0
    %v3994 = vsel %vm487, %v3954, 0
    %3996 = vmatprep.subr.bf16.mxu0 0
    %3997 = vmatpush1.bf16.msra.mxu0 %v3950
    %3998 = vmatprep.subr.bf16.mxu0 0
    %3999 = vmatpush1.bf16.msra.mxu0 %v3951
    %4000 = vmatprep.subr.bf16.mxu0 0
    %4001 = vmatpush1.bf16.msra.mxu0 %v3952
    %4002 = vmatprep.subr.bf16.mxu0 0
    %4003 = vmatpush1.bf16.msra.mxu0 %v3953
    %4004 = vmatprep.subr.bf16.mxu0 0
    %4005 = vmatpush1.bf16.msra.mxu0 %v3994
    %4006 = vmatprep.subr.bf16.mxu0 0
    %4007 = vmatpush1.bf16.msra.mxu0 0
    %4008 = vmatprep.subr.bf16.mxu0 0
    %4009 = vmatpush1.bf16.msra.mxu0 0
    %4010 = vmatprep.subr.bf16.mxu0 0
    %4011 = vmatpush1.bf16.msra.mxu0 0
    %4012 = vmatprep.subr.bf16.mxu0 0
    %4013 = vmatpush1.bf16.msra.mxu0 0
    %4014 = vmatprep.subr.bf16.mxu0 0
    %4015 = vmatpush1.bf16.msra.mxu0 0
    %4016 = vmatprep.subr.bf16.mxu0 0
    %4017 = vmatpush1.bf16.msra.mxu0 0
    %4018 = vmatprep.subr.bf16.mxu0 0
    %4019 = vmatpush1.bf16.msra.mxu0 0
    %4020 = vmatprep.subr.bf16.mxu0 0
    %4021 = vmatpush1.bf16.msra.mxu0 0
    %4022 = vmatprep.subr.bf16.mxu0 0
    %4023 = vmatpush1.bf16.msra.mxu0 0
    %4024 = vmatprep.subr.bf16.mxu0 0
    %4025 = vmatpush1.bf16.msra.mxu0 0
    %4026 = vmatprep.subr.bf16.mxu0 0
    %4027 = vmatpush1.bf16.msra.mxu0 0
    %4028 = vmatprep.mubr.bf16.mxu0 0
    %4029 = vmatmul.mubr.bf16.gmra.mrb[0].mxu0 %v3979
    %v4030 = vpop.f32.mrb[0].mxu0
    %v4031 = vadd.f32 0.0, %v4030
    %v4032 = vpop.f32.mrb[0].mxu0
    %v4033 = vpop.f32.mrb[0].mxu0
    %v4034 = vadd.f32 0.0, %v4033
    %v4035 = vpop.f32.mrb[0].mxu0
    %4036 = vmatprep.mubr.bf16.mxu0 0
    %4037 = vmatmul.mubr.bf16.gmra.mrb[0].mxu0 %v3982
    %v4038 = vpop.f32.mrb[0].mxu0
    %v4039 = vadd.f32 0.0, %v4038
    %v4040 = vpop.f32.mrb[0].mxu0
    %v4041 = vpop.f32.mrb[0].mxu0
    %v4042 = vadd.f32 0.0, %v4041
    %v4043 = vpop.f32.mrb[0].mxu0
    %4044 = vmatprep.mubr.bf16.mxu0 0
    %4045 = vmatmul.mubr.bf16.gmra.mrb[0].mxu0 %v3985
    %v4046 = vpop.f32.mrb[0].mxu0
    %v4047 = vadd.f32 0.0, %v4046
    %v4048 = vpop.f32.mrb[0].mxu0
    %v4049 = vpop.f32.mrb[0].mxu0
    %v4050 = vadd.f32 0.0, %v4049
    %v4051 = vpop.f32.mrb[0].mxu0
    %4052 = vmatprep.mubr.bf16.mxu0 0
    %4053 = vmatmul.mubr.bf16.gmra.mrb[0].mxu0 %v3988
    %v4054 = vpop.f32.mrb[0].mxu0
    %v4055 = vadd.f32 0.0, %v4054
    %v4056 = vpop.f32.mrb[0].mxu0
    %v4057 = vpop.f32.mrb[0].mxu0
    %v4058 = vadd.f32 0.0, %v4057
    %v4059 = vpop.f32.mrb[0].mxu0
    %4060 = vmatprep.mubr.bf16.mxu0 0
    %4061 = vmatmul.mubr.bf16.gmra.mrb[0].mxu0 %v3991
    %v4062 = vpop.f32.mrb[0].mxu0
    %v4063 = vadd.f32 0.0, %v4062
    %v4064 = vpop.f32.mrb[0].mxu0
    %v4065 = vpop.f32.mrb[0].mxu0
    %v4066 = vpop.f32.mrb[0].mxu0
    %4067 = vdwg.mxu0
    %v4068 = vadd.f32 %v3826, %v4031
    %v4069 = vadd.f32 %v3827, %v4034
    %v4070 = vadd.f32 %v3828, %v4039
    %v4071 = vadd.f32 %v3829, %v4042
    %v4072 = vadd.f32 %v3830, %v4047
    %v4073 = vadd.f32 %v3831, %v4050
    %v4074 = vadd.f32 %v3832, %v4055
    %v4075 = vadd.f32 %v3833, %v4058
    %v4076 = vadd.f32 %v3834, %v4063
    %vm4077 = vcmask 64512
    %v4078 = vsel %vm4077, %v4068, 0.0
    %v4079 = vsel %vm4077, %v4069, 0.0
    %v4080 = vadd.f32 %v4078, %v4079
    %v4081 = vsel %vm4077, %v4070, 0.0
    %v4082 = vadd.f32 %v4080, %v4081
    %v4083 = vsel %vm4077, %v4071, 0.0
    %v4084 = vadd.f32 %v4082, %v4083
    %v4085 = vsel %vm4077, %v4072, 0.0
    %v4086 = vadd.f32 %v4084, %v4085
    %v4087 = vsel %vm4077, %v4073, 0.0
    %v4088 = vadd.f32 %v4086, %v4087
    %v4089 = vsel %vm4077, %v4074, 0.0
    %v4090 = vadd.f32 %v4088, %v4089
    %v4091 = vsel %vm4077, %v4075, 0.0
    %v4092 = vadd.f32 %v4090, %v4091
    %v4093 = vsel %vm4077, %v4076, 0.0
    %v4094 = vadd.f32 %v4092, %v4093
    %v4095 = vrot.slane %v4094, 4
    %v4096 = vadd.f32 %v4094, %v4095
    %v4097 = vrot.slane %v4096, 2
    %v4098 = vadd.f32 %v4096, %v4097
    %v4099 = vrot.slane %v4098, 1
    %v4100 = vadd.f32 %v4098, %v4099
    %v4101 = vmul.f32 %v4100, %v1662
    %v4102 = vmul.f32 %v4068, %v4068
    %v4103 = vmul.f32 %v4069, %v4069
    %v4104 = vmul.f32 %v4070, %v4070
    %v4105 = vmul.f32 %v4071, %v4071
    %v4106 = vmul.f32 %v4072, %v4072
    %v4107 = vmul.f32 %v4073, %v4073
    %v4108 = vmul.f32 %v4074, %v4074
    %v4109 = vmul.f32 %v4075, %v4075
    %v4110 = vmul.f32 %v4076, %v4076
    %v4111 = vsel %vm4077, %v4102, 0.0
    %v4112 = vsel %vm4077, %v4103, 0.0
    %v4113 = vadd.f32 %v4111, %v4112
    %v4114 = vsel %vm4077, %v4104, 0.0
    %v4115 = vadd.f32 %v4113, %v4114
    %v4116 = vsel %vm4077, %v4105, 0.0
    %v4117 = vadd.f32 %v4115, %v4116
    %v4118 = vsel %vm4077, %v4106, 0.0
    %v4119 = vadd.f32 %v4117, %v4118
    %v4120 = vsel %vm4077, %v4107, 0.0
    %v4121 = vadd.f32 %v4119, %v4120
    %v4122 = vsel %vm4077, %v4108, 0.0
    %v4123 = vadd.f32 %v4121, %v4122
    %v4124 = vsel %vm4077, %v4109, 0.0
    %v4125 = vadd.f32 %v4123, %v4124
    %v4126 = vsel %vm4077, %v4110, 0.0
    %v4127 = vadd.f32 %v4125, %v4126
    %v4128 = vrot.slane %v4127, 4
    %v4129 = vadd.f32 %v4127, %v4128
    %v4130 = vrot.slane %v4129, 2
    %v4131 = vadd.f32 %v4129, %v4130
    %v4132 = vrot.slane %v4131, 1
    %v4133 = vadd.f32 %v4131, %v4132
    %v4134 = vmul.f32 %v4133, %v1662
    %v4135 = vmul.f32 %v4101, %v4101
    %v4136 = vsub.f32 %v4134, %v4135
    %v4137 = vsub.f32 %v4068, %v4101
    %v4138 = vsub.f32 %v4069, %v4101
    %v4139 = vsub.f32 %v4070, %v4101
    %v4140 = vsub.f32 %v4071, %v4101
    %v4141 = vsub.f32 %v4072, %v4101
    %v4142 = vsub.f32 %v4073, %v4101
    %v4143 = vsub.f32 %v4074, %v4101
    %v4144 = vsub.f32 %v4075, %v4101
    %v4145 = vsub.f32 %v4076, %v4101
    %v4146 = vmax.f32 %v4136, 0.0
    %v4147 = vadd.f32 %v4146, 1e-05
    %v4148 = vrsqrt.pop %v4147
    %v4149 = vmul.f32 %v4137, %v4148
    %v4150 = vmul.f32 %v4138, %v4148
    %v4151 = vmul.f32 %v4139, %v4148
    %v4152 = vmul.f32 %v4140, %v4148
    %v4153 = vmul.f32 %v4141, %v4148
    %v4154 = vmul.f32 %v4142, %v4148
    %v4155 = vmul.f32 %v4143, %v4148
    %v4156 = vmul.f32 %v4144, %v4148
    %v4157 = vmul.f32 %v4145, %v4148
    %v4158 = vmax.f32 %v4149, 0.0
    %v4159 = vmax.f32 %v4150, 0.0
    %v4160 = vmax.f32 %v4151, 0.0
    %v4161 = vmax.f32 %v4152, 0.0
    %v4162 = vmax.f32 %v4153, 0.0
    %v4163 = vmax.f32 %v4154, 0.0
    %v4164 = vmax.f32 %v4155, 0.0
    %v4165 = vmax.f32 %v4156, 0.0
    %v4166 = vmax.f32 %v4157, 0.0
    %4167 = vst.msk [vmem:[%s14] sm:$0xff] %vm4077, %v4158
    %4168 = vst.msk [vmem:[%s14 + $0x8] sm:$0xff] %vm4077, %v4159
    %4169 = vst.msk [vmem:[%s14 + $0x10] sm:$0xff] %vm4077, %v4160
    %4170 = vst.msk [vmem:[%s14 + $0x18] sm:$0xff] %vm4077, %v4161
    %4171 = vst.msk [vmem:[%s14 + $0x20] sm:$0xff] %vm4077, %v4162
    %4172 = vst.msk [vmem:[%s14 + $0x28] sm:$0xff] %vm4077, %v4163
    %4173 = vst.msk [vmem:[%s14 + $0x30] sm:$0xff] %vm4077, %v4164
    %4174 = vst.msk [vmem:[%s14 + $0x38] sm:$0xff] %vm4077, %v4165
    %4175 = vst.msk [vmem:[%s14 + $0x40] sm:$0xff] %vm4077, %v4166
    %v4176 = vpack.c.bf16 %v4159, %v4158
    %v4177 = vpack.c.bf16 %v4161, %v4160
    %v4178 = vpack.c.bf16 %v4163, %v4162
    %v4179 = vpack.c.bf16 %v4165, %v4164
    %v4180 = vpack.c.bf16 %v4166, %v4166
    %v4181 = vld [vmem:[#allocation10] sm:$0xf]
    %v4182 = vld [vmem:[#allocation12] sm:$0x1]
    %v4184 = vlaneseq
    %v4185 = vshrl.u32 %v4184, 7
    %v4186 = vsub.s32 0, %v4185
    %v4187 = vrot.slane %v4182, %v4186
    %v4190 = vsel %vm4077, %v4176, 0
    %v4193 = vsel %vm4077, %v4177, 0
    %v4196 = vsel %vm4077, %v4178, 0
    %v4199 = vsel %vm4077, %v4179, 0
    %v4202 = vsel %vm4077, %v4180, 0
    %v4205 = vsel %vm487, %v4181, 0
    %4207 = vmatprep.subr.bf16.mxu0 0
    %4208 = vmatpush1.bf16.msra.mxu0 %v4205
    %4209 = vmatprep.subr.bf16.mxu0 0
    %4210 = vmatpush1.bf16.msra.mxu0 0
    %4211 = vmatprep.subr.bf16.mxu0 0
    %4212 = vmatpush1.bf16.msra.mxu0 0
    %4213 = vmatprep.subr.bf16.mxu0 0
    %4214 = vmatpush1.bf16.msra.mxu0 0
    %4215 = vmatprep.subr.bf16.mxu0 0
    %4216 = vmatpush1.bf16.msra.mxu0 0
    %4217 = vmatprep.subr.bf16.mxu0 0
    %4218 = vmatpush1.bf16.msra.mxu0 0
    %4219 = vmatprep.subr.bf16.mxu0 0
    %4220 = vmatpush1.bf16.msra.mxu0 0
    %4221 = vmatprep.subr.bf16.mxu0 0
    %4222 = vmatpush1.bf16.msra.mxu0 0
    %4223 = vmatprep.subr.bf16.mxu0 0
    %4224 = vmatpush1.bf16.msra.mxu0 0
    %4225 = vmatprep.subr.bf16.mxu0 0
    %4226 = vmatpush1.bf16.msra.mxu0 0
    %4227 = vmatprep.subr.bf16.mxu0 0
    %4228 = vmatpush1.bf16.msra.mxu0 0
    %4229 = vmatprep.subr.bf16.mxu0 0
    %4230 = vmatpush1.bf16.msra.mxu0 0
    %4231 = vmatprep.subr.bf16.mxu0 0
    %4232 = vmatpush1.bf16.msra.mxu0 0
    %4233 = vmatprep.subr.bf16.mxu0 0
    %4234 = vmatpush1.bf16.msra.mxu0 0
    %4235 = vmatprep.subr.bf16.mxu0 0
    %4236 = vmatpush1.bf16.msra.mxu0 0
    %4237 = vmatprep.subr.bf16.mxu0 0
    %4238 = vmatpush1.bf16.msra.mxu0 0
    %4239 = vmatprep.mubr.bf16.mxu0 0
    %4240 = vmatmul.mubr.bf16.gmra.mrb[0].mxu0 %v4190
    %v4241 = vpop.f32.mrb[0].mxu0
    %v4242 = vadd.f32 %v4187, %v4241
    %v4243 = vpop.f32.mrb[0].mxu0
    %v4244 = vpop.f32.mrb[0].mxu0
    %v4245 = vadd.f32 %v4187, %v4244
    %v4246 = vpop.f32.mrb[0].mxu0
    %4247 = vmatprep.mubr.bf16.mxu0 0
    %4248 = vmatmul.mubr.bf16.gmra.mrb[0].mxu0 %v4193
    %v4249 = vpop.f32.mrb[0].mxu0
    %v4250 = vadd.f32 %v4187, %v4249
    %v4251 = vpop.f32.mrb[0].mxu0
    %v4252 = vpop.f32.mrb[0].mxu0
    %v4253 = vadd.f32 %v4187, %v4252
    %v4254 = vpop.f32.mrb[0].mxu0
    %4255 = vmatprep.mubr.bf16.mxu0 0
    %4256 = vmatmul.mubr.bf16.gmra.mrb[0].mxu0 %v4196
    %v4257 = vpop.f32.mrb[0].mxu0
    %v4258 = vadd.f32 %v4187, %v4257
    %v4259 = vpop.f32.mrb[0].mxu0
    %v4260 = vpop.f32.mrb[0].mxu0
    %v4261 = vadd.f32 %v4187, %v4260
    %v4262 = vpop.f32.mrb[0].mxu0
    %4263 = vmatprep.mubr.bf16.mxu0 0
    %4264 = vmatmul.mubr.bf16.gmra.mrb[0].mxu0 %v4199
    %v4265 = vpop.f32.mrb[0].mxu0
    %v4266 = vadd.f32 %v4187, %v4265
    %v4267 = vpop.f32.mrb[0].mxu0
    %v4268 = vpop.f32.mrb[0].mxu0
    %v4269 = vadd.f32 %v4187, %v4268
    %v4270 = vpop.f32.mrb[0].mxu0
    %4271 = vmatprep.mubr.bf16.mxu0 0
    %4272 = vmatmul.mubr.bf16.gmra.mrb[0].mxu0 %v4202
    %v4273 = vpop.f32.mrb[0].mxu0
    %v4274 = vadd.f32 %v4187, %v4273
    %v4275 = vpop.f32.mrb[0].mxu0
    %v4276 = vpop.f32.mrb[0].mxu0
    %v4277 = vpop.f32.mrb[0].mxu0
    %4278 = vdwg.mxu0
    %v4279 = vmax.f32 %v4242, 0.0
    %v4280 = vmax.f32 %v4245, 0.0
    %v4281 = vmax.f32 %v4250, 0.0
    %v4282 = vmax.f32 %v4253, 0.0
    %v4283 = vmax.f32 %v4258, 0.0
    %v4284 = vmax.f32 %v4261, 0.0
    %v4285 = vmax.f32 %v4266, 0.0
    %v4286 = vmax.f32 %v4269, 0.0
    %v4287 = vmax.f32 %v4274, 0.0
    %v4288 = vpack.c.bf16 %v4280, %v4279
    %v4289 = vpack.c.bf16 %v4282, %v4281
    %v4290 = vpack.c.bf16 %v4284, %v4283
    %v4291 = vpack.c.bf16 %v4286, %v4285
    %v4292 = vpack.c.bf16 %v4287, %v4287
    %v4293 = vld [vmem:[#allocation13] sm:$0xf]
    %v4294 = vld [vmem:[#allocation13 + $0x4] sm:$0xf]
    %v4295 = vld [vmem:[#allocation15] sm:$0x1]
    %v4297 = vlaneseq
    %v4298 = vshrl.u32 %v4297, 7
    %v4299 = vsub.s32 0, %v4298
    %v4300 = vrot.slane %v4295, %v4299
    %v4304 = vunpack.c.l.b16 %v4293
    %v4305 = vunpack.c.l.b16 %v4294
    %v4306 = vpack.c.b16 %v4305, %v4304
    %vm4308 = vcmask 130048
    %v4310 = vsel %vm4308, %v4288, 0
    %v4313 = vsel %vm4308, %v4289, 0
    %v4316 = vsel %vm4308, %v4290, 0
    %v4319 = vsel %vm4308, %v4291, 0
    %v4322 = vsel %vm4308, %v4292, 0
    %4324 = vmatprep.subr.bf16.mxu0 0
    %4325 = vmatpush1.bf16.msra.mxu0 %v4306
    %4326 = vmatprep.subr.bf16.mxu0 0
    %4327 = vmatpush1.bf16.msra.mxu0 0
    %4328 = vmatprep.subr.bf16.mxu0 0
    %4329 = vmatpush1.bf16.msra.mxu0 0
    %4330 = vmatprep.subr.bf16.mxu0 0
    %4331 = vmatpush1.bf16.msra.mxu0 0
    %4332 = vmatprep.subr.bf16.mxu0 0
    %4333 = vmatpush1.bf16.msra.mxu0 0
    %4334 = vmatprep.subr.bf16.mxu0 0
    %4335 = vmatpush1.bf16.msra.mxu0 0
    %4336 = vmatprep.subr.bf16.mxu0 0
    %4337 = vmatpush1.bf16.msra.mxu0 0
    %4338 = vmatprep.subr.bf16.mxu0 0
    %4339 = vmatpush1.bf16.msra.mxu0 0
    %4340 = vmatprep.subr.bf16.mxu0 0
    %4341 = vmatpush1.bf16.msra.mxu0 0
    %4342 = vmatprep.subr.bf16.mxu0 0
    %4343 = vmatpush1.bf16.msra.mxu0 0
    %4344 = vmatprep.subr.bf16.mxu0 0
    %4345 = vmatpush1.bf16.msra.mxu0 0
    %4346 = vmatprep.subr.bf16.mxu0 0
    %4347 = vmatpush1.bf16.msra.mxu0 0
    %4348 = vmatprep.subr.bf16.mxu0 0
    %4349 = vmatpush1.bf16.msra.mxu0 0
    %4350 = vmatprep.subr.bf16.mxu0 0
    %4351 = vmatpush1.bf16.msra.mxu0 0
    %4352 = vmatprep.subr.bf16.mxu0 0
    %4353 = vmatpush1.bf16.msra.mxu0 0
    %4354 = vmatprep.subr.bf16.mxu0 0
    %4355 = vmatpush1.bf16.msra.mxu0 0
    %4356 = vmatprep.mubr.bf16.mxu0 0
    %4357 = vmatmul.mubr.bf16.gmra.mrb[0].mxu0 %v4310
    %v4358 = vpop.f32.mrb[0].mxu0
    %v4359 = vadd.f32 %v4300, %v4358
    %v4360 = vpop.f32.mrb[0].mxu0
    %v4361 = vpop.f32.mrb[0].mxu0
    %v4362 = vadd.f32 %v4300, %v4361
    %v4363 = vpop.f32.mrb[0].mxu0
    %4364 = vmatprep.mubr.bf16.mxu0 0
    %4365 = vmatmul.mubr.bf16.gmra.mrb[0].mxu0 %v4313
    %v4366 = vpop.f32.mrb[0].mxu0
    %v4367 = vadd.f32 %v4300, %v4366
    %v4368 = vpop.f32.mrb[0].mxu0
    %v4369 = vpop.f32.mrb[0].mxu0
    %v4370 = vadd.f32 %v4300, %v4369
    %v4371 = vpop.f32.mrb[0].mxu0
    %4372 = vmatprep.mubr.bf16.mxu0 0
    %4373 = vmatmul.mubr.bf16.gmra.mrb[0].mxu0 %v4316
    %v4374 = vpop.f32.mrb[0].mxu0
    %v4375 = vadd.f32 %v4300, %v4374
    %v4376 = vpop.f32.mrb[0].mxu0
    %v4377 = vpop.f32.mrb[0].mxu0
    %v4378 = vadd.f32 %v4300, %v4377
    %v4379 = vpop.f32.mrb[0].mxu0
    %4380 = vmatprep.mubr.bf16.mxu0 0
    %4381 = vmatmul.mubr.bf16.gmra.mrb[0].mxu0 %v4319
    %v4382 = vpop.f32.mrb[0].mxu0
    %v4383 = vadd.f32 %v4300, %v4382
    %v4384 = vpop.f32.mrb[0].mxu0
    %v4385 = vpop.f32.mrb[0].mxu0
    %v4386 = vadd.f32 %v4300, %v4385
    %v4387 = vpop.f32.mrb[0].mxu0
    %4388 = vmatprep.mubr.bf16.mxu0 0
    %4389 = vmatmul.mubr.bf16.gmra.mrb[0].mxu0 %v4322
    %v4390 = vpop.f32.mrb[0].mxu0
    %v4391 = vadd.f32 %v4300, %v4390
    %v4392 = vpop.f32.mrb[0].mxu0
    %v4393 = vpop.f32.mrb[0].mxu0
    %v4394 = vpop.f32.mrb[0].mxu0
    %4395 = vdwg.mxu0
    %v4396 = vmax.f32 %v4359, 0.0
    %v4397 = vmax.f32 %v4362, 0.0
    %v4398 = vmax.f32 %v4367, 0.0
    %v4399 = vmax.f32 %v4370, 0.0
    %v4400 = vmax.f32 %v4375, 0.0
    %v4401 = vmax.f32 %v4378, 0.0
    %v4402 = vmax.f32 %v4383, 0.0
    %v4403 = vmax.f32 %v4386, 0.0
    %v4404 = vmax.f32 %v4391, 0.0
    %v4405 = vpack.c.bf16 %v4397, %v4396
    %v4406 = vpack.c.bf16 %v4399, %v4398
    %v4407 = vpack.c.bf16 %v4401, %v4400
    %v4408 = vpack.c.bf16 %v4403, %v4402
    %v4409 = vpack.c.bf16 %v4404, %v4404
    %v4410 = vld [vmem:[#allocation16] sm:$0xff]
    %v4411 = vld [vmem:[#allocation16 + $0x8] sm:$0xff]
    %v4412 = vld [vmem:[#allocation16 + $0x10] sm:$0xff]
    %v4413 = vld [vmem:[#allocation16 + $0x18] sm:$0xff]
    %v4414 = vld [vmem:[#allocation16 + $0x20] sm:$0xff]
    %v4415 = vld [vmem:[#allocation16 + $0x28] sm:$0xff]
    %v4416 = vld [vmem:[#allocation16 + $0x30] sm:$0xff]
    %v4417 = vld [vmem:[#allocation16 + $0x38] sm:$0xff]
    %v4418 = vld [vmem:[#allocation18] sm:$0x3]
    %v4420 = vlaneseq
    %v4421 = vshrl.u32 %v4420, 7
    %v4422 = vsub.s32 0, %v4421
    %v4423 = vrot.slane %v4418, %v4422
    %v4424 = vlaneseq
    %v4425 = vshrl.u32 %v4424, 7
    %v4426 = vsub.s32 1, %v4425
    %v4427 = vrot.slane %v4418, %v4426
    %v4438 = vunpack.c.l.b16 %v4410
    %v4439 = vunpack.c.h.b16 %v4410
    %v4440 = vunpack.c.l.b16 %v4411
    %v4441 = vunpack.c.h.b16 %v4411
    %v4442 = vunpack.c.l.b16 %v4412
    %v4443 = vunpack.c.h.b16 %v4412
    %v4444 = vunpack.c.l.b16 %v4413
    %v4445 = vunpack.c.h.b16 %v4413
    %v4446 = vunpack.c.l.b16 %v4414
    %v4447 = vunpack.c.h.b16 %v4414
    %v4448 = vunpack.c.l.b16 %v4415
    %v4449 = vunpack.c.h.b16 %v4415
    %v4450 = vunpack.c.l.b16 %v4416
    %v4451 = vunpack.c.h.b16 %v4416
    %v4452 = vunpack.c.l.b16 %v4417
    %v4453 = vunpack.c.h.b16 %v4417
    %v4454 = vpack.c.b16 %v4440, %v4438
    %v4455 = vpack.c.b16 %v4441, %v4439
    %v4456 = vpack.c.b16 %v4444, %v4442
    %v4457 = vpack.c.b16 %v4445, %v4443
    %v4458 = vpack.c.b16 %v4448, %v4446
    %v4459 = vpack.c.b16 %v4449, %v4447
    %v4460 = vpack.c.b16 %v4452, %v4450
    %v4461 = vpack.c.b16 %v4453, %v4451
    %v4471 = vsel %vm1940, %v4405, 0
    %v4474 = vsel %vm1940, %v4406, 0
    %v4477 = vsel %vm1940, %v4407, 0
    %v4480 = vsel %vm1940, %v4408, 0
    %v4483 = vsel %vm1940, %v4409, 0
    %4485 = vmatprep.subr.bf16.mxu0 %v4455
    %4486 = vmatpush1.bf16.msra.mxu0 %v4454
    %4487 = vmatprep.subr.bf16.mxu0 %v4457
    %4488 = vmatpush1.bf16.msra.mxu0 %v4456
    %4489 = vmatprep.subr.bf16.mxu0 %v4459
    %4490 = vmatpush1.bf16.msra.mxu0 %v4458
    %4491 = vmatprep.subr.bf16.mxu0 %v4461
    %4492 = vmatpush1.bf16.msra.mxu0 %v4460
    %4493 = vmatprep.subr.bf16.mxu0 0
    %4494 = vmatpush1.bf16.msra.mxu0 0
    %4495 = vmatprep.subr.bf16.mxu0 0
    %4496 = vmatpush1.bf16.msra.mxu0 0
    %4497 = vmatprep.subr.bf16.mxu0 0
    %4498 = vmatpush1.bf16.msra.mxu0 0
    %4499 = vmatprep.subr.bf16.mxu0 0
    %4500 = vmatpush1.bf16.msra.mxu0 0
    %4501 = vmatprep.subr.bf16.mxu0 0
    %4502 = vmatpush1.bf16.msra.mxu0 0
    %4503 = vmatprep.subr.bf16.mxu0 0
    %4504 = vmatpush1.bf16.msra.mxu0 0
    %4505 = vmatprep.subr.bf16.mxu0 0
    %4506 = vmatpush1.bf16.msra.mxu0 0
    %4507 = vmatprep.subr.bf16.mxu0 0
    %4508 = vmatpush1.bf16.msra.mxu0 0
    %4509 = vmatprep.subr.bf16.mxu0 0
    %4510 = vmatpush1.bf16.msra.mxu0 0
    %4511 = vmatprep.subr.bf16.mxu0 0
    %4512 = vmatpush1.bf16.msra.mxu0 0
    %4513 = vmatprep.subr.bf16.mxu0 0
    %4514 = vmatpush1.bf16.msra.mxu0 0
    %4515 = vmatprep.subr.bf16.mxu0 0
    %4516 = vmatpush1.bf16.msra.mxu0 0
    %4517 = vmatprep.mubr.bf16.mxu0 0
    %4518 = vmatmul.mubr.bf16.gmra.mrb[0].mxu0 %v4471
    %v4519 = vpop.f32.mrb[0].mxu0
    %v4520 = vadd.f32 %v4423, %v4519
    %v4521 = vpop.f32.mrb[0].mxu0
    %v4522 = vadd.f32 %v4427, %v4521
    %v4523 = vpop.f32.mrb[0].mxu0
    %v4524 = vadd.f32 %v4423, %v4523
    %v4525 = vpop.f32.mrb[0].mxu0
    %v4526 = vadd.f32 %v4427, %v4525
    %4527 = vmatprep.mubr.bf16.mxu0 0
    %4528 = vmatmul.mubr.bf16.gmra.mrb[0].mxu0 %v4474
    %v4529 = vpop.f32.mrb[0].mxu0
    %v4530 = vadd.f32 %v4423, %v4529
    %v4531 = vpop.f32.mrb[0].mxu0
    %v4532 = vadd.f32 %v4427, %v4531
    %v4533 = vpop.f32.mrb[0].mxu0
    %v4534 = vadd.f32 %v4423, %v4533
    %v4535 = vpop.f32.mrb[0].mxu0
    %v4536 = vadd.f32 %v4427, %v4535
    %4537 = vmatprep.mubr.bf16.mxu0 0
    %4538 = vmatmul.mubr.bf16.gmra.mrb[0].mxu0 %v4477
    %v4539 = vpop.f32.mrb[0].mxu0
    %v4540 = vadd.f32 %v4423, %v4539
    %v4541 = vpop.f32.mrb[0].mxu0
    %v4542 = vadd.f32 %v4427, %v4541
    %v4543 = vpop.f32.mrb[0].mxu0
    %v4544 = vadd.f32 %v4423, %v4543
    %v4545 = vpop.f32.mrb[0].mxu0
    %v4546 = vadd.f32 %v4427, %v4545
    %4547 = vmatprep.mubr.bf16.mxu0 0
    %4548 = vmatmul.mubr.bf16.gmra.mrb[0].mxu0 %v4480
    %v4549 = vpop.f32.mrb[0].mxu0
    %v4550 = vadd.f32 %v4423, %v4549
    %v4551 = vpop.f32.mrb[0].mxu0
    %v4552 = vadd.f32 %v4427, %v4551
    %v4553 = vpop.f32.mrb[0].mxu0
    %v4554 = vadd.f32 %v4423, %v4553
    %v4555 = vpop.f32.mrb[0].mxu0
    %v4556 = vadd.f32 %v4427, %v4555
    %4557 = vmatprep.mubr.bf16.mxu0 0
    %4558 = vmatmul.mubr.bf16.gmra.mrb[0].mxu0 %v4483
    %v4559 = vpop.f32.mrb[0].mxu0
    %v4560 = vadd.f32 %v4423, %v4559
    %v4561 = vpop.f32.mrb[0].mxu0
    %v4562 = vadd.f32 %v4427, %v4561
    %v4563 = vpop.f32.mrb[0].mxu0
    %v4564 = vpop.f32.mrb[0].mxu0
    %4565 = vdwg.mxu0
    %v4566 = vmax.f32 %v4520, 0.0
    %v4567 = vmax.f32 %v4522, 0.0
    %v4568 = vmax.f32 %v4524, 0.0
    %v4569 = vmax.f32 %v4526, 0.0
    %v4570 = vmax.f32 %v4530, 0.0
    %v4571 = vmax.f32 %v4532, 0.0
    %v4572 = vmax.f32 %v4534, 0.0
    %v4573 = vmax.f32 %v4536, 0.0
    %v4574 = vmax.f32 %v4540, 0.0
    %v4575 = vmax.f32 %v4542, 0.0
    %v4576 = vmax.f32 %v4544, 0.0
    %v4577 = vmax.f32 %v4546, 0.0
    %v4578 = vmax.f32 %v4550, 0.0
    %v4579 = vmax.f32 %v4552, 0.0
    %v4580 = vmax.f32 %v4554, 0.0
    %v4581 = vmax.f32 %v4556, 0.0
    %v4582 = vmax.f32 %v4560, 0.0
    %v4583 = vmax.f32 %v4562, 0.0
    %4584 = vst [vmem:[%s13] sm:$0xff] %v4566
    %4585 = vst [vmem:[%s13 + $0x8] sm:$0xff] %v4567
    %4586 = vst [vmem:[%s13 + $0x10] sm:$0xff] %v4568
    %4587 = vst [vmem:[%s13 + $0x18] sm:$0xff] %v4569
    %4588 = vst [vmem:[%s13 + $0x20] sm:$0xff] %v4570
    %4589 = vst [vmem:[%s13 + $0x28] sm:$0xff] %v4571
    %4590 = vst [vmem:[%s13 + $0x30] sm:$0xff] %v4572
    %4591 = vst [vmem:[%s13 + $0x38] sm:$0xff] %v4573
    %4592 = vst [vmem:[%s13 + $0x40] sm:$0xff] %v4574
    %4593 = vst [vmem:[%s13 + $0x48] sm:$0xff] %v4575
    %4594 = vst [vmem:[%s13 + $0x50] sm:$0xff] %v4576
    %4595 = vst [vmem:[%s13 + $0x58] sm:$0xff] %v4577
    %4596 = vst [vmem:[%s13 + $0x60] sm:$0xff] %v4578
    %4597 = vst [vmem:[%s13 + $0x68] sm:$0xff] %v4579
    %4598 = vst [vmem:[%s13 + $0x70] sm:$0xff] %v4580
    %4599 = vst [vmem:[%s13 + $0x78] sm:$0xff] %v4581
    %4600 = vst [vmem:[%s13 + $0x80] sm:$0xff] %v4582
    %4601 = vst [vmem:[%s13 + $0x88] sm:$0xff] %v4583
    // Predicated region
    $region98: #{pspnet_forward.1} parent=1 // pred_check
      _
    $region99: #{pspnet_forward.1} parent=1 // pred_check_branch
      %4603 = sbr.rel (0) target = $region101
    $region100: #{pspnet_forward.1} parent=1 // pred_region
      _
    $region101: #{pspnet_forward.1} parent=1 // pred_fallthru
      _
    // Predicated region
    $region102: #{pspnet_forward.1} parent=1 // pred_check
      _
    $region103: #{pspnet_forward.1} parent=1 // pred_check_branch
      %4605 = sbr.rel (0) target = $region105
    $region104: #{pspnet_forward.1} parent=1 // pred_region
      _
    $region105: #{pspnet_forward.1} parent=1 // pred_fallthru
      _
    // Predicated region
    $region106: #{pspnet_forward.1} parent=1 // pred_check
      _
    $region107: #{pspnet_forward.1} parent=1 // pred_check_branch
      %4607 = sbr.rel (0) target = $region109
    $region108: #{pspnet_forward.1} parent=1 // pred_region
      _
    $region109: #{pspnet_forward.1} parent=1 // pred_fallthru
      _
    // Predicated region
    $region110: #{pspnet_forward.1} parent=1 // pred_check
      _
    $region111: #{pspnet_forward.1} parent=1 // pred_check_branch
      %4609 = sbr.rel (0) target = $region113
    $region112: #{pspnet_forward.1} parent=1 // pred_region
      _
    $region113: #{pspnet_forward.1} parent=1 // pred_fallthru
      _
    %4610 = vsyncpa [#allocation3], 1
    %4611 = vsyncpa [#allocation5], 1
    %4612 = vsyncpa [#allocation8], 1
    %4613 = vsyncpa [#allocation11], 1
    %4614 = vsyncpa [#allocation14], 1
    %4615 = vsyncpa [#allocation17], 1

</llo_original>
